<compile_context>
chip_gen: v7x
topology: tpu7x:2x2x1
jax: 0.10.0
libtpu: 0.0.40
codegen_flags: <defaults>
</compile_context>

<pallas_src>
import jax
import jax.numpy as jnp
from jax.experimental import pallas as pl
from jax.experimental.pallas import tpu as pltpu

LANE = 128  # TPU lane width; every channel dim is padded to this.


# ---------------------------------------------------------------------------
# Fused DQN forward kernel (one grid step handles `batch_tile` images).
# ---------------------------------------------------------------------------
def _dqn_kernel(x_ref, cw1_ref, cb1_ref, cw2_ref, cb2_ref, cw3_ref, cb3_ref,
                fw1_ref, fb1_ref, fw2_ref, fb2_ref, o_ref,
                pad1_ref, pad2_ref, pad3_ref):
    f32 = jnp.float32

    def conv3x3_relu_pool2(a, pad_ref, w_ref, b_ref):
        # a: (TB, H, W, 128) NHWC activation (channels already lane-padded)
        # pad_ref: (TB, H+2, W+2, 128) VMEM halo scratch
        # w_ref: (9*128, 128) im2col-reshaped, channel-padded conv weight; b_ref: (1, 128)
        TB, H, W, C = a.shape
        Cout = w_ref.shape[-1]

        # Zero-padded halo: zero ONLY the 4 border slabs, then write the interior.
        pad_ref[:, 0:1, :, :] = jnp.zeros((TB, 1, W + 2, C), f32)
        pad_ref[:, H + 1:H + 2, :, :] = jnp.zeros((TB, 1, W + 2, C), f32)
        pad_ref[:, :, 0:1, :] = jnp.zeros((TB, H + 2, 1, C), f32)
        pad_ref[:, :, W + 1:W + 2, :] = jnp.zeros((TB, H + 2, 1, C), f32)
        pad_ref[:, 1:H + 1, 1:W + 1, :] = a
        xp = pad_ref[...]

        # im2col with 128-lane-aligned taps -> one deep-K MXU matmul (K = 9*128).
        cols = [xp[:, ki:ki + H, kj:kj + W, :]
                for ki in range(3) for kj in range(3)]
        patches = jnp.concatenate(cols, axis=-1).reshape(TB * H * W, 9 * C)
        acc = jnp.dot(patches.astype(w_ref.dtype), w_ref[...],
                      preferred_element_type=f32)
        acc = jnp.maximum(acc + b_ref[...], 0.0)          # bias + ReLU (f32)

        # 2x2 max-pool, stride 2, as pairwise VPU maxima (no axis-reductions).
        y = acc.reshape(TB, H // 2, 2, W, Cout)
        y = jnp.maximum(y[:, :, 0], y[:, :, 1])            # pool along H
        y = y.reshape(TB, H // 2, W // 2, 2, Cout)
        y = jnp.maximum(y[:, :, :, 0], y[:, :, :, 1])      # pool along W
        return y                                           # (TB, H/2, W/2, 128)

    a = conv3x3_relu_pool2(x_ref[...], pad1_ref, cw1_ref, cb1_ref)   # (TB,H/2,W/2,128)
    a = conv3x3_relu_pool2(a, pad2_ref, cw2_ref, cb2_ref)            # (TB,H/4,W/4,128)
    a = conv3x3_relu_pool2(a, pad3_ref, cw3_ref, cb3_ref)            # (TB,H/8,W/8,128)

    # fc1 + ReLU: single deep-K matmul.  fw1 rows were permuted host-side to NHWC
    # order so the flatten matches torch's NCHW .view() without a runtime transpose.
    TB, PH, PW, C = a.shape
    a_flat = a.reshape(TB, PH * PW * C)
    h1 = jnp.dot(a_flat.astype(fw1_ref.dtype), fw1_ref[...],
                 preferred_element_type=jnp.float32)
    h1 = jnp.maximum(h1 + fb1_ref[...], 0.0)

    # TODO(synk): nn.Dropout(0.5) is identity in eval mode; stochastic training-mode
    # dropout (mask + 1/keep scaling) is not implemented here.
    out = jnp.dot(h1.astype(fw2_ref.dtype), fw2_ref[...],
                  preferred_element_type=jnp.float32) + fb2_ref[...]
    o_ref[...] = out.reshape(o_ref.shape)                  # lane-dense (TB, 1, 128)


# ---------------------------------------------------------------------------
# Host wrappers
# ---------------------------------------------------------------------------
def dqn_forward(kp, x_nchw, num_actions, batch_tile=None):
    """kp: prepare_params() output, x_nchw: (B, 3, H, W) f32. Returns (B, num_actions)."""
    x = jnp.transpose(x_nchw, (0, 2, 3, 1)).astype(jnp.float32)   # NCHW -> NHWC
    B, H, W, Cin = x.shape
    assert H % 8 == 0 and W % 8 == 0, "H and W must be divisible by 8 (3x 2x2 pools)"
    assert num_actions <= LANE
    x = jnp.pad(x, ((0, 0), (0, 0), (0, 0), (0, LANE - Cin)))      # lane-pad channels

    if batch_tile is None:
        batch_tile = 8 if B % 8 == 0 else 1
    assert B % batch_tile == 0, "batch must be divisible by batch_tile"
    TB = batch_tile

    def wspec(shape):   # whole-array (broadcast) spec for weights / biases
        return pl.BlockSpec(shape, lambda b, _n=len(shape): (0,) * _n)

    out3 = pl.pallas_call(
        _dqn_kernel,
        grid=(B // TB,),
        out_shape=jax.ShapeDtypeStruct((B, 1, LANE), jnp.float32),
        in_specs=[
            pl.BlockSpec((TB, H, W, LANE), lambda b: (b, 0, 0, 0)),
            wspec(kp["cw1"].shape), wspec(kp["cb1"].shape),
            wspec(kp["cw2"].shape), wspec(kp["cb2"].shape),
            wspec(kp["cw3"].shape), wspec(kp["cb3"].shape),
            wspec(kp["fw1"].shape), wspec(kp["fb1"].shape),
            wspec(kp["fw2"].shape), wspec(kp["fb2"].shape),
        ],
        out_specs=pl.BlockSpec((TB, 1, LANE), lambda b: (b, 0, 0)),
        scratch_shapes=[
            pltpu.VMEM((TB, H + 2, W + 2, LANE), jnp.float32),          # conv1 halo
            pltpu.VMEM((TB, H // 2 + 2, W // 2 + 2, LANE), jnp.float32),  # conv2 halo
            pltpu.VMEM((TB, H // 4 + 2, W // 4 + 2, LANE), jnp.float32),  # conv3 halo
        ],
        compiler_params=pltpu.CompilerParams(
            dimension_semantics=("parallel",),
            vmem_limit_bytes=32 * 1024 * 1024,
        ),
    )(x, kp["cw1"], kp["cb1"], kp["cw2"], kp["cb2"], kp["cw3"], kp["cb3"],
      kp["fw1"], kp["fb1"], kp["fw2"], kp["fb2"])
    return out3.reshape(B, LANE)[:, :num_actions]


def prepare_params(p, obsv_width, obsv_height, compute_dtype=jnp.float32):
    """One-time conversion from PyTorch-layout params to lane-padded kernel layout.

    compute_dtype=jnp.bfloat16 gives bf16 MXU operands (v5e/v6e/v7x headroom) at the
    cost of bit-exactness vs the f32 PyTorch reference; default keeps f32.
    """
    # torch uses round(w / 8); floor agrees only when divisible by 8 — require it.
    assert obsv_width % 8 == 0 and obsv_height % 8 == 0, \
        "obsv_width/obsv_height must be divisible by 8"
    plw = obsv_width // 8
    plh = obsv_height // 8

    def conv_prep(w, b):                      # w: (Cout, Cin, 3, 3) OIHW
        cout, cin = w.shape[0], w.shape[1]
        wk = jnp.transpose(w, (2, 3, 1, 0))                       # (3, 3, Cin, Cout)
        wk = jnp.pad(wk, ((0, 0), (0, 0), (0, LANE - cin), (0, LANE - cout)))
        wk = wk.reshape(9 * LANE, LANE).astype(compute_dtype)     # lane-aligned im2col
        bk = jnp.pad(b, (0, LANE - cout)).reshape(1, LANE).astype(jnp.float32)
        return wk, bk

    cw1, cb1 = conv_prep(p["conv1_w"], p["conv1_b"])
    cw2, cb2 = conv_prep(p["conv2_w"], p["conv2_b"])
    cw3, cb3 = conv_prep(p["conv3_w"], p["conv3_b"])

    # fc1 weight: torch (512, 128*plh*plw) with NCHW column order -> permute rows to
    # NHWC order so fw1[(h*plw + w)*128 + c, out] == W1[out, c*plh*plw + h*plw + w].
    nout = p["fc1_w"].shape[0]
    fw1 = (p["fc1_w"].reshape(nout, 128, plh, plw)
           .transpose((2, 3, 1, 0))
           .reshape(plh * plw * 128, nout)).astype(compute_dtype)
    fb1 = p["fc1_b"].reshape(1, nout).astype(jnp.float32)

    # fc2: pad output columns to 128 for a lane-dense final store (slice in wrapper).
    nact = p["fc2_w"].shape[0]
    fw2 = jnp.pad(p["fc2_w"].T, ((0, 0), (0, LANE - nact))).astype(compute_dtype)
    fb2 = jnp.pad(p["fc2_b"], (0, LANE - nact)).reshape(1, LANE).astype(jnp.float32)

    return {"cw1": cw1, "cb1": cb1, "cw2": cw2, "cb2": cb2, "cw3": cw3,
            "cb3": cb3, "fw1": fw1, "fb1": fb1, "fw2": fw2, "fb2": fb2}


def init_params(key, obsv_width, obsv_height, num_actions):
    """Random params in PyTorch layout (Conv2d: OIHW, Linear: (out, in))."""
    plw = obsv_width // 8
    plh = obsv_height // 8
    fc1_in = 128 * plw * plh
    ks = jax.random.split(key, 10)

    def conv_w(k, cout, cin):
        scale = 1.0 / (3 * 3 * cin) ** 0.5
        return jax.random.normal(k, (cout, cin, 3, 3), jnp.float32) * scale

    def lin_w(k, fout, fin):
        scale = 1.0 / fin ** 0.5
        return jax.random.normal(k, (fout, fin), jnp.float32) * scale

    return {
        "conv1_w": conv_w(ks[0], 32, 3),
        "conv1_b": jax.random.normal(ks[1], (32,), jnp.float32) * 0.01,
        "conv2_w": conv_w(ks[2], 64, 32),
        "conv2_b": jax.random.normal(ks[3], (64,), jnp.float32) * 0.01,
        "conv3_w": conv_w(ks[4], 128, 64),
        "conv3_b": jax.random.normal(ks[5], (128,), jnp.float32) * 0.01,
        "fc1_w": lin_w(ks[6], 512, fc1_in),
        "fc1_b": jax.random.normal(ks[7], (512,), jnp.float32) * 0.01,
        "fc2_w": lin_w(ks[8], num_actions, 512),
        "fc2_b": jax.random.normal(ks[9], (num_actions,), jnp.float32) * 0.01,
    }


def dqn_reference(tp, x_nchw):
    """Pure-JAX (XLA) reference matching the PyTorch forward, for correctness."""
    hp = jax.lax.Precision.HIGHEST

    def conv(x, w, b):
        y = jax.lax.conv_general_dilated(
            x, w, window_strides=(1, 1), padding=((1, 1), (1, 1)),
            dimension_numbers=("NCHW", "OIHW", "NCHW"), precision=hp)
        return jax.nn.relu(y + b[None, :, None, None])

    def pool(x):
        return jax.lax.reduce_window(x, -jnp.inf, jax.lax.max,
                                     (1, 1, 2, 2), (1, 1, 2, 2), "VALID")

    a = pool(conv(x_nchw, tp["conv1_w"], tp["conv1_b"]))
    a = pool(conv(a, tp["conv2_w"], tp["conv2_b"]))
    a = pool(conv(a, tp["conv3_w"], tp["conv3_b"]))
    a = a.reshape(a.shape[0], -1)                                 # NCHW flatten
    h = jax.nn.relu(jnp.dot(a, tp["fc1_w"].T, precision=hp) + tp["fc1_b"])
    return jnp.dot(h, tp["fc2_w"].T, precision=hp) + tp["fc2_b"]


if __name__ == "__main__":
    actions = {0: '5'}
    num_actions = len(actions)              # DQN(actions=1, ...)
    B, C, H, W = 2, 3, 16, 16               # NCHW input, 3 channels as in the module

    key = jax.random.PRNGKey(0)
    k_param, k_x = jax.random.split(key)
    torch_params = init_params(k_param, obsv_width=W, obsv_height=H,
                               num_actions=num_actions)
    kernel_params = prepare_params(torch_params, obsv_width=W, obsv_height=H)
    x = jax.random.normal(k_x, (B, C, H, W), jnp.float32)

    fwd = jax.jit(dqn_forward, static_argnames=("num_actions", "batch_tile"))
    out = fwd(kernel_params, x, num_actions=num_actions, batch_tile=1)  # grid=(2,)
    out = jax.block_until_ready(out)
    assert out.shape == (B, num_actions), out.shape

    ref = dqn_reference(torch_params, x)
    err = float(jnp.max(jnp.abs(out - ref)))
    assert err < 5e-2, f"kernel vs reference max |err| = {err}"
    print("KERNEL_OK")
</pallas_src>

<mosaic_0001>
module attributes {stable_mosaic.version = 11 : i64} {
  func.func @_dqn_kernel(%arg0: i32, %arg1: memref<1x16x16x128xf32, #tpu.memory_space<vmem>>, %arg2: memref<1152x128xf32, #tpu.memory_space<vmem>>, %arg3: memref<1x128xf32, #tpu.memory_space<vmem>>, %arg4: memref<1152x128xf32, #tpu.memory_space<vmem>>, %arg5: memref<1x128xf32, #tpu.memory_space<vmem>>, %arg6: memref<1152x128xf32, #tpu.memory_space<vmem>>, %arg7: memref<1x128xf32, #tpu.memory_space<vmem>>, %arg8: memref<512x512xf32, #tpu.memory_space<vmem>>, %arg9: memref<1x512xf32, #tpu.memory_space<vmem>>, %arg10: memref<512x128xf32, #tpu.memory_space<vmem>>, %arg11: memref<1x128xf32, #tpu.memory_space<vmem>>, %arg12: memref<1x1x128xf32, #tpu.memory_space<vmem>>, %arg13: memref<1x18x18x128xf32, #tpu.memory_space<vmem>>, %arg14: memref<1x10x10x128xf32, #tpu.memory_space<vmem>>, %arg15: memref<1x6x6x128xf32, #tpu.memory_space<vmem>>) attributes {dimension_semantics = [#tpu.dimension_semantics<parallel>], iteration_bounds = array<i64: 2>, scalar_prefetch = 0 : i64, scratch_operands = 3 : i64, tpu.core_type = #tpu.core_type<tc>, window_params = [{transform_indices = @transform_0, window_bounds = array<i64: 1, 16, 16, 128>}, {pipeline_mode = #tpu.pipeline_mode<synchronous>, transform_indices = @transform_1, window_bounds = array<i64: 1152, 128>}, {pipeline_mode = #tpu.pipeline_mode<synchronous>, transform_indices = @transform_2, window_bounds = array<i64: 1, 128>}, {pipeline_mode = #tpu.pipeline_mode<synchronous>, transform_indices = @transform_3, window_bounds = array<i64: 1152, 128>}, {pipeline_mode = #tpu.pipeline_mode<synchronous>, transform_indices = @transform_4, window_bounds = array<i64: 1, 128>}, {pipeline_mode = #tpu.pipeline_mode<synchronous>, transform_indices = @transform_5, window_bounds = array<i64: 1152, 128>}, {pipeline_mode = #tpu.pipeline_mode<synchronous>, transform_indices = @transform_6, window_bounds = array<i64: 1, 128>}, {pipeline_mode = #tpu.pipeline_mode<synchronous>, transform_indices = @transform_7, window_bounds = array<i64: 512, 512>}, {pipeline_mode = #tpu.pipeline_mode<synchronous>, transform_indices = @transform_8, window_bounds = array<i64: 1, 512>}, {pipeline_mode = #tpu.pipeline_mode<synchronous>, transform_indices = @transform_9, window_bounds = array<i64: 512, 128>}, {pipeline_mode = #tpu.pipeline_mode<synchronous>, transform_indices = @transform_10, window_bounds = array<i64: 1, 128>}, {transform_indices = @transform_11, window_bounds = array<i64: 1, 1, 128>}]} {
    %c0 = arith.constant 0 : index
    %c0_0 = arith.constant 0 : index
    %c0_1 = arith.constant 0 : index
    %c0_2 = arith.constant 0 : index
    %0 = vector.load %arg1[%c0, %c0_0, %c0_1, %c0_2] : memref<1x16x16x128xf32, #tpu.memory_space<vmem>>, vector<1x16x16x128xf32>
    %cst = arith.constant 0.000000e+00 : f32
    %1 = vector.broadcast %cst : f32 to vector<1x1x18x128xf32>
    %c0_3 = arith.constant 0 : index
    %c0_4 = arith.constant 0 : index
    %c0_5 = arith.constant 0 : index
    %c0_6 = arith.constant 0 : index
    %2 = vector.load %arg13[%c0_3, %c0_4, %c0_5, %c0_6] : memref<1x18x18x128xf32, #tpu.memory_space<vmem>>, vector<1x1x18x128xf32>
    tpu.vector_store %arg13[%c0_3, %c0_4, %c0_5, %c0_6], %1 {strides = array<i32>} : memref<1x18x18x128xf32, #tpu.memory_space<vmem>>, vector<1x1x18x128xf32>,
    %cst_7 = arith.constant 0.000000e+00 : f32
    %3 = vector.broadcast %cst_7 : f32 to vector<1x1x18x128xf32>
    %c0_8 = arith.constant 0 : index
    %c17 = arith.constant 17 : index
    %c0_9 = arith.constant 0 : index
    %c0_10 = arith.constant 0 : index
    %4 = vector.load %arg13[%c0_8, %c17, %c0_9, %c0_10] : memref<1x18x18x128xf32, #tpu.memory_space<vmem>>, vector<1x1x18x128xf32>
    tpu.vector_store %arg13[%c0_8, %c17, %c0_9, %c0_10], %3 {strides = array<i32>} : memref<1x18x18x128xf32, #tpu.memory_space<vmem>>, vector<1x1x18x128xf32>,
    %cst_11 = arith.constant 0.000000e+00 : f32
    %5 = vector.broadcast %cst_11 : f32 to vector<1x18x1x128xf32>
    %c0_12 = arith.constant 0 : index
    %c0_13 = arith.constant 0 : index
    %c0_14 = arith.constant 0 : index
    %c0_15 = arith.constant 0 : index
    %6 = vector.load %arg13[%c0_12, %c0_13, %c0_14, %c0_15] : memref<1x18x18x128xf32, #tpu.memory_space<vmem>>, vector<1x18x1x128xf32>
    tpu.vector_store %arg13[%c0_12, %c0_13, %c0_14, %c0_15], %5 {strides = array<i32>} : memref<1x18x18x128xf32, #tpu.memory_space<vmem>>, vector<1x18x1x128xf32>,
    %cst_16 = arith.constant 0.000000e+00 : f32
    %7 = vector.broadcast %cst_16 : f32 to vector<1x18x1x128xf32>
    %c0_17 = arith.constant 0 : index
    %c0_18 = arith.constant 0 : index
    %c17_19 = arith.constant 17 : index
    %c0_20 = arith.constant 0 : index
    %8 = vector.load %arg13[%c0_17, %c0_18, %c17_19, %c0_20] : memref<1x18x18x128xf32, #tpu.memory_space<vmem>>, vector<1x18x1x128xf32>
    tpu.vector_store %arg13[%c0_17, %c0_18, %c17_19, %c0_20], %7 {strides = array<i32>} : memref<1x18x18x128xf32, #tpu.memory_space<vmem>>, vector<1x18x1x128xf32>,
    %c0_21 = arith.constant 0 : index
    %c1 = arith.constant 1 : index
    %c1_22 = arith.constant 1 : index
    %c0_23 = arith.constant 0 : index
    %9 = vector.load %arg13[%c0_21, %c1, %c1_22, %c0_23] : memref<1x18x18x128xf32, #tpu.memory_space<vmem>>, vector<1x16x16x128xf32>
    tpu.vector_store %arg13[%c0_21, %c1, %c1_22, %c0_23], %0 {strides = array<i32>} : memref<1x18x18x128xf32, #tpu.memory_space<vmem>>, vector<1x16x16x128xf32>,
    %c0_24 = arith.constant 0 : index
    %c0_25 = arith.constant 0 : index
    %c0_26 = arith.constant 0 : index
    %c0_27 = arith.constant 0 : index
    %10 = vector.load %arg13[%c0_24, %c0_25, %c0_26, %c0_27] : memref<1x18x18x128xf32, #tpu.memory_space<vmem>>, vector<1x18x18x128xf32>
    %11 = vector.extract_strided_slice %10 {offsets = [0, 0, 0, 0], sizes = [1, 16, 16, 128], strides = [1, 1, 1, 1]} : vector<1x18x18x128xf32> to vector<1x16x16x128xf32>
    %12 = vector.extract_strided_slice %10 {offsets = [0, 0, 1, 0], sizes = [1, 16, 16, 128], strides = [1, 1, 1, 1]} : vector<1x18x18x128xf32> to vector<1x16x16x128xf32>
    %13 = vector.extract_strided_slice %10 {offsets = [0, 0, 2, 0], sizes = [1, 16, 16, 128], strides = [1, 1, 1, 1]} : vector<1x18x18x128xf32> to vector<1x16x16x128xf32>
    %14 = vector.extract_strided_slice %10 {offsets = [0, 1, 0, 0], sizes = [1, 16, 16, 128], strides = [1, 1, 1, 1]} : vector<1x18x18x128xf32> to vector<1x16x16x128xf32>
    %15 = vector.extract_strided_slice %10 {offsets = [0, 1, 1, 0], sizes = [1, 16, 16, 128], strides = [1, 1, 1, 1]} : vector<1x18x18x128xf32> to vector<1x16x16x128xf32>
    %16 = vector.extract_strided_slice %10 {offsets = [0, 1, 2, 0], sizes = [1, 16, 16, 128], strides = [1, 1, 1, 1]} : vector<1x18x18x128xf32> to vector<1x16x16x128xf32>
    %17 = vector.extract_strided_slice %10 {offsets = [0, 2, 0, 0], sizes = [1, 16, 16, 128], strides = [1, 1, 1, 1]} : vector<1x18x18x128xf32> to vector<1x16x16x128xf32>
    %18 = vector.extract_strided_slice %10 {offsets = [0, 2, 1, 0], sizes = [1, 16, 16, 128], strides = [1, 1, 1, 1]} : vector<1x18x18x128xf32> to vector<1x16x16x128xf32>
    %19 = vector.extract_strided_slice %10 {offsets = [0, 2, 2, 0], sizes = [1, 16, 16, 128], strides = [1, 1, 1, 1]} : vector<1x18x18x128xf32> to vector<1x16x16x128xf32>
    %20 = tpu.concatenate %11, %12, %13, %14, %15, %16, %17, %18, %19 in 3 : vector<1x16x16x128xf32>, vector<1x16x16x128xf32>, vector<1x16x16x128xf32>, vector<1x16x16x128xf32>, vector<1x16x16x128xf32>, vector<1x16x16x128xf32>, vector<1x16x16x128xf32>, vector<1x16x16x128xf32>, vector<1x16x16x128xf32> -> vector<1x16x16x1152xf32>
    %21 = vector.shape_cast %20 : vector<1x16x16x1152xf32> to vector<256x1152xf32>
    %c0_28 = arith.constant 0 : index
    %c0_29 = arith.constant 0 : index
    %22 = vector.load %arg2[%c0_28, %c0_29] : memref<1152x128xf32, #tpu.memory_space<vmem>>, vector<1152x128xf32>
    %cst_30 = arith.constant dense<0.000000e+00> : vector<256x128xf32>
    %23 = tpu.matmul %21, %22, %cst_30 {dimension_numbers = #tpu.dot_dimension_numbers<[1], [0], [0], [1], [0, 0, 1, 1], [], []>} : vector<256x1152xf32>, vector<1152x128xf32>, vector<256x128xf32> -> vector<256x128xf32>
    %c0_31 = arith.constant 0 : index
    %c0_32 = arith.constant 0 : index
    %24 = vector.load %arg3[%c0_31, %c0_32] : memref<1x128xf32, #tpu.memory_space<vmem>>, vector<1x128xf32>
    %25 = vector.broadcast %24 : vector<1x128xf32> to vector<256x128xf32>
    %26 = arith.addf %23, %25 : vector<256x128xf32>
    %cst_33 = arith.constant 0.000000e+00 : f32
    %27 = vector.broadcast %cst_33 : f32 to vector<256x128xf32>
    %28 = arith.maximumf %26, %27 : vector<256x128xf32>
    %29 = vector.shape_cast %28 : vector<256x128xf32> to vector<1x8x2x16x128xf32>
    %30 = vector.extract_strided_slice %29 {offsets = [0, 0, 0, 0, 0], sizes = [1, 8, 1, 16, 128], strides = [1, 1, 1, 1, 1]} : vector<1x8x2x16x128xf32> to vector<1x8x1x16x128xf32>
    %31 = vector.shape_cast %30 : vector<1x8x1x16x128xf32> to vector<1x8x16x128xf32>
    %32 = vector.extract_strided_slice %29 {offsets = [0, 0, 1, 0, 0], sizes = [1, 8, 1, 16, 128], strides = [1, 1, 1, 1, 1]} : vector<1x8x2x16x128xf32> to vector<1x8x1x16x128xf32>
    %33 = vector.shape_cast %32 : vector<1x8x1x16x128xf32> to vector<1x8x16x128xf32>
    %34 = arith.maximumf %31, %33 : vector<1x8x16x128xf32>
    %35 = vector.shape_cast %34 : vector<1x8x16x128xf32> to vector<1x8x8x2x128xf32>
    %36 = vector.extract_strided_slice %35 {offsets = [0, 0, 0, 0, 0], sizes = [1, 8, 8, 1, 128], strides = [1, 1, 1, 1, 1]} : vector<1x8x8x2x128xf32> to vector<1x8x8x1x128xf32>
    %37 = vector.shape_cast %36 : vector<1x8x8x1x128xf32> to vector<1x8x8x128xf32>
    %38 = vector.extract_strided_slice %35 {offsets = [0, 0, 0, 1, 0], sizes = [1, 8, 8, 1, 128], strides = [1, 1, 1, 1, 1]} : vector<1x8x8x2x128xf32> to vector<1x8x8x1x128xf32>
    %39 = vector.shape_cast %38 : vector<1x8x8x1x128xf32> to vector<1x8x8x128xf32>
    %40 = arith.maximumf %37, %39 : vector<1x8x8x128xf32>
    %cst_34 = arith.constant 0.000000e+00 : f32
    %41 = vector.broadcast %cst_34 : f32 to vector<1x1x10x128xf32>
    %c0_35 = arith.constant 0 : index
    %c0_36 = arith.constant 0 : index
    %c0_37 = arith.constant 0 : index
    %c0_38 = arith.constant 0 : index
    %42 = vector.load %arg14[%c0_35, %c0_36, %c0_37, %c0_38] : memref<1x10x10x128xf32, #tpu.memory_space<vmem>>, vector<1x1x10x128xf32>
    tpu.vector_store %arg14[%c0_35, %c0_36, %c0_37, %c0_38], %41 {strides = array<i32>} : memref<1x10x10x128xf32, #tpu.memory_space<vmem>>, vector<1x1x10x128xf32>,
    %cst_39 = arith.constant 0.000000e+00 : f32
    %43 = vector.broadcast %cst_39 : f32 to vector<1x1x10x128xf32>
    %c0_40 = arith.constant 0 : index
    %c9 = arith.constant 9 : index
    %c0_41 = arith.constant 0 : index
    %c0_42 = arith.constant 0 : index
    %44 = vector.load %arg14[%c0_40, %c9, %c0_41, %c0_42] : memref<1x10x10x128xf32, #tpu.memory_space<vmem>>, vector<1x1x10x128xf32>
    tpu.vector_store %arg14[%c0_40, %c9, %c0_41, %c0_42], %43 {strides = array<i32>} : memref<1x10x10x128xf32, #tpu.memory_space<vmem>>, vector<1x1x10x128xf32>,
    %cst_43 = arith.constant 0.000000e+00 : f32
    %45 = vector.broadcast %cst_43 : f32 to vector<1x10x1x128xf32>
    %c0_44 = arith.constant 0 : index
    %c0_45 = arith.constant 0 : index
    %c0_46 = arith.constant 0 : index
    %c0_47 = arith.constant 0 : index
    %46 = vector.load %arg14[%c0_44, %c0_45, %c0_46, %c0_47] : memref<1x10x10x128xf32, #tpu.memory_space<vmem>>, vector<1x10x1x128xf32>
    tpu.vector_store %arg14[%c0_44, %c0_45, %c0_46, %c0_47], %45 {strides = array<i32>} : memref<1x10x10x128xf32, #tpu.memory_space<vmem>>, vector<1x10x1x128xf32>,
    %cst_48 = arith.constant 0.000000e+00 : f32
    %47 = vector.broadcast %cst_48 : f32 to vector<1x10x1x128xf32>
    %c0_49 = arith.constant 0 : index
    %c0_50 = arith.constant 0 : index
    %c9_51 = arith.constant 9 : index
    %c0_52 = arith.constant 0 : index
    %48 = vector.load %arg14[%c0_49, %c0_50, %c9_51, %c0_52] : memref<1x10x10x128xf32, #tpu.memory_space<vmem>>, vector<1x10x1x128xf32>
    tpu.vector_store %arg14[%c0_49, %c0_50, %c9_51, %c0_52], %47 {strides = array<i32>} : memref<1x10x10x128xf32, #tpu.memory_space<vmem>>, vector<1x10x1x128xf32>,
    %c0_53 = arith.constant 0 : index
    %c1_54 = arith.constant 1 : index
    %c1_55 = arith.constant 1 : index
    %c0_56 = arith.constant 0 : index
    %49 = vector.load %arg14[%c0_53, %c1_54, %c1_55, %c0_56] : memref<1x10x10x128xf32, #tpu.memory_space<vmem>>, vector<1x8x8x128xf32>
    tpu.vector_store %arg14[%c0_53, %c1_54, %c1_55, %c0_56], %40 {strides = array<i32>} : memref<1x10x10x128xf32, #tpu.memory_space<vmem>>, vector<1x8x8x128xf32>,
    %c0_57 = arith.constant 0 : index
    %c0_58 = arith.constant 0 : index
    %c0_59 = arith.constant 0 : index
    %c0_60 = arith.constant 0 : index
    %50 = vector.load %arg14[%c0_57, %c0_58, %c0_59, %c0_60] : memref<1x10x10x128xf32, #tpu.memory_space<vmem>>, vector<1x10x10x128xf32>
    %51 = vector.extract_strided_slice %50 {offsets = [0, 0, 0, 0], sizes = [1, 8, 8, 128], strides = [1, 1, 1, 1]} : vector<1x10x10x128xf32> to vector<1x8x8x128xf32>
    %52 = vector.extract_strided_slice %50 {offsets = [0, 0, 1, 0], sizes = [1, 8, 8, 128], strides = [1, 1, 1, 1]} : vector<1x10x10x128xf32> to vector<1x8x8x128xf32>
    %53 = vector.extract_strided_slice %50 {offsets = [0, 0, 2, 0], sizes = [1, 8, 8, 128], strides = [1, 1, 1, 1]} : vector<1x10x10x128xf32> to vector<1x8x8x128xf32>
    %54 = vector.extract_strided_slice %50 {offsets = [0, 1, 0, 0], sizes = [1, 8, 8, 128], strides = [1, 1, 1, 1]} : vector<1x10x10x128xf32> to vector<1x8x8x128xf32>
    %55 = vector.extract_strided_slice %50 {offsets = [0, 1, 1, 0], sizes = [1, 8, 8, 128], strides = [1, 1, 1, 1]} : vector<1x10x10x128xf32> to vector<1x8x8x128xf32>
    %56 = vector.extract_strided_slice %50 {offsets = [0, 1, 2, 0], sizes = [1, 8, 8, 128], strides = [1, 1, 1, 1]} : vector<1x10x10x128xf32> to vector<1x8x8x128xf32>
    %57 = vector.extract_strided_slice %50 {offsets = [0, 2, 0, 0], sizes = [1, 8, 8, 128], strides = [1, 1, 1, 1]} : vector<1x10x10x128xf32> to vector<1x8x8x128xf32>
    %58 = vector.extract_strided_slice %50 {offsets = [0, 2, 1, 0], sizes = [1, 8, 8, 128], strides = [1, 1, 1, 1]} : vector<1x10x10x128xf32> to vector<1x8x8x128xf32>
    %59 = vector.extract_strided_slice %50 {offsets = [0, 2, 2, 0], sizes = [1, 8, 8, 128], strides = [1, 1, 1, 1]} : vector<1x10x10x128xf32> to vector<1x8x8x128xf32>
    %60 = tpu.concatenate %51, %52, %53, %54, %55, %56, %57, %58, %59 in 3 : vector<1x8x8x128xf32>, vector<1x8x8x128xf32>, vector<1x8x8x128xf32>, vector<1x8x8x128xf32>, vector<1x8x8x128xf32>, vector<1x8x8x128xf32>, vector<1x8x8x128xf32>, vector<1x8x8x128xf32>, vector<1x8x8x128xf32> -> vector<1x8x8x1152xf32>
    %61 = vector.shape_cast %60 : vector<1x8x8x1152xf32> to vector<64x1152xf32>
    %c0_61 = arith.constant 0 : index
    %c0_62 = arith.constant 0 : index
    %62 = vector.load %arg4[%c0_61, %c0_62] : memref<1152x128xf32, #tpu.memory_space<vmem>>, vector<1152x128xf32>
    %cst_63 = arith.constant dense<0.000000e+00> : vector<64x128xf32>
    %63 = tpu.matmul %61, %62, %cst_63 {dimension_numbers = #tpu.dot_dimension_numbers<[1], [0], [0], [1], [0, 0, 1, 1], [], []>} : vector<64x1152xf32>, vector<1152x128xf32>, vector<64x128xf32> -> vector<64x128xf32>
    %c0_64 = arith.constant 0 : index
    %c0_65 = arith.constant 0 : index
    %64 = vector.load %arg5[%c0_64, %c0_65] : memref<1x128xf32, #tpu.memory_space<vmem>>, vector<1x128xf32>
    %65 = vector.broadcast %64 : vector<1x128xf32> to vector<64x128xf32>
    %66 = arith.addf %63, %65 : vector<64x128xf32>
    %cst_66 = arith.constant 0.000000e+00 : f32
    %67 = vector.broadcast %cst_66 : f32 to vector<64x128xf32>
    %68 = arith.maximumf %66, %67 : vector<64x128xf32>
    %69 = vector.shape_cast %68 : vector<64x128xf32> to vector<1x4x2x8x128xf32>
    %70 = vector.extract_strided_slice %69 {offsets = [0, 0, 0, 0, 0], sizes = [1, 4, 1, 8, 128], strides = [1, 1, 1, 1, 1]} : vector<1x4x2x8x128xf32> to vector<1x4x1x8x128xf32>
    %71 = vector.shape_cast %70 : vector<1x4x1x8x128xf32> to vector<1x4x8x128xf32>
    %72 = vector.extract_strided_slice %69 {offsets = [0, 0, 1, 0, 0], sizes = [1, 4, 1, 8, 128], strides = [1, 1, 1, 1, 1]} : vector<1x4x2x8x128xf32> to vector<1x4x1x8x128xf32>
    %73 = vector.shape_cast %72 : vector<1x4x1x8x128xf32> to vector<1x4x8x128xf32>
    %74 = arith.maximumf %71, %73 : vector<1x4x8x128xf32>
    %75 = vector.shape_cast %74 : vector<1x4x8x128xf32> to vector<1x4x4x2x128xf32>
    %76 = vector.extract_strided_slice %75 {offsets = [0, 0, 0, 0, 0], sizes = [1, 4, 4, 1, 128], strides = [1, 1, 1, 1, 1]} : vector<1x4x4x2x128xf32> to vector<1x4x4x1x128xf32>
    %77 = vector.shape_cast %76 : vector<1x4x4x1x128xf32> to vector<1x4x4x128xf32>
    %78 = vector.extract_strided_slice %75 {offsets = [0, 0, 0, 1, 0], sizes = [1, 4, 4, 1, 128], strides = [1, 1, 1, 1, 1]} : vector<1x4x4x2x128xf32> to vector<1x4x4x1x128xf32>
    %79 = vector.shape_cast %78 : vector<1x4x4x1x128xf32> to vector<1x4x4x128xf32>
    %80 = arith.maximumf %77, %79 : vector<1x4x4x128xf32>
    %cst_67 = arith.constant 0.000000e+00 : f32
    %81 = vector.broadcast %cst_67 : f32 to vector<1x1x6x128xf32>
    %c0_68 = arith.constant 0 : index
    %c0_69 = arith.constant 0 : index
    %c0_70 = arith.constant 0 : index
    %c0_71 = arith.constant 0 : index
    %82 = vector.load %arg15[%c0_68, %c0_69, %c0_70, %c0_71] : memref<1x6x6x128xf32, #tpu.memory_space<vmem>>, vector<1x1x6x128xf32>
    tpu.vector_store %arg15[%c0_68, %c0_69, %c0_70, %c0_71], %81 {strides = array<i32>} : memref<1x6x6x128xf32, #tpu.memory_space<vmem>>, vector<1x1x6x128xf32>,
    %cst_72 = arith.constant 0.000000e+00 : f32
    %83 = vector.broadcast %cst_72 : f32 to vector<1x1x6x128xf32>
    %c0_73 = arith.constant 0 : index
    %c5 = arith.constant 5 : index
    %c0_74 = arith.constant 0 : index
    %c0_75 = arith.constant 0 : index
    %84 = vector.load %arg15[%c0_73, %c5, %c0_74, %c0_75] : memref<1x6x6x128xf32, #tpu.memory_space<vmem>>, vector<1x1x6x128xf32>
    tpu.vector_store %arg15[%c0_73, %c5, %c0_74, %c0_75], %83 {strides = array<i32>} : memref<1x6x6x128xf32, #tpu.memory_space<vmem>>, vector<1x1x6x128xf32>,
    %cst_76 = arith.constant 0.000000e+00 : f32
    %85 = vector.broadcast %cst_76 : f32 to vector<1x6x1x128xf32>
    %c0_77 = arith.constant 0 : index
    %c0_78 = arith.constant 0 : index
    %c0_79 = arith.constant 0 : index
    %c0_80 = arith.constant 0 : index
    %86 = vector.load %arg15[%c0_77, %c0_78, %c0_79, %c0_80] : memref<1x6x6x128xf32, #tpu.memory_space<vmem>>, vector<1x6x1x128xf32>
    tpu.vector_store %arg15[%c0_77, %c0_78, %c0_79, %c0_80], %85 {strides = array<i32>} : memref<1x6x6x128xf32, #tpu.memory_space<vmem>>, vector<1x6x1x128xf32>,
    %cst_81 = arith.constant 0.000000e+00 : f32
    %87 = vector.broadcast %cst_81 : f32 to vector<1x6x1x128xf32>
    %c0_82 = arith.constant 0 : index
    %c0_83 = arith.constant 0 : index
    %c5_84 = arith.constant 5 : index
    %c0_85 = arith.constant 0 : index
    %88 = vector.load %arg15[%c0_82, %c0_83, %c5_84, %c0_85] : memref<1x6x6x128xf32, #tpu.memory_space<vmem>>, vector<1x6x1x128xf32>
    tpu.vector_store %arg15[%c0_82, %c0_83, %c5_84, %c0_85], %87 {strides = array<i32>} : memref<1x6x6x128xf32, #tpu.memory_space<vmem>>, vector<1x6x1x128xf32>,
    %c0_86 = arith.constant 0 : index
    %c1_87 = arith.constant 1 : index
    %c1_88 = arith.constant 1 : index
    %c0_89 = arith.constant 0 : index
    %89 = vector.load %arg15[%c0_86, %c1_87, %c1_88, %c0_89] : memref<1x6x6x128xf32, #tpu.memory_space<vmem>>, vector<1x4x4x128xf32>
    tpu.vector_store %arg15[%c0_86, %c1_87, %c1_88, %c0_89], %80 {strides = array<i32>} : memref<1x6x6x128xf32, #tpu.memory_space<vmem>>, vector<1x4x4x128xf32>,
    %c0_90 = arith.constant 0 : index
    %c0_91 = arith.constant 0 : index
    %c0_92 = arith.constant 0 : index
    %c0_93 = arith.constant 0 : index
    %90 = vector.load %arg15[%c0_90, %c0_91, %c0_92, %c0_93] : memref<1x6x6x128xf32, #tpu.memory_space<vmem>>, vector<1x6x6x128xf32>
    %91 = vector.extract_strided_slice %90 {offsets = [0, 0, 0, 0], sizes = [1, 4, 4, 128], strides = [1, 1, 1, 1]} : vector<1x6x6x128xf32> to vector<1x4x4x128xf32>
    %92 = vector.extract_strided_slice %90 {offsets = [0, 0, 1, 0], sizes = [1, 4, 4, 128], strides = [1, 1, 1, 1]} : vector<1x6x6x128xf32> to vector<1x4x4x128xf32>
    %93 = vector.extract_strided_slice %90 {offsets = [0, 0, 2, 0], sizes = [1, 4, 4, 128], strides = [1, 1, 1, 1]} : vector<1x6x6x128xf32> to vector<1x4x4x128xf32>
    %94 = vector.extract_strided_slice %90 {offsets = [0, 1, 0, 0], sizes = [1, 4, 4, 128], strides = [1, 1, 1, 1]} : vector<1x6x6x128xf32> to vector<1x4x4x128xf32>
    %95 = vector.extract_strided_slice %90 {offsets = [0, 1, 1, 0], sizes = [1, 4, 4, 128], strides = [1, 1, 1, 1]} : vector<1x6x6x128xf32> to vector<1x4x4x128xf32>
    %96 = vector.extract_strided_slice %90 {offsets = [0, 1, 2, 0], sizes = [1, 4, 4, 128], strides = [1, 1, 1, 1]} : vector<1x6x6x128xf32> to vector<1x4x4x128xf32>
    %97 = vector.extract_strided_slice %90 {offsets = [0, 2, 0, 0], sizes = [1, 4, 4, 128], strides = [1, 1, 1, 1]} : vector<1x6x6x128xf32> to vector<1x4x4x128xf32>
    %98 = vector.extract_strided_slice %90 {offsets = [0, 2, 1, 0], sizes = [1, 4, 4, 128], strides = [1, 1, 1, 1]} : vector<1x6x6x128xf32> to vector<1x4x4x128xf32>
    %99 = vector.extract_strided_slice %90 {offsets = [0, 2, 2, 0], sizes = [1, 4, 4, 128], strides = [1, 1, 1, 1]} : vector<1x6x6x128xf32> to vector<1x4x4x128xf32>
    %100 = tpu.concatenate %91, %92, %93, %94, %95, %96, %97, %98, %99 in 3 : vector<1x4x4x128xf32>, vector<1x4x4x128xf32>, vector<1x4x4x128xf32>, vector<1x4x4x128xf32>, vector<1x4x4x128xf32>, vector<1x4x4x128xf32>, vector<1x4x4x128xf32>, vector<1x4x4x128xf32>, vector<1x4x4x128xf32> -> vector<1x4x4x1152xf32>
    %101 = vector.shape_cast %100 : vector<1x4x4x1152xf32> to vector<16x1152xf32>
    %c0_94 = arith.constant 0 : index
    %c0_95 = arith.constant 0 : index
    %102 = vector.load %arg6[%c0_94, %c0_95] : memref<1152x128xf32, #tpu.memory_space<vmem>>, vector<1152x128xf32>
    %cst_96 = arith.constant dense<0.000000e+00> : vector<16x128xf32>
    %103 = tpu.matmul %101, %102, %cst_96 {dimension_numbers = #tpu.dot_dimension_numbers<[1], [0], [0], [1], [0, 0, 1, 1], [], []>} : vector<16x1152xf32>, vector<1152x128xf32>, vector<16x128xf32> -> vector<16x128xf32>
    %c0_97 = arith.constant 0 : index
    %c0_98 = arith.constant 0 : index
    %104 = vector.load %arg7[%c0_97, %c0_98] : memref<1x128xf32, #tpu.memory_space<vmem>>, vector<1x128xf32>
    %105 = vector.broadcast %104 : vector<1x128xf32> to vector<16x128xf32>
    %106 = arith.addf %103, %105 : vector<16x128xf32>
    %cst_99 = arith.constant 0.000000e+00 : f32
    %107 = vector.broadcast %cst_99 : f32 to vector<16x128xf32>
    %108 = arith.maximumf %106, %107 : vector<16x128xf32>
    %109 = vector.shape_cast %108 : vector<16x128xf32> to vector<1x2x2x4x128xf32>
    %110 = vector.extract_strided_slice %109 {offsets = [0, 0, 0, 0, 0], sizes = [1, 2, 1, 4, 128], strides = [1, 1, 1, 1, 1]} : vector<1x2x2x4x128xf32> to vector<1x2x1x4x128xf32>
    %111 = vector.shape_cast %110 : vector<1x2x1x4x128xf32> to vector<1x2x4x128xf32>
    %112 = vector.extract_strided_slice %109 {offsets = [0, 0, 1, 0, 0], sizes = [1, 2, 1, 4, 128], strides = [1, 1, 1, 1, 1]} : vector<1x2x2x4x128xf32> to vector<1x2x1x4x128xf32>
    %113 = vector.shape_cast %112 : vector<1x2x1x4x128xf32> to vector<1x2x4x128xf32>
    %114 = arith.maximumf %111, %113 : vector<1x2x4x128xf32>
    %115 = vector.shape_cast %114 : vector<1x2x4x128xf32> to vector<1x2x2x2x128xf32>
    %116 = vector.extract_strided_slice %115 {offsets = [0, 0, 0, 0, 0], sizes = [1, 2, 2, 1, 128], strides = [1, 1, 1, 1, 1]} : vector<1x2x2x2x128xf32> to vector<1x2x2x1x128xf32>
    %117 = vector.shape_cast %116 : vector<1x2x2x1x128xf32> to vector<1x2x2x128xf32>
    %118 = vector.extract_strided_slice %115 {offsets = [0, 0, 0, 1, 0], sizes = [1, 2, 2, 1, 128], strides = [1, 1, 1, 1, 1]} : vector<1x2x2x2x128xf32> to vector<1x2x2x1x128xf32>
    %119 = vector.shape_cast %118 : vector<1x2x2x1x128xf32> to vector<1x2x2x128xf32>
    %120 = arith.maximumf %117, %119 : vector<1x2x2x128xf32>
    %121 = vector.shape_cast %120 : vector<1x2x2x128xf32> to vector<1x512xf32>
    %c0_100 = arith.constant 0 : index
    %c0_101 = arith.constant 0 : index
    %122 = vector.load %arg8[%c0_100, %c0_101] : memref<512x512xf32, #tpu.memory_space<vmem>>, vector<512x512xf32>
    %cst_102 = arith.constant dense<0.000000e+00> : vector<1x512xf32>
    %123 = tpu.matmul %121, %122, %cst_102 {dimension_numbers = #tpu.dot_dimension_numbers<[1], [0], [0], [1], [0, 0, 1, 1], [], []>} : vector<1x512xf32>, vector<512x512xf32>, vector<1x512xf32> -> vector<1x512xf32>
    %c0_103 = arith.constant 0 : index
    %c0_104 = arith.constant 0 : index
    %124 = vector.load %arg9[%c0_103, %c0_104] : memref<1x512xf32, #tpu.memory_space<vmem>>, vector<1x512xf32>
    %125 = arith.addf %123, %124 : vector<1x512xf32>
    %cst_105 = arith.constant 0.000000e+00 : f32
    %126 = vector.broadcast %cst_105 : f32 to vector<1x512xf32>
    %127 = arith.maximumf %125, %126 : vector<1x512xf32>
    %c0_106 = arith.constant 0 : index
    %c0_107 = arith.constant 0 : index
    %128 = vector.load %arg10[%c0_106, %c0_107] : memref<512x128xf32, #tpu.memory_space<vmem>>, vector<512x128xf32>
    %cst_108 = arith.constant dense<0.000000e+00> : vector<1x128xf32>
    %129 = tpu.matmul %127, %128, %cst_108 {dimension_numbers = #tpu.dot_dimension_numbers<[1], [0], [0], [1], [0, 0, 1, 1], [], []>} : vector<1x512xf32>, vector<512x128xf32>, vector<1x128xf32> -> vector<1x128xf32>
    %c0_109 = arith.constant 0 : index
    %c0_110 = arith.constant 0 : index
    %130 = vector.load %arg11[%c0_109, %c0_110] : memref<1x128xf32, #tpu.memory_space<vmem>>, vector<1x128xf32>
    %131 = arith.addf %129, %130 : vector<1x128xf32>
    %132 = vector.shape_cast %131 : vector<1x128xf32> to vector<1x1x128xf32>
    %c0_111 = arith.constant 0 : index
    %c0_112 = arith.constant 0 : index
    %c0_113 = arith.constant 0 : index
    %133 = vector.load %arg12[%c0_111, %c0_112, %c0_113] : memref<1x1x128xf32, #tpu.memory_space<vmem>>, vector<1x1x128xf32>
    tpu.vector_store %arg12[%c0_111, %c0_112, %c0_113], %132 {strides = array<i32>} : memref<1x1x128xf32, #tpu.memory_space<vmem>>, vector<1x1x128xf32>,
    return
  }
  func.func @transform_0(%arg0: i32) -> (i32, i32, i32, i32) {
    %c0_i32 = arith.constant 0 : i32
    %c0_i32_0 = arith.constant 0 : i32
    %c0_i32_1 = arith.constant 0 : i32
    %c0_i32_2 = arith.constant 0 : i32
    return %arg0, %c0_i32, %c0_i32_0, %c0_i32_1 : i32, i32, i32, i32
  }
  func.func @transform_1(%arg0: i32) -> (i32, i32) {
    %c0_i32 = arith.constant 0 : i32
    %c0_i32_0 = arith.constant 0 : i32
    %c0_i32_1 = arith.constant 0 : i32
    return %c0_i32, %c0_i32_0 : i32, i32
  }
  func.func @transform_2(%arg0: i32) -> (i32, i32) {
    %c0_i32 = arith.constant 0 : i32
    %c0_i32_0 = arith.constant 0 : i32
    %c0_i32_1 = arith.constant 0 : i32
    return %c0_i32, %c0_i32_0 : i32, i32
  }
  func.func @transform_3(%arg0: i32) -> (i32, i32) {
    %c0_i32 = arith.constant 0 : i32
    %c0_i32_0 = arith.constant 0 : i32
    %c0_i32_1 = arith.constant 0 : i32
    return %c0_i32, %c0_i32_0 : i32, i32
  }
  func.func @transform_4(%arg0: i32) -> (i32, i32) {
    %c0_i32 = arith.constant 0 : i32
    %c0_i32_0 = arith.constant 0 : i32
    %c0_i32_1 = arith.constant 0 : i32
    return %c0_i32, %c0_i32_0 : i32, i32
  }
  func.func @transform_5(%arg0: i32) -> (i32, i32) {
    %c0_i32 = arith.constant 0 : i32
    %c0_i32_0 = arith.constant 0 : i32
    %c0_i32_1 = arith.constant 0 : i32
    return %c0_i32, %c0_i32_0 : i32, i32
  }
  func.func @transform_6(%arg0: i32) -> (i32, i32) {
    %c0_i32 = arith.constant 0 : i32
    %c0_i32_0 = arith.constant 0 : i32
    %c0_i32_1 = arith.constant 0 : i32
    return %c0_i32, %c0_i32_0 : i32, i32
  }
  func.func @transform_7(%arg0: i32) -> (i32, i32) {
    %c0_i32 = arith.constant 0 : i32
    %c0_i32_0 = arith.constant 0 : i32
    %c0_i32_1 = arith.constant 0 : i32
    return %c0_i32, %c0_i32_0 : i32, i32
  }
  func.func @transform_8(%arg0: i32) -> (i32, i32) {
    %c0_i32 = arith.constant 0 : i32
    %c0_i32_0 = arith.constant 0 : i32
    %c0_i32_1 = arith.constant 0 : i32
    return %c0_i32, %c0_i32_0 : i32, i32
  }
  func.func @transform_9(%arg0: i32) -> (i32, i32) {
    %c0_i32 = arith.constant 0 : i32
    %c0_i32_0 = arith.constant 0 : i32
    %c0_i32_1 = arith.constant 0 : i32
    return %c0_i32, %c0_i32_0 : i32, i32
  }
  func.func @transform_10(%arg0: i32) -> (i32, i32) {
    %c0_i32 = arith.constant 0 : i32
    %c0_i32_0 = arith.constant 0 : i32
    %c0_i32_1 = arith.constant 0 : i32
    return %c0_i32, %c0_i32_0 : i32, i32
  }
  func.func @transform_11(%arg0: i32) -> (i32, i32, i32) {
    %c0_i32 = arith.constant 0 : i32
    %c0_i32_0 = arith.constant 0 : i32
    %c0_i32_1 = arith.constant 0 : i32
    return %arg0, %c0_i32, %c0_i32_0 : i32, i32, i32
  }
}

</mosaic_0001>

<llo_original>
// kernel: dqn_forward.1
$region0: #{dqn_forward.1}
  #allocation0 [shape = 'u32[]', space=smem, size = 0x4, offset = 0x4, fixed_abs, tag = 'smem constant byte address 0x4 - core index']
  #allocation1 [shape = 'u32[144,128]{1,0:T(1,128)}', space=vmem, size = 0x12000, scoped, tag = 'internal scratch']
  #allocation2 [shape = 'f32[1,18,18,128]{3,2,1,0:T(8,128)}', space=vmem, size = 0x36000, scoped, tag = 'scratch operand']
  #allocation3 [shape = 'f32[1,10,10,128]{3,2,1,0:T(8,128)}', space=vmem, size = 0x14000, scoped, tag = 'scratch operand']
  #allocation4 [shape = 'f32[1,6,6,128]{3,2,1,0:T(8,128)}', space=vmem, size = 0x6000, scoped, tag = 'scratch operand']
  %s0 = inlined_call_operand.vmem [shape: f32[2,16,16,128], index: 0, kind: input, shape index: {}]
  %s1 = inlined_call_operand.vmem [shape: f32[1152,128], index: 1, kind: input, shape index: {}]
  %s2 = inlined_call_operand.vmem [shape: f32[1,128], index: 2, kind: input, shape index: {}]
  %s3 = inlined_call_operand.hbm [shape: f32[1152,128], index: 3, kind: input, shape index: {}]
  %s4 = inlined_call_operand.vmem [shape: f32[1,128], index: 4, kind: input, shape index: {}]
  %s5 = inlined_call_operand.hbm [shape: f32[1152,128], index: 5, kind: input, shape index: {}]
  %s6 = inlined_call_operand.vmem [shape: f32[1,128], index: 6, kind: input, shape index: {}]
  %s7 = inlined_call_operand.hbm [shape: f32[512,512], index: 7, kind: input, shape index: {}]
  %s8 = inlined_call_operand.vmem [shape: f32[1,512], index: 8, kind: input, shape index: {}]
  %s9 = inlined_call_operand.hbm [shape: f32[512,128], index: 9, kind: input, shape index: {}]
  %s10 = inlined_call_operand.vmem [shape: f32[1,128], index: 10, kind: input, shape index: {}]
  %s11 = inlined_call_operand.vmem [shape: f32[2,1,128], index: 11, kind: output, shape index: {}]
  %s12 = sld [smem:[#allocation0]]
  $region93: #{dqn_forward.1} parent=0
    _
  %s14 = ssub.s32 1, %s12
  %s15 = scalar_select 0, %s14, %s12
  $region1: #{dqn_forward.1} parent=0
    #allocation5 [shape = 'u8[589824]{0}', space=vmem, size = 0x90000, scoped, tag = 'input window, operand 3, single buffered']
    #allocation6 [shape = 's32[2]{0}', space=sflag, size = 0x8, scoped, tag = 'scoped memory for dqn_forward.1']
    #allocation7 [shape = 'u8[589824]{0}', space=vmem, size = 0x90000, scoped, tag = 'input window, operand 5, single buffered']
    #allocation8 [shape = 's32[1]{0}', space=sflag, size = 0x4, scoped, tag = 'scoped memory for dqn_forward.1']
    #allocation9 [shape = 'u8[1048576]{0}', space=vmem, size = 0x100000, scoped, tag = 'input window, operand 7, single buffered']
    #allocation10 [shape = 'u8[262144]{0}', space=vmem, size = 0x40000, scoped, tag = 'input window, operand 9, single buffered']
    #allocation11 [shape = 's32[1]{0}', space=sflag, size = 0x4, scoped, tag = 'scoped memory for dqn_forward.1']
    %16 = vsyncpa [#allocation6], 0
    %17 = vsyncpa [#allocation8], 0
    %18 = vsyncpa [#allocation11], 0
    loop: start=0, step=1, limit=4
    $region2: #{dqn_forward.1} parent=1 // loop_pre_header
      _
    $region3: #{dqn_forward.1} parent=1 // loop_header
      %s20 = sphi 0, %s24
      %p21 = scmp.ge.s32.totalorder %s20, 4
      %s30 = sphi 0, %s32
      %s33 = sphi 0, %s30
      %s34 = sphi 0, %s33
      %s50 = sphi 0, %s34
      %s54 = sphi 0, %s54
      %s56 = sphi 0, %s54
      %s57 = sphi 0, %s56
      %s71 = sphi 0, %s57
      %s75 = sphi 0, %s75
      %s77 = sphi 0, %s75
      %s78 = sphi 0, %s77
      %s92 = sphi 0, %s78
      %s96 = sphi 0, %s96
      %s98 = sphi 0, %s96
      %s99 = sphi 0, %s98
      %s113 = sphi 0, %s99
      %s117 = sphi 0, %s117
      %s119 = sphi 0, %s117
      %s120 = sphi 0, %s119
      %s134 = sphi 0, %s120
      %s138 = sphi 0, %s138
      %s140 = sphi 0, %s138
      %s141 = sphi 0, %s140
      %s155 = sphi 0, %s141
      %s159 = sphi 0, %s159
      %s161 = sphi 0, %s159
      %s162 = sphi 0, %s161
      %s176 = sphi 0, %s162
      %s180 = sphi 0, %s180
      %s182 = sphi 0, %s180
      %s183 = sphi 0, %s182
      %s197 = sphi 0, %s183
      %s201 = sphi 0, %s201
      %s203 = sphi 0, %s201
      %s204 = sphi 0, %s203
      %s218 = sphi 0, %s204
      %s222 = sphi 0, %s222
      %s224 = sphi 0, %s222
      %s225 = sphi 0, %s224
      %s239 = sphi 0, %s225
      %s243 = sphi 0, %s243
      %s245 = sphi 0, %s243
      %s246 = sphi 0, %s245
      %s260 = sphi 0, %s246
      %s266 = sphi 0, %s268
      %s269 = sphi 0, %s266
      %s270 = sphi 0, %s269
      %s286 = sphi 0, %s270
    $region4: #{dqn_forward.1} parent=1 // loop_header_branch
      %23 = sbr.rel (%p21) target = $region8
    $region5: #{dqn_forward.1} parent=1 // loop_body
      %s25 = ssub.s32 %s20, 1
      %s26 = ssub.s32 %s20, 2
      %s27 = sadd.s32 %s20, 1
      %s28 = ssub.s32 %s20, %s27
      %p29 = scmp.eq.s32.totalorder %s28, 0
      %s31 = sadd.s32 %s30, 1
      %s32 = scalar_select %p29, %s30, %s31
      %p35 = pneg %p29
      %p36 = scmp.eq.s32.totalorder %s20, 1
      %p37 = por %p35, %p36
      %p38 = scmp.ne.s32.totalorder %s30, %s33
      %p39 = scmp.eq.s32.totalorder %s20, 0
      %p40 = por %p38, %p39
      %p41 = scmp.ne.s32.totalorder %s30, %s33
      %p42 = scmp.eq.s32.totalorder %s25, 1
      %p43 = por %p41, %p42
      %p44 = scmp.ne.s32.totalorder %s33, %s34
      %p45 = scmp.eq.s32.totalorder %s25, 0
      %p46 = por %p44, %p45
      %p47 = scmp.ne.s32.totalorder %s33, %s34
      %p48 = scmp.eq.s32.totalorder %s26, 1
      %p49 = por %p47, %p48
      %p51 = scmp.ne.s32.totalorder %s34, %s50
      %p52 = scmp.eq.s32.totalorder %s26, 0
      %p53 = por %p51, %p52
      %s55 = sadd.s32 %s54, 1
      %p58 = scmp.eq.s32.totalorder %s20, 1
      %p59 = scmp.ne.s32.totalorder %s54, %s56
      %p60 = scmp.eq.s32.totalorder %s20, 0
      %p61 = por %p59, %p60
      %p62 = scmp.ne.s32.totalorder %s54, %s56
      %p63 = scmp.eq.s32.totalorder %s25, 1
      %p64 = por %p62, %p63
      %p65 = scmp.ne.s32.totalorder %s56, %s57
      %p66 = scmp.eq.s32.totalorder %s25, 0
      %p67 = por %p65, %p66
      %p68 = scmp.ne.s32.totalorder %s56, %s57
      %p69 = scmp.eq.s32.totalorder %s26, 1
      %p70 = por %p68, %p69
      %p72 = scmp.ne.s32.totalorder %s57, %s71
      %p73 = scmp.eq.s32.totalorder %s26, 0
      %p74 = por %p72, %p73
      %s76 = sadd.s32 %s75, 1
      %p79 = scmp.eq.s32.totalorder %s20, 1
      %p80 = scmp.ne.s32.totalorder %s75, %s77
      %p81 = scmp.eq.s32.totalorder %s20, 0
      %p82 = por %p80, %p81
      %p83 = scmp.ne.s32.totalorder %s75, %s77
      %p84 = scmp.eq.s32.totalorder %s25, 1
      %p85 = por %p83, %p84
      %p86 = scmp.ne.s32.totalorder %s77, %s78
      %p87 = scmp.eq.s32.totalorder %s25, 0
      %p88 = por %p86, %p87
      %p89 = scmp.ne.s32.totalorder %s77, %s78
      %p90 = scmp.eq.s32.totalorder %s26, 1
      %p91 = por %p89, %p90
      %p93 = scmp.ne.s32.totalorder %s78, %s92
      %p94 = scmp.eq.s32.totalorder %s26, 0
      %p95 = por %p93, %p94
      %s97 = sadd.s32 %s96, 1
      %p100 = scmp.eq.s32.totalorder %s20, 1
      %p101 = scmp.ne.s32.totalorder %s96, %s98
      %p102 = scmp.eq.s32.totalorder %s20, 0
      %p103 = por %p101, %p102
      %p104 = scmp.ne.s32.totalorder %s96, %s98
      %p105 = scmp.eq.s32.totalorder %s25, 1
      %p106 = por %p104, %p105
      %p107 = scmp.ne.s32.totalorder %s98, %s99
      %p108 = scmp.eq.s32.totalorder %s25, 0
      %p109 = por %p107, %p108
      %p110 = scmp.ne.s32.totalorder %s98, %s99
      %p111 = scmp.eq.s32.totalorder %s26, 1
      %p112 = por %p110, %p111
      %p114 = scmp.ne.s32.totalorder %s99, %s113
      %p115 = scmp.eq.s32.totalorder %s26, 0
      %p116 = por %p114, %p115
      %s118 = sadd.s32 %s117, 1
      %p121 = scmp.eq.s32.totalorder %s20, 1
      %p122 = scmp.ne.s32.totalorder %s117, %s119
      %p123 = scmp.eq.s32.totalorder %s20, 0
      %p124 = por %p122, %p123
      %p125 = scmp.ne.s32.totalorder %s117, %s119
      %p126 = scmp.eq.s32.totalorder %s25, 1
      %p127 = por %p125, %p126
      %p128 = scmp.ne.s32.totalorder %s119, %s120
      %p129 = scmp.eq.s32.totalorder %s25, 0
      %p130 = por %p128, %p129
      %p131 = scmp.ne.s32.totalorder %s119, %s120
      %p132 = scmp.eq.s32.totalorder %s26, 1
      %p133 = por %p131, %p132
      %p135 = scmp.ne.s32.totalorder %s120, %s134
      %p136 = scmp.eq.s32.totalorder %s26, 0
      %p137 = por %p135, %p136
      %s139 = sadd.s32 %s138, 1
      %p142 = scmp.eq.s32.totalorder %s20, 1
      %p143 = scmp.ne.s32.totalorder %s138, %s140
      %p144 = scmp.eq.s32.totalorder %s20, 0
      %p145 = por %p143, %p144
      %p146 = scmp.ne.s32.totalorder %s138, %s140
      %p147 = scmp.eq.s32.totalorder %s25, 1
      %p148 = por %p146, %p147
      %p149 = scmp.ne.s32.totalorder %s140, %s141
      %p150 = scmp.eq.s32.totalorder %s25, 0
      %p151 = por %p149, %p150
      %p152 = scmp.ne.s32.totalorder %s140, %s141
      %p153 = scmp.eq.s32.totalorder %s26, 1
      %p154 = por %p152, %p153
      %p156 = scmp.ne.s32.totalorder %s141, %s155
      %p157 = scmp.eq.s32.totalorder %s26, 0
      %p158 = por %p156, %p157
      %s160 = sadd.s32 %s159, 1
      %p163 = scmp.eq.s32.totalorder %s20, 1
      %p164 = scmp.ne.s32.totalorder %s159, %s161
      %p165 = scmp.eq.s32.totalorder %s20, 0
      %p166 = por %p164, %p165
      %p167 = scmp.ne.s32.totalorder %s159, %s161
      %p168 = scmp.eq.s32.totalorder %s25, 1
      %p169 = por %p167, %p168
      %p170 = scmp.ne.s32.totalorder %s161, %s162
      %p171 = scmp.eq.s32.totalorder %s25, 0
      %p172 = por %p170, %p171
      %p173 = scmp.ne.s32.totalorder %s161, %s162
      %p174 = scmp.eq.s32.totalorder %s26, 1
      %p175 = por %p173, %p174
      %p177 = scmp.ne.s32.totalorder %s162, %s176
      %p178 = scmp.eq.s32.totalorder %s26, 0
      %p179 = por %p177, %p178
      %s181 = sadd.s32 %s180, 1
      %p184 = scmp.eq.s32.totalorder %s20, 1
      %p185 = scmp.ne.s32.totalorder %s180, %s182
      %p186 = scmp.eq.s32.totalorder %s20, 0
      %p187 = por %p185, %p186
      %p188 = scmp.ne.s32.totalorder %s180, %s182
      %p189 = scmp.eq.s32.totalorder %s25, 1
      %p190 = por %p188, %p189
      %p191 = scmp.ne.s32.totalorder %s182, %s183
      %p192 = scmp.eq.s32.totalorder %s25, 0
      %p193 = por %p191, %p192
      %p194 = scmp.ne.s32.totalorder %s182, %s183
      %p195 = scmp.eq.s32.totalorder %s26, 1
      %p196 = por %p194, %p195
      %p198 = scmp.ne.s32.totalorder %s183, %s197
      %p199 = scmp.eq.s32.totalorder %s26, 0
      %p200 = por %p198, %p199
      %s202 = sadd.s32 %s201, 1
      %p205 = scmp.eq.s32.totalorder %s20, 1
      %p206 = scmp.ne.s32.totalorder %s201, %s203
      %p207 = scmp.eq.s32.totalorder %s20, 0
      %p208 = por %p206, %p207
      %p209 = scmp.ne.s32.totalorder %s201, %s203
      %p210 = scmp.eq.s32.totalorder %s25, 1
      %p211 = por %p209, %p210
      %p212 = scmp.ne.s32.totalorder %s203, %s204
      %p213 = scmp.eq.s32.totalorder %s25, 0
      %p214 = por %p212, %p213
      %p215 = scmp.ne.s32.totalorder %s203, %s204
      %p216 = scmp.eq.s32.totalorder %s26, 1
      %p217 = por %p215, %p216
      %p219 = scmp.ne.s32.totalorder %s204, %s218
      %p220 = scmp.eq.s32.totalorder %s26, 0
      %p221 = por %p219, %p220
      %s223 = sadd.s32 %s222, 1
      %p226 = scmp.eq.s32.totalorder %s20, 1
      %p227 = scmp.ne.s32.totalorder %s222, %s224
      %p228 = scmp.eq.s32.totalorder %s20, 0
      %p229 = por %p227, %p228
      %p230 = scmp.ne.s32.totalorder %s222, %s224
      %p231 = scmp.eq.s32.totalorder %s25, 1
      %p232 = por %p230, %p231
      %p233 = scmp.ne.s32.totalorder %s224, %s225
      %p234 = scmp.eq.s32.totalorder %s25, 0
      %p235 = por %p233, %p234
      %p236 = scmp.ne.s32.totalorder %s224, %s225
      %p237 = scmp.eq.s32.totalorder %s26, 1
      %p238 = por %p236, %p237
      %p240 = scmp.ne.s32.totalorder %s225, %s239
      %p241 = scmp.eq.s32.totalorder %s26, 0
      %p242 = por %p240, %p241
      %s244 = sadd.s32 %s243, 1
      %p247 = scmp.eq.s32.totalorder %s20, 1
      %p248 = scmp.ne.s32.totalorder %s243, %s245
      %p249 = scmp.eq.s32.totalorder %s20, 0
      %p250 = por %p248, %p249
      %p251 = scmp.ne.s32.totalorder %s243, %s245
      %p252 = scmp.eq.s32.totalorder %s25, 1
      %p253 = por %p251, %p252
      %p254 = scmp.ne.s32.totalorder %s245, %s246
      %p255 = scmp.eq.s32.totalorder %s25, 0
      %p256 = por %p254, %p255
      %p257 = scmp.ne.s32.totalorder %s245, %s246
      %p258 = scmp.eq.s32.totalorder %s26, 1
      %p259 = por %p257, %p258
      %p261 = scmp.ne.s32.totalorder %s246, %s260
      %p262 = scmp.eq.s32.totalorder %s26, 0
      %p263 = por %p261, %p262
      %s264 = ssub.s32 %s20, %s27
      %p265 = scmp.eq.s32.totalorder %s264, 0
      %s267 = sadd.s32 %s266, 1
      %s268 = scalar_select %p265, %s266, %s267
      %p271 = pneg %p265
      %p272 = scmp.eq.s32.totalorder %s20, 1
      %p273 = por %p271, %p272
      %p274 = scmp.ne.s32.totalorder %s266, %s269
      %p275 = scmp.eq.s32.totalorder %s20, 0
      %p276 = por %p274, %p275
      %p277 = scmp.ne.s32.totalorder %s266, %s269
      %p278 = scmp.eq.s32.totalorder %s25, 1
      %p279 = por %p277, %p278
      %p280 = scmp.ne.s32.totalorder %s269, %s270
      %p281 = scmp.eq.s32.totalorder %s25, 0
      %p282 = por %p280, %p281
      %p283 = scmp.ne.s32.totalorder %s269, %s270
      %p284 = scmp.eq.s32.totalorder %s26, 1
      %p285 = por %p283, %p284
      %p287 = scmp.ne.s32.totalorder %s270, %s286
      %p288 = scmp.eq.s32.totalorder %s26, 0
      %p289 = por %p287, %p288
      %p290 = scmp.le.s32.totalorder 1, %s20
      %p291 = scmp.lt.s32.totalorder %s20, 3
      %p292 = pnand %p290, %p291
      %p293 = pneg %p292
      // Predicated region
      $region9: #{dqn_forward.1} parent=5 // pred_check
        _
      $region10: #{dqn_forward.1} parent=5 // pred_check_branch
        %295 = sbr.rel (%p292) target = $region12
      $region11: #{dqn_forward.1} parent=5 // pred_region
        %s296 = ssub.s32 %s20, 1
        // Predicated region
        $region13: #{dqn_forward.1} parent=11 // pred_check
          %p297 = pneg %p67
        $region14: #{dqn_forward.1} parent=11 // pred_check_branch
          %299 = sbr.rel (%p297) target = $region16
        $region15: #{dqn_forward.1} parent=11 // pred_region
          _
        $region16: #{dqn_forward.1} parent=11 // pred_fallthru
          _
        // Predicated region
        $region17: #{dqn_forward.1} parent=11 // pred_check
          %p300 = pneg %p88
        $region18: #{dqn_forward.1} parent=11 // pred_check_branch
          %302 = sbr.rel (%p300) target = $region20
        $region19: #{dqn_forward.1} parent=11 // pred_region
          _
        $region20: #{dqn_forward.1} parent=11 // pred_fallthru
          _
        // Predicated region
        $region21: #{dqn_forward.1} parent=11 // pred_check
          %p303 = pneg %p109
        $region22: #{dqn_forward.1} parent=11 // pred_check_branch
          %305 = sbr.rel (%p303) target = $region24
        $region23: #{dqn_forward.1} parent=11 // pred_region
          %s307 = ssub.s32 18432, 18432
          %308 = vsyncadd [#allocation6], %s307
          %s309 = sshll.u32 [#allocation5], 4
          %s310 = int_to_ptr.vmem [resolvable:$true] %s309
          %315 = dma.hbm_to_vmem [thread:$0]  %s3, 18432, %s310, [#allocation6], 128, 128, 8
        $region24: #{dqn_forward.1} parent=11 // pred_fallthru
          _
        // Predicated region
        $region25: #{dqn_forward.1} parent=11 // pred_check
          %p316 = pneg %p130
        $region26: #{dqn_forward.1} parent=11 // pred_check_branch
          %318 = sbr.rel (%p316) target = $region28
        $region27: #{dqn_forward.1} parent=11 // pred_region
          _
        $region28: #{dqn_forward.1} parent=11 // pred_fallthru
          _
        // Predicated region
        $region29: #{dqn_forward.1} parent=11 // pred_check
          %p319 = pneg %p151
        $region30: #{dqn_forward.1} parent=11 // pred_check_branch
          %321 = sbr.rel (%p319) target = $region32
        $region31: #{dqn_forward.1} parent=11 // pred_region
          %s323 = ssub.s32 18432, 18432
          %324 = vsyncadd [#allocation8], %s323
          %s325 = sshll.u32 [#allocation7], 4
          %s326 = int_to_ptr.vmem [resolvable:$true] %s325
          %331 = dma.hbm_to_vmem [thread:$0]  %s5, 18432, %s326, [#allocation8], 128, 128, 8
        $region32: #{dqn_forward.1} parent=11 // pred_fallthru
          _
        // Predicated region
        $region33: #{dqn_forward.1} parent=11 // pred_check
          %p332 = pneg %p172
        $region34: #{dqn_forward.1} parent=11 // pred_check_branch
          %334 = sbr.rel (%p332) target = $region36
        $region35: #{dqn_forward.1} parent=11 // pred_region
          _
        $region36: #{dqn_forward.1} parent=11 // pred_fallthru
          _
        // Predicated region
        $region37: #{dqn_forward.1} parent=11 // pred_check
          %p335 = pneg %p193
        $region38: #{dqn_forward.1} parent=11 // pred_check_branch
          %337 = sbr.rel (%p335) target = $region40
        $region39: #{dqn_forward.1} parent=11 // pred_region
          %s339 = ssub.s32 32768, 32768
          %340 = vsyncadd [#allocation8], %s339
          %s341 = sshll.u32 [#allocation9], 4
          %s342 = int_to_ptr.vmem [resolvable:$true] %s341
          %347 = dma.hbm_to_vmem [thread:$0]  %s7, 32768, %s342, [#allocation8], 512, 512, 32
        $region40: #{dqn_forward.1} parent=11 // pred_fallthru
          _
        // Predicated region
        $region41: #{dqn_forward.1} parent=11 // pred_check
          %p348 = pneg %p214
        $region42: #{dqn_forward.1} parent=11 // pred_check_branch
          %350 = sbr.rel (%p348) target = $region44
        $region43: #{dqn_forward.1} parent=11 // pred_region
          _
        $region44: #{dqn_forward.1} parent=11 // pred_fallthru
          _
        // Predicated region
        $region45: #{dqn_forward.1} parent=11 // pred_check
          %p351 = pneg %p235
        $region46: #{dqn_forward.1} parent=11 // pred_check_branch
          %353 = sbr.rel (%p351) target = $region48
        $region47: #{dqn_forward.1} parent=11 // pred_region
          %s355 = ssub.s32 8192, 8192
          %356 = vsyncadd [#allocation11], %s355
          %s357 = sshll.u32 [#allocation10], 4
          %s358 = int_to_ptr.vmem [resolvable:$true] %s357
          %363 = dma.hbm_to_vmem [thread:$0]  %s9, 8192, %s358, [#allocation11], 128, 128, 8
        $region48: #{dqn_forward.1} parent=11 // pred_fallthru
          _
        // Predicated region
        $region49: #{dqn_forward.1} parent=11 // pred_check
          %p364 = pneg %p256
        $region50: #{dqn_forward.1} parent=11 // pred_check_branch
          %366 = sbr.rel (%p364) target = $region52
        $region51: #{dqn_forward.1} parent=11 // pred_region
          _
        $region52: #{dqn_forward.1} parent=11 // pred_fallthru
          _
      $region12: #{dqn_forward.1} parent=5 // pred_fallthru
        _
      %p367 = scmp.lt.s32.totalorder %s20, 2
      // Predicated region
      $region53: #{dqn_forward.1} parent=5 // pred_check
        %p368 = pneg %p367
      $region54: #{dqn_forward.1} parent=5 // pred_check_branch
        %370 = sbr.rel (%p368) target = $region56
      $region55: #{dqn_forward.1} parent=5 // pred_region
        // Predicated region
        $region57: #{dqn_forward.1} parent=55 // pred_check
          %p371 = pneg %p40
        $region58: #{dqn_forward.1} parent=55 // pred_check_branch
          %373 = sbr.rel (%p371) target = $region60
        $region59: #{dqn_forward.1} parent=55 // pred_region
          %p374 = scmp.lt.s32.totalorder %s20, 1
          %s375 = scalar_select %p374, %s20, 1
          %s376 = smul.addr %s375, 32
          %s377 = smul.addr %s376, 8
          %s378 = scalar_lea.vmem %s0, %s377
        $region60: #{dqn_forward.1} parent=55 // pred_fallthru
          _
      $region56: #{dqn_forward.1} parent=5 // pred_fallthru
        _
      %p379 = scmp.le.s32.totalorder 1, %s20
      %p380 = scmp.lt.s32.totalorder %s20, 3
      %p381 = pnand %p379, %p380
      %p382 = pneg %p381
      // Predicated region
      $region61: #{dqn_forward.1} parent=5 // pred_check
        _
      $region62: #{dqn_forward.1} parent=5 // pred_check_branch
        %384 = sbr.rel (%p381) target = $region64
      $region63: #{dqn_forward.1} parent=5 // pred_region
        %s385 = ssub.s32 %s20, 1
        // Predicated region
        $region65: #{dqn_forward.1} parent=63 // pred_check
          %p386 = pneg %p109
        $region66: #{dqn_forward.1} parent=63 // pred_check_branch
          %388 = sbr.rel (%p386) target = $region68
        $region67: #{dqn_forward.1} parent=63 // pred_region
          %389 = dma.done [#allocation6], 18432
        $region68: #{dqn_forward.1} parent=63 // pred_fallthru
          _
        // Predicated region
        $region69: #{dqn_forward.1} parent=63 // pred_check
          %p390 = pneg %p151
        $region70: #{dqn_forward.1} parent=63 // pred_check_branch
          %392 = sbr.rel (%p390) target = $region72
        $region71: #{dqn_forward.1} parent=63 // pred_region
          %393 = dma.done [#allocation8], 18432
        $region72: #{dqn_forward.1} parent=63 // pred_fallthru
          _
        // Predicated region
        $region73: #{dqn_forward.1} parent=63 // pred_check
          %p394 = pneg %p193
        $region74: #{dqn_forward.1} parent=63 // pred_check_branch
          %396 = sbr.rel (%p394) target = $region76
        $region75: #{dqn_forward.1} parent=63 // pred_region
          %397 = dma.done [#allocation8], 32768
        $region76: #{dqn_forward.1} parent=63 // pred_fallthru
          _
        // Predicated region
        $region77: #{dqn_forward.1} parent=63 // pred_check
          %p398 = pneg %p235
        $region78: #{dqn_forward.1} parent=63 // pred_check_branch
          %400 = sbr.rel (%p398) target = $region80
        $region79: #{dqn_forward.1} parent=63 // pred_region
          %401 = dma.done [#allocation11], 8192
        $region80: #{dqn_forward.1} parent=63 // pred_fallthru
          _
        %p402 = scmp.lt.s32.totalorder %s25, 1
        %s403 = scalar_select %p402, %s25, 1
        %s404 = smul.addr %s403, 32
        %s405 = smul.addr %s404, 8
        %s406 = scalar_lea.vmem %s0, %s405
        %p407 = pneg %p46
        %p408 = pneg %p43
        %p409 = pneg %p67
        %p410 = pneg %p64
        %p411 = pneg %p88
        %p412 = pneg %p85
        %p413 = pneg %p109
        %p414 = pneg %p106
        %p415 = pneg %p130
        %p416 = pneg %p127
        %p417 = pneg %p151
        %p418 = pneg %p148
        %p419 = pneg %p172
        %p420 = pneg %p169
        %p421 = pneg %p193
        %p422 = pneg %p190
        %p423 = pneg %p214
        %p424 = pneg %p211
        %p425 = pneg %p235
        %p426 = pneg %p232
        %p427 = pneg %p256
        %p428 = pneg %p253
        %p429 = pneg %p282
        %p430 = pneg %p279
        %p431 = scmp.lt.s32.totalorder %s25, 1
        %s432 = scalar_select %p431, %s25, 1
        %s433 = scalar_lea.vmem %s11, %s432
        %p434 = scmp.lt.s32.totalorder %s25, 1
        %s435 = scalar_select %p434, %s25, 1
        %s436 = smul.addr %s435, 32
        %s437 = smul.addr %s436, 8
        %s438 = scalar_lea.vmem %s0, %s437
        %p439 = scmp.lt.s32.totalorder %s25, 1
        %s440 = scalar_select %p439, %s25, 1
        %s441 = scalar_lea.vmem %s11, %s440
        %v442 = vld [vmem:[%s438] sm:$0xff]
        %v443 = vld [vmem:[%s438 + $0x8] sm:$0xff]
        %v444 = vld [vmem:[%s438 + $0x10] sm:$0xff]
        %v445 = vld [vmem:[%s438 + $0x18] sm:$0xff]
        %v446 = vld [vmem:[%s438 + $0x20] sm:$0xff]
        %v447 = vld [vmem:[%s438 + $0x28] sm:$0xff]
        %v448 = vld [vmem:[%s438 + $0x30] sm:$0xff]
        %v449 = vld [vmem:[%s438 + $0x38] sm:$0xff]
        %v450 = vld [vmem:[%s438 + $0x40] sm:$0xff]
        %v451 = vld [vmem:[%s438 + $0x48] sm:$0xff]
        %v452 = vld [vmem:[%s438 + $0x50] sm:$0xff]
        %v453 = vld [vmem:[%s438 + $0x58] sm:$0xff]
        %v454 = vld [vmem:[%s438 + $0x60] sm:$0xff]
        %v455 = vld [vmem:[%s438 + $0x68] sm:$0xff]
        %v456 = vld [vmem:[%s438 + $0x70] sm:$0xff]
        %v457 = vld [vmem:[%s438 + $0x78] sm:$0xff]
        %v458 = vld [vmem:[%s438 + $0x80] sm:$0xff]
        %v459 = vld [vmem:[%s438 + $0x88] sm:$0xff]
        %v460 = vld [vmem:[%s438 + $0x90] sm:$0xff]
        %v461 = vld [vmem:[%s438 + $0x98] sm:$0xff]
        %v462 = vld [vmem:[%s438 + $0xa0] sm:$0xff]
        %v463 = vld [vmem:[%s438 + $0xa8] sm:$0xff]
        %v464 = vld [vmem:[%s438 + $0xb0] sm:$0xff]
        %v465 = vld [vmem:[%s438 + $0xb8] sm:$0xff]
        %v466 = vld [vmem:[%s438 + $0xc0] sm:$0xff]
        %v467 = vld [vmem:[%s438 + $0xc8] sm:$0xff]
        %v468 = vld [vmem:[%s438 + $0xd0] sm:$0xff]
        %v469 = vld [vmem:[%s438 + $0xd8] sm:$0xff]
        %v470 = vld [vmem:[%s438 + $0xe0] sm:$0xff]
        %v471 = vld [vmem:[%s438 + $0xe8] sm:$0xff]
        %v472 = vld [vmem:[%s438 + $0xf0] sm:$0xff]
        %v473 = vld [vmem:[%s438 + $0xf8] sm:$0xff]
        %474 = vst [vmem:[#allocation2] sm:$0xff] 0.0
        %475 = vst [vmem:[#allocation2 + $0x8] sm:$0xff] 0.0
        %476 = vst [vmem:[#allocation2 + $0x10] sm:$0x3] 0.0
        %s477 = scalar_lea.vmem [#allocation2], 408
        %478 = vst [vmem:[%s477] sm:$0xff] 0.0
        %479 = vst [vmem:[%s477 + $0x8] sm:$0xff] 0.0
        %480 = vst [vmem:[%s477 + $0x10] sm:$0x3] 0.0
        %481 = vst [vmem:[#allocation2] sm:$0x1] 0.0
        %482 = vst [vmem:[#allocation2 + $0x18] sm:$0x1] 0.0
        %483 = vst [vmem:[#allocation2 + $0x30] sm:$0x1] 0.0
        %484 = vst [vmem:[#allocation2 + $0x48] sm:$0x1] 0.0
        %485 = vst [vmem:[#allocation2 + $0x60] sm:$0x1] 0.0
        %486 = vst [vmem:[#allocation2 + $0x78] sm:$0x1] 0.0
        %487 = vst [vmem:[#allocation2 + $0x90] sm:$0x1] 0.0
        %488 = vst [vmem:[#allocation2 + $0xa8] sm:$0x1] 0.0
        %489 = vst [vmem:[#allocation2 + $0xc0] sm:$0x1] 0.0
        %490 = vst [vmem:[#allocation2 + $0xd8] sm:$0x1] 0.0
        %491 = vst [vmem:[#allocation2 + $0xf0] sm:$0x1] 0.0
        %492 = vst [vmem:[#allocation2 + $0x108] sm:$0x1] 0.0
        %493 = vst [vmem:[#allocation2 + $0x120] sm:$0x1] 0.0
        %494 = vst [vmem:[#allocation2 + $0x138] sm:$0x1] 0.0
        %495 = vst [vmem:[#allocation2 + $0x150] sm:$0x1] 0.0
        %496 = vst [vmem:[#allocation2 + $0x168] sm:$0x1] 0.0
        %497 = vst [vmem:[#allocation2 + $0x180] sm:$0x1] 0.0
        %498 = vst [vmem:[#allocation2 + $0x198] sm:$0x1] 0.0
        %499 = vst [vmem:[#allocation2 + $0x11] sm:$0x1] 0.0
        %500 = vst [vmem:[#allocation2 + $0x29] sm:$0x1] 0.0
        %501 = vst [vmem:[#allocation2 + $0x41] sm:$0x1] 0.0
        %502 = vst [vmem:[#allocation2 + $0x59] sm:$0x1] 0.0
        %503 = vst [vmem:[#allocation2 + $0x71] sm:$0x1] 0.0
        %504 = vst [vmem:[#allocation2 + $0x89] sm:$0x1] 0.0
        %505 = vst [vmem:[#allocation2 + $0xa1] sm:$0x1] 0.0
        %506 = vst [vmem:[#allocation2 + $0xb9] sm:$0x1] 0.0
        %507 = vst [vmem:[#allocation2 + $0xd1] sm:$0x1] 0.0
        %508 = vst [vmem:[#allocation2 + $0xe9] sm:$0x1] 0.0
        %509 = vst [vmem:[#allocation2 + $0x101] sm:$0x1] 0.0
        %510 = vst [vmem:[#allocation2 + $0x119] sm:$0x1] 0.0
        %511 = vst [vmem:[#allocation2 + $0x131] sm:$0x1] 0.0
        %512 = vst [vmem:[#allocation2 + $0x149] sm:$0x1] 0.0
        %513 = vst [vmem:[#allocation2 + $0x161] sm:$0x1] 0.0
        %514 = vst [vmem:[#allocation2 + $0x179] sm:$0x1] 0.0
        %515 = vst [vmem:[#allocation2 + $0x191] sm:$0x1] 0.0
        %516 = vst [vmem:[#allocation2 + $0x1a9] sm:$0x1] 0.0
        %s517 = scalar_lea.vmem [#allocation2], 24
        %518 = vst [vmem:[%s517 + $0x1] sm:$0xff] %v442
        %519 = vst [vmem:[%s517 + $0x9] sm:$0xff] %v443
        %520 = vst [vmem:[%s517 + $0x19] sm:$0xff] %v444
        %521 = vst [vmem:[%s517 + $0x21] sm:$0xff] %v445
        %522 = vst [vmem:[%s517 + $0x31] sm:$0xff] %v446
        %523 = vst [vmem:[%s517 + $0x39] sm:$0xff] %v447
        %524 = vst [vmem:[%s517 + $0x49] sm:$0xff] %v448
        %525 = vst [vmem:[%s517 + $0x51] sm:$0xff] %v449
        %526 = vst [vmem:[%s517 + $0x61] sm:$0xff] %v450
        %527 = vst [vmem:[%s517 + $0x69] sm:$0xff] %v451
        %528 = vst [vmem:[%s517 + $0x79] sm:$0xff] %v452
        %529 = vst [vmem:[%s517 + $0x81] sm:$0xff] %v453
        %530 = vst [vmem:[%s517 + $0x91] sm:$0xff] %v454
        %531 = vst [vmem:[%s517 + $0x99] sm:$0xff] %v455
        %532 = vst [vmem:[%s517 + $0xa9] sm:$0xff] %v456
        %533 = vst [vmem:[%s517 + $0xb1] sm:$0xff] %v457
        %534 = vst [vmem:[%s517 + $0xc1] sm:$0xff] %v458
        %535 = vst [vmem:[%s517 + $0xc9] sm:$0xff] %v459
        %536 = vst [vmem:[%s517 + $0xd9] sm:$0xff] %v460
        %537 = vst [vmem:[%s517 + $0xe1] sm:$0xff] %v461
        %538 = vst [vmem:[%s517 + $0xf1] sm:$0xff] %v462
        %539 = vst [vmem:[%s517 + $0xf9] sm:$0xff] %v463
        %540 = vst [vmem:[%s517 + $0x109] sm:$0xff] %v464
        %541 = vst [vmem:[%s517 + $0x111] sm:$0xff] %v465
        %542 = vst [vmem:[%s517 + $0x121] sm:$0xff] %v466
        %543 = vst [vmem:[%s517 + $0x129] sm:$0xff] %v467
        %544 = vst [vmem:[%s517 + $0x139] sm:$0xff] %v468
        %545 = vst [vmem:[%s517 + $0x141] sm:$0xff] %v469
        %546 = vst [vmem:[%s517 + $0x151] sm:$0xff] %v470
        %547 = vst [vmem:[%s517 + $0x159] sm:$0xff] %v471
        %548 = vst [vmem:[%s517 + $0x169] sm:$0xff] %v472
        %549 = vst [vmem:[%s517 + $0x171] sm:$0xff] %v473
        %v550 = vld [vmem:[#allocation2] sm:$0xff]
        %v551 = vld [vmem:[#allocation2 + $0x8] sm:$0xff]
        %v552 = vld [vmem:[#allocation2 + $0x10] sm:$0x3]
        %v553 = vld [vmem:[#allocation2 + $0x18] sm:$0xff]
        %v554 = vld [vmem:[#allocation2 + $0x20] sm:$0xff]
        %v555 = vld [vmem:[#allocation2 + $0x28] sm:$0x3]
        %v556 = vld [vmem:[#allocation2 + $0x30] sm:$0xff]
        %v557 = vld [vmem:[#allocation2 + $0x38] sm:$0xff]
        %v558 = vld [vmem:[#allocation2 + $0x40] sm:$0x3]
        %v559 = vld [vmem:[#allocation2 + $0x48] sm:$0xff]
        %v560 = vld [vmem:[#allocation2 + $0x50] sm:$0xff]
        %v561 = vld [vmem:[#allocation2 + $0x58] sm:$0x3]
        %v562 = vld [vmem:[#allocation2 + $0x60] sm:$0xff]
        %v563 = vld [vmem:[#allocation2 + $0x68] sm:$0xff]
        %v564 = vld [vmem:[#allocation2 + $0x70] sm:$0x3]
        %v565 = vld [vmem:[#allocation2 + $0x78] sm:$0xff]
        %v566 = vld [vmem:[#allocation2 + $0x80] sm:$0xff]
        %v567 = vld [vmem:[#allocation2 + $0x88] sm:$0x3]
        %v568 = vld [vmem:[#allocation2 + $0x90] sm:$0xff]
        %v569 = vld [vmem:[#allocation2 + $0x98] sm:$0xff]
        %v570 = vld [vmem:[#allocation2 + $0xa0] sm:$0x3]
        %v571 = vld [vmem:[#allocation2 + $0xa8] sm:$0xff]
        %v572 = vld [vmem:[#allocation2 + $0xb0] sm:$0xff]
        %v573 = vld [vmem:[#allocation2 + $0xb8] sm:$0x3]
        %v574 = vld [vmem:[#allocation2 + $0xc0] sm:$0xff]
        %v575 = vld [vmem:[#allocation2 + $0xc8] sm:$0xff]
        %v576 = vld [vmem:[#allocation2 + $0xd0] sm:$0x3]
        %v577 = vld [vmem:[#allocation2 + $0xd8] sm:$0xff]
        %v578 = vld [vmem:[#allocation2 + $0xe0] sm:$0xff]
        %v579 = vld [vmem:[#allocation2 + $0xe8] sm:$0x3]
        %v580 = vld [vmem:[#allocation2 + $0xf0] sm:$0xff]
        %v581 = vld [vmem:[#allocation2 + $0xf8] sm:$0xff]
        %v582 = vld [vmem:[#allocation2 + $0x100] sm:$0x3]
        %v583 = vld [vmem:[#allocation2 + $0x108] sm:$0xff]
        %v584 = vld [vmem:[#allocation2 + $0x110] sm:$0xff]
        %v585 = vld [vmem:[#allocation2 + $0x118] sm:$0x3]
        %v586 = vld [vmem:[#allocation2 + $0x120] sm:$0xff]
        %v587 = vld [vmem:[#allocation2 + $0x128] sm:$0xff]
        %v588 = vld [vmem:[#allocation2 + $0x130] sm:$0x3]
        %v589 = vld [vmem:[#allocation2 + $0x138] sm:$0xff]
        %v590 = vld [vmem:[#allocation2 + $0x140] sm:$0xff]
        %v591 = vld [vmem:[#allocation2 + $0x148] sm:$0x3]
        %v592 = vld [vmem:[#allocation2 + $0x150] sm:$0xff]
        %v593 = vld [vmem:[#allocation2 + $0x158] sm:$0xff]
        %v594 = vld [vmem:[#allocation2 + $0x160] sm:$0x3]
        %v595 = vld [vmem:[#allocation2 + $0x168] sm:$0xff]
        %v596 = vld [vmem:[#allocation2 + $0x170] sm:$0xff]
        %v597 = vld [vmem:[#allocation2 + $0x178] sm:$0x3]
        %v598 = vld [vmem:[#allocation2 + $0x180] sm:$0xff]
        %v599 = vld [vmem:[#allocation2 + $0x188] sm:$0xff]
        %v600 = vld [vmem:[#allocation2 + $0x190] sm:$0x3]
        %v601 = vld [vmem:[#allocation2 + $0x198] sm:$0xff]
        %v602 = vld [vmem:[#allocation2 + $0x1a0] sm:$0xff]
        %v603 = vld [vmem:[#allocation2 + $0x1a8] sm:$0x3]
        %vm652 = vcmask 1046528
        %v653 = vrot.slane %v550, 1
        %v654 = vrot.slane %v551, 1
        %v655 = vsel %vm652, %v653, %v654
        %v656 = vrot.slane %v552, 1
        %v657 = vsel %vm652, %v654, %v656
        %v658 = vrot.slane %v553, 1
        %v659 = vrot.slane %v554, 1
        %v660 = vsel %vm652, %v658, %v659
        %v661 = vrot.slane %v555, 1
        %v662 = vsel %vm652, %v659, %v661
        %v663 = vrot.slane %v556, 1
        %v664 = vrot.slane %v557, 1
        %v665 = vsel %vm652, %v663, %v664
        %v666 = vrot.slane %v558, 1
        %v667 = vsel %vm652, %v664, %v666
        %v668 = vrot.slane %v559, 1
        %v669 = vrot.slane %v560, 1
        %v670 = vsel %vm652, %v668, %v669
        %v671 = vrot.slane %v561, 1
        %v672 = vsel %vm652, %v669, %v671
        %v673 = vrot.slane %v562, 1
        %v674 = vrot.slane %v563, 1
        %v675 = vsel %vm652, %v673, %v674
        %v676 = vrot.slane %v564, 1
        %v677 = vsel %vm652, %v674, %v676
        %v678 = vrot.slane %v565, 1
        %v679 = vrot.slane %v566, 1
        %v680 = vsel %vm652, %v678, %v679
        %v681 = vrot.slane %v567, 1
        %v682 = vsel %vm652, %v679, %v681
        %v683 = vrot.slane %v568, 1
        %v684 = vrot.slane %v569, 1
        %v685 = vsel %vm652, %v683, %v684
        %v686 = vrot.slane %v570, 1
        %v687 = vsel %vm652, %v684, %v686
        %v688 = vrot.slane %v571, 1
        %v689 = vrot.slane %v572, 1
        %v690 = vsel %vm652, %v688, %v689
        %v691 = vrot.slane %v573, 1
        %v692 = vsel %vm652, %v689, %v691
        %v693 = vrot.slane %v574, 1
        %v694 = vrot.slane %v575, 1
        %v695 = vsel %vm652, %v693, %v694
        %v696 = vrot.slane %v576, 1
        %v697 = vsel %vm652, %v694, %v696
        %v698 = vrot.slane %v577, 1
        %v699 = vrot.slane %v578, 1
        %v700 = vsel %vm652, %v698, %v699
        %v701 = vrot.slane %v579, 1
        %v702 = vsel %vm652, %v699, %v701
        %v703 = vrot.slane %v580, 1
        %v704 = vrot.slane %v581, 1
        %v705 = vsel %vm652, %v703, %v704
        %v706 = vrot.slane %v582, 1
        %v707 = vsel %vm652, %v704, %v706
        %v708 = vrot.slane %v583, 1
        %v709 = vrot.slane %v584, 1
        %v710 = vsel %vm652, %v708, %v709
        %v711 = vrot.slane %v585, 1
        %v712 = vsel %vm652, %v709, %v711
        %v713 = vrot.slane %v586, 1
        %v714 = vrot.slane %v587, 1
        %v715 = vsel %vm652, %v713, %v714
        %v716 = vrot.slane %v588, 1
        %v717 = vsel %vm652, %v714, %v716
        %v718 = vrot.slane %v589, 1
        %v719 = vrot.slane %v590, 1
        %v720 = vsel %vm652, %v718, %v719
        %v721 = vrot.slane %v591, 1
        %v722 = vsel %vm652, %v719, %v721
        %v723 = vrot.slane %v592, 1
        %v724 = vrot.slane %v593, 1
        %v725 = vsel %vm652, %v723, %v724
        %v726 = vrot.slane %v594, 1
        %v727 = vsel %vm652, %v724, %v726
        %v728 = vrot.slane %v595, 1
        %v729 = vrot.slane %v596, 1
        %v730 = vsel %vm652, %v728, %v729
        %v731 = vrot.slane %v597, 1
        %v732 = vsel %vm652, %v729, %v731
        %vm765 = vcmask 1045504
        %v766 = vrot.slane %v550, 2
        %v767 = vrot.slane %v551, 2
        %v768 = vsel %vm765, %v766, %v767
        %v769 = vrot.slane %v552, 2
        %v770 = vsel %vm765, %v767, %v769
        %v771 = vrot.slane %v553, 2
        %v772 = vrot.slane %v554, 2
        %v773 = vsel %vm765, %v771, %v772
        %v774 = vrot.slane %v555, 2
        %v775 = vsel %vm765, %v772, %v774
        %v776 = vrot.slane %v556, 2
        %v777 = vrot.slane %v557, 2
        %v778 = vsel %vm765, %v776, %v777
        %v779 = vrot.slane %v558, 2
        %v780 = vsel %vm765, %v777, %v779
        %v781 = vrot.slane %v559, 2
        %v782 = vrot.slane %v560, 2
        %v783 = vsel %vm765, %v781, %v782
        %v784 = vrot.slane %v561, 2
        %v785 = vsel %vm765, %v782, %v784
        %v786 = vrot.slane %v562, 2
        %v787 = vrot.slane %v563, 2
        %v788 = vsel %vm765, %v786, %v787
        %v789 = vrot.slane %v564, 2
        %v790 = vsel %vm765, %v787, %v789
        %v791 = vrot.slane %v565, 2
        %v792 = vrot.slane %v566, 2
        %v793 = vsel %vm765, %v791, %v792
        %v794 = vrot.slane %v567, 2
        %v795 = vsel %vm765, %v792, %v794
        %v796 = vrot.slane %v568, 2
        %v797 = vrot.slane %v569, 2
        %v798 = vsel %vm765, %v796, %v797
        %v799 = vrot.slane %v570, 2
        %v800 = vsel %vm765, %v797, %v799
        %v801 = vrot.slane %v571, 2
        %v802 = vrot.slane %v572, 2
        %v803 = vsel %vm765, %v801, %v802
        %v804 = vrot.slane %v573, 2
        %v805 = vsel %vm765, %v802, %v804
        %v806 = vrot.slane %v574, 2
        %v807 = vrot.slane %v575, 2
        %v808 = vsel %vm765, %v806, %v807
        %v809 = vrot.slane %v576, 2
        %v810 = vsel %vm765, %v807, %v809
        %v811 = vrot.slane %v577, 2
        %v812 = vrot.slane %v578, 2
        %v813 = vsel %vm765, %v811, %v812
        %v814 = vrot.slane %v579, 2
        %v815 = vsel %vm765, %v812, %v814
        %v816 = vrot.slane %v580, 2
        %v817 = vrot.slane %v581, 2
        %v818 = vsel %vm765, %v816, %v817
        %v819 = vrot.slane %v582, 2
        %v820 = vsel %vm765, %v817, %v819
        %v821 = vrot.slane %v583, 2
        %v822 = vrot.slane %v584, 2
        %v823 = vsel %vm765, %v821, %v822
        %v824 = vrot.slane %v585, 2
        %v825 = vsel %vm765, %v822, %v824
        %v826 = vrot.slane %v586, 2
        %v827 = vrot.slane %v587, 2
        %v828 = vsel %vm765, %v826, %v827
        %v829 = vrot.slane %v588, 2
        %v830 = vsel %vm765, %v827, %v829
        %v831 = vrot.slane %v589, 2
        %v832 = vrot.slane %v590, 2
        %v833 = vsel %vm765, %v831, %v832
        %v834 = vrot.slane %v591, 2
        %v835 = vsel %vm765, %v832, %v834
        %v836 = vrot.slane %v592, 2
        %v837 = vrot.slane %v593, 2
        %v838 = vsel %vm765, %v836, %v837
        %v839 = vrot.slane %v594, 2
        %v840 = vsel %vm765, %v837, %v839
        %v841 = vrot.slane %v595, 2
        %v842 = vrot.slane %v596, 2
        %v843 = vsel %vm765, %v841, %v842
        %v844 = vrot.slane %v597, 2
        %v845 = vsel %vm765, %v842, %v844
        %v881 = vrot.slane %v598, 1
        %v882 = vrot.slane %v599, 1
        %v883 = vsel %vm652, %v881, %v882
        %v884 = vrot.slane %v600, 1
        %v885 = vsel %vm652, %v882, %v884
        %v888 = vrot.slane %v598, 2
        %v889 = vrot.slane %v599, 2
        %v890 = vsel %vm765, %v888, %v889
        %v891 = vrot.slane %v600, 2
        %v892 = vsel %vm765, %v889, %v891
        %v898 = vrot.slane %v601, 1
        %v899 = vrot.slane %v602, 1
        %v900 = vsel %vm652, %v898, %v899
        %v901 = vrot.slane %v603, 1
        %v902 = vsel %vm652, %v899, %v901
        %v905 = vrot.slane %v601, 2
        %v906 = vrot.slane %v602, 2
        %v907 = vsel %vm765, %v905, %v906
        %v908 = vrot.slane %v603, 2
        %v909 = vsel %vm765, %v906, %v908
        %v912 = vld [vmem:[%s1] sm:$0xff]
        %v913 = vld [vmem:[%s1 + $0x8] sm:$0xff]
        %v914 = vld [vmem:[%s1 + $0x10] sm:$0xff]
        %v915 = vld [vmem:[%s1 + $0x18] sm:$0xff]
        %v916 = vld [vmem:[%s1 + $0x20] sm:$0xff]
        %v917 = vld [vmem:[%s1 + $0x28] sm:$0xff]
        %v918 = vld [vmem:[%s1 + $0x30] sm:$0xff]
        %v919 = vld [vmem:[%s1 + $0x38] sm:$0xff]
        %v920 = vld [vmem:[%s1 + $0x40] sm:$0xff]
        %v921 = vld [vmem:[%s1 + $0x48] sm:$0xff]
        %v922 = vld [vmem:[%s1 + $0x50] sm:$0xff]
        %v923 = vld [vmem:[%s1 + $0x58] sm:$0xff]
        %v924 = vld [vmem:[%s1 + $0x60] sm:$0xff]
        %v925 = vld [vmem:[%s1 + $0x68] sm:$0xff]
        %v926 = vld [vmem:[%s1 + $0x70] sm:$0xff]
        %v927 = vld [vmem:[%s1 + $0x78] sm:$0xff]
        %v928 = vld [vmem:[%s1 + $0x80] sm:$0xff]
        %v929 = vld [vmem:[%s1 + $0x88] sm:$0xff]
        %v930 = vld [vmem:[%s1 + $0x90] sm:$0xff]
        %v931 = vld [vmem:[%s1 + $0x98] sm:$0xff]
        %v932 = vld [vmem:[%s1 + $0xa0] sm:$0xff]
        %v933 = vld [vmem:[%s1 + $0xa8] sm:$0xff]
        %v934 = vld [vmem:[%s1 + $0xb0] sm:$0xff]
        %v935 = vld [vmem:[%s1 + $0xb8] sm:$0xff]
        %v936 = vld [vmem:[%s1 + $0xc0] sm:$0xff]
        %v937 = vld [vmem:[%s1 + $0xc8] sm:$0xff]
        %v938 = vld [vmem:[%s1 + $0xd0] sm:$0xff]
        %v939 = vld [vmem:[%s1 + $0xd8] sm:$0xff]
        %v940 = vld [vmem:[%s1 + $0xe0] sm:$0xff]
        %v941 = vld [vmem:[%s1 + $0xe8] sm:$0xff]
        %v942 = vld [vmem:[%s1 + $0xf0] sm:$0xff]
        %v943 = vld [vmem:[%s1 + $0xf8] sm:$0xff]
        %v944 = vld [vmem:[%s1 + $0x100] sm:$0xff]
        %v945 = vld [vmem:[%s1 + $0x108] sm:$0xff]
        %v946 = vld [vmem:[%s1 + $0x110] sm:$0xff]
        %v947 = vld [vmem:[%s1 + $0x118] sm:$0xff]
        %v948 = vld [vmem:[%s1 + $0x120] sm:$0xff]
        %v949 = vld [vmem:[%s1 + $0x128] sm:$0xff]
        %v950 = vld [vmem:[%s1 + $0x130] sm:$0xff]
        %v951 = vld [vmem:[%s1 + $0x138] sm:$0xff]
        %v952 = vld [vmem:[%s1 + $0x140] sm:$0xff]
        %v953 = vld [vmem:[%s1 + $0x148] sm:$0xff]
        %v954 = vld [vmem:[%s1 + $0x150] sm:$0xff]
        %v955 = vld [vmem:[%s1 + $0x158] sm:$0xff]
        %v956 = vld [vmem:[%s1 + $0x160] sm:$0xff]
        %v957 = vld [vmem:[%s1 + $0x168] sm:$0xff]
        %v958 = vld [vmem:[%s1 + $0x170] sm:$0xff]
        %v959 = vld [vmem:[%s1 + $0x178] sm:$0xff]
        %v960 = vld [vmem:[%s1 + $0x180] sm:$0xff]
        %v961 = vld [vmem:[%s1 + $0x188] sm:$0xff]
        %v962 = vld [vmem:[%s1 + $0x190] sm:$0xff]
        %v963 = vld [vmem:[%s1 + $0x198] sm:$0xff]
        %v964 = vld [vmem:[%s1 + $0x1a0] sm:$0xff]
        %v965 = vld [vmem:[%s1 + $0x1a8] sm:$0xff]
        %v966 = vld [vmem:[%s1 + $0x1b0] sm:$0xff]
        %v967 = vld [vmem:[%s1 + $0x1b8] sm:$0xff]
        %v968 = vld [vmem:[%s1 + $0x1c0] sm:$0xff]
        %v969 = vld [vmem:[%s1 + $0x1c8] sm:$0xff]
        %v970 = vld [vmem:[%s1 + $0x1d0] sm:$0xff]
        %v971 = vld [vmem:[%s1 + $0x1d8] sm:$0xff]
        %v972 = vld [vmem:[%s1 + $0x1e0] sm:$0xff]
        %v973 = vld [vmem:[%s1 + $0x1e8] sm:$0xff]
        %v974 = vld [vmem:[%s1 + $0x1f0] sm:$0xff]
        %v975 = vld [vmem:[%s1 + $0x1f8] sm:$0xff]
        %v976 = vld [vmem:[%s1 + $0x200] sm:$0xff]
        %v977 = vld [vmem:[%s1 + $0x208] sm:$0xff]
        %v978 = vld [vmem:[%s1 + $0x210] sm:$0xff]
        %v979 = vld [vmem:[%s1 + $0x218] sm:$0xff]
        %v980 = vld [vmem:[%s1 + $0x220] sm:$0xff]
        %v981 = vld [vmem:[%s1 + $0x228] sm:$0xff]
        %v982 = vld [vmem:[%s1 + $0x230] sm:$0xff]
        %v983 = vld [vmem:[%s1 + $0x238] sm:$0xff]
        %v984 = vld [vmem:[%s1 + $0x240] sm:$0xff]
        %v985 = vld [vmem:[%s1 + $0x248] sm:$0xff]
        %v986 = vld [vmem:[%s1 + $0x250] sm:$0xff]
        %v987 = vld [vmem:[%s1 + $0x258] sm:$0xff]
        %v988 = vld [vmem:[%s1 + $0x260] sm:$0xff]
        %v989 = vld [vmem:[%s1 + $0x268] sm:$0xff]
        %v990 = vld [vmem:[%s1 + $0x270] sm:$0xff]
        %v991 = vld [vmem:[%s1 + $0x278] sm:$0xff]
        %v992 = vld [vmem:[%s1 + $0x280] sm:$0xff]
        %v993 = vld [vmem:[%s1 + $0x288] sm:$0xff]
        %v994 = vld [vmem:[%s1 + $0x290] sm:$0xff]
        %v995 = vld [vmem:[%s1 + $0x298] sm:$0xff]
        %v996 = vld [vmem:[%s1 + $0x2a0] sm:$0xff]
        %v997 = vld [vmem:[%s1 + $0x2a8] sm:$0xff]
        %v998 = vld [vmem:[%s1 + $0x2b0] sm:$0xff]
        %v999 = vld [vmem:[%s1 + $0x2b8] sm:$0xff]
        %v1000 = vld [vmem:[%s1 + $0x2c0] sm:$0xff]
        %v1001 = vld [vmem:[%s1 + $0x2c8] sm:$0xff]
        %v1002 = vld [vmem:[%s1 + $0x2d0] sm:$0xff]
        %v1003 = vld [vmem:[%s1 + $0x2d8] sm:$0xff]
        %v1004 = vld [vmem:[%s1 + $0x2e0] sm:$0xff]
        %v1005 = vld [vmem:[%s1 + $0x2e8] sm:$0xff]
        %v1006 = vld [vmem:[%s1 + $0x2f0] sm:$0xff]
        %v1007 = vld [vmem:[%s1 + $0x2f8] sm:$0xff]
        %v1008 = vld [vmem:[%s1 + $0x300] sm:$0xff]
        %v1009 = vld [vmem:[%s1 + $0x308] sm:$0xff]
        %v1010 = vld [vmem:[%s1 + $0x310] sm:$0xff]
        %v1011 = vld [vmem:[%s1 + $0x318] sm:$0xff]
        %v1012 = vld [vmem:[%s1 + $0x320] sm:$0xff]
        %v1013 = vld [vmem:[%s1 + $0x328] sm:$0xff]
        %v1014 = vld [vmem:[%s1 + $0x330] sm:$0xff]
        %v1015 = vld [vmem:[%s1 + $0x338] sm:$0xff]
        %v1016 = vld [vmem:[%s1 + $0x340] sm:$0xff]
        %v1017 = vld [vmem:[%s1 + $0x348] sm:$0xff]
        %v1018 = vld [vmem:[%s1 + $0x350] sm:$0xff]
        %v1019 = vld [vmem:[%s1 + $0x358] sm:$0xff]
        %v1020 = vld [vmem:[%s1 + $0x360] sm:$0xff]
        %v1021 = vld [vmem:[%s1 + $0x368] sm:$0xff]
        %v1022 = vld [vmem:[%s1 + $0x370] sm:$0xff]
        %v1023 = vld [vmem:[%s1 + $0x378] sm:$0xff]
        %v1024 = vld [vmem:[%s1 + $0x380] sm:$0xff]
        %v1025 = vld [vmem:[%s1 + $0x388] sm:$0xff]
        %v1026 = vld [vmem:[%s1 + $0x390] sm:$0xff]
        %v1027 = vld [vmem:[%s1 + $0x398] sm:$0xff]
        %v1028 = vld [vmem:[%s1 + $0x3a0] sm:$0xff]
        %v1029 = vld [vmem:[%s1 + $0x3a8] sm:$0xff]
        %v1030 = vld [vmem:[%s1 + $0x3b0] sm:$0xff]
        %v1031 = vld [vmem:[%s1 + $0x3b8] sm:$0xff]
        %v1032 = vld [vmem:[%s1 + $0x3c0] sm:$0xff]
        %v1033 = vld [vmem:[%s1 + $0x3c8] sm:$0xff]
        %v1034 = vld [vmem:[%s1 + $0x3d0] sm:$0xff]
        %v1035 = vld [vmem:[%s1 + $0x3d8] sm:$0xff]
        %v1036 = vld [vmem:[%s1 + $0x3e0] sm:$0xff]
        %v1037 = vld [vmem:[%s1 + $0x3e8] sm:$0xff]
        %v1038 = vld [vmem:[%s1 + $0x3f0] sm:$0xff]
        %v1039 = vld [vmem:[%s1 + $0x3f8] sm:$0xff]
        %v1040 = vld [vmem:[%s1 + $0x400] sm:$0xff]
        %v1041 = vld [vmem:[%s1 + $0x408] sm:$0xff]
        %v1042 = vld [vmem:[%s1 + $0x410] sm:$0xff]
        %v1043 = vld [vmem:[%s1 + $0x418] sm:$0xff]
        %v1044 = vld [vmem:[%s1 + $0x420] sm:$0xff]
        %v1045 = vld [vmem:[%s1 + $0x428] sm:$0xff]
        %v1046 = vld [vmem:[%s1 + $0x430] sm:$0xff]
        %v1047 = vld [vmem:[%s1 + $0x438] sm:$0xff]
        %v1048 = vld [vmem:[%s1 + $0x440] sm:$0xff]
        %v1049 = vld [vmem:[%s1 + $0x448] sm:$0xff]
        %v1050 = vld [vmem:[%s1 + $0x450] sm:$0xff]
        %v1051 = vld [vmem:[%s1 + $0x458] sm:$0xff]
        %v1052 = vld [vmem:[%s1 + $0x460] sm:$0xff]
        %v1053 = vld [vmem:[%s1 + $0x468] sm:$0xff]
        %v1054 = vld [vmem:[%s1 + $0x470] sm:$0xff]
        %v1055 = vld [vmem:[%s1 + $0x478] sm:$0xff]
        %v1056 = vld [vmem:[%s2] sm:$0x1]
        %v1058 = vlaneseq
        %v1059 = vshrl.u32 %v1058, 7
        %v1060 = vsub.s32 0, %v1059
        %v1061 = vrot.slane %v1056, %v1060
        %1063 = vmatprep.subr.mxu0 0.0
        %1064 = vmatpush1.msra.mxu0 %v912
        %1065 = vmatprep.subr.mxu0 0.0
        %1066 = vmatpush1.msra.mxu0 %v913
        %1067 = vmatprep.subr.mxu0 0.0
        %1068 = vmatpush1.msra.mxu0 %v914
        %1069 = vmatprep.subr.mxu0 0.0
        %1070 = vmatpush1.msra.mxu0 %v915
        %1071 = vmatprep.subr.mxu0 0.0
        %1072 = vmatpush1.msra.mxu0 %v916
        %1073 = vmatprep.subr.mxu0 0.0
        %1074 = vmatpush1.msra.mxu0 %v917
        %1075 = vmatprep.subr.mxu0 0.0
        %1076 = vmatpush1.msra.mxu0 %v918
        %1077 = vmatprep.subr.mxu0 0.0
        %1078 = vmatpush1.msra.mxu0 %v919
        %1079 = vmatprep.subr.mxu0 0.0
        %1080 = vmatpush1.msra.mxu0 %v920
        %1081 = vmatprep.subr.mxu0 0.0
        %1082 = vmatpush1.msra.mxu0 %v921
        %1083 = vmatprep.subr.mxu0 0.0
        %1084 = vmatpush1.msra.mxu0 %v922
        %1085 = vmatprep.subr.mxu0 0.0
        %1086 = vmatpush1.msra.mxu0 %v923
        %1087 = vmatprep.subr.mxu0 0.0
        %1088 = vmatpush1.msra.mxu0 %v924
        %1089 = vmatprep.subr.mxu0 0.0
        %1090 = vmatpush1.msra.mxu0 %v925
        %1091 = vmatprep.subr.mxu0 0.0
        %1092 = vmatpush1.msra.mxu0 %v926
        %1093 = vmatprep.subr.mxu0 0.0
        %1094 = vmatpush1.msra.mxu0 %v927
        %1095 = vmatprep.subr.mxu0 0.0
        %1096 = vmatpush1.msra.mxu0 %v928
        %1097 = vmatprep.subr.mxu0 0.0
        %1098 = vmatpush1.msra.mxu0 %v929
        %1099 = vmatprep.subr.mxu0 0.0
        %1100 = vmatpush1.msra.mxu0 %v930
        %1101 = vmatprep.subr.mxu0 0.0
        %1102 = vmatpush1.msra.mxu0 %v931
        %1103 = vmatprep.subr.mxu0 0.0
        %1104 = vmatpush1.msra.mxu0 %v932
        %1105 = vmatprep.subr.mxu0 0.0
        %1106 = vmatpush1.msra.mxu0 %v933
        %1107 = vmatprep.subr.mxu0 0.0
        %1108 = vmatpush1.msra.mxu0 %v934
        %1109 = vmatprep.subr.mxu0 0.0
        %1110 = vmatpush1.msra.mxu0 %v935
        %1111 = vmatprep.subr.mxu0 0.0
        %1112 = vmatpush1.msra.mxu0 %v936
        %1113 = vmatprep.subr.mxu0 0.0
        %1114 = vmatpush1.msra.mxu0 %v937
        %1115 = vmatprep.subr.mxu0 0.0
        %1116 = vmatpush1.msra.mxu0 %v938
        %1117 = vmatprep.subr.mxu0 0.0
        %1118 = vmatpush1.msra.mxu0 %v939
        %1119 = vmatprep.subr.mxu0 0.0
        %1120 = vmatpush1.msra.mxu0 %v940
        %1121 = vmatprep.subr.mxu0 0.0
        %1122 = vmatpush1.msra.mxu0 %v941
        %1123 = vmatprep.subr.mxu0 0.0
        %1124 = vmatpush1.msra.mxu0 %v942
        %1125 = vmatprep.subr.mxu0 0.0
        %1126 = vmatpush1.msra.mxu0 %v943
        %1127 = vmatprep.mubr.f32.mxu0 %v655
        %1128 = vmatmul.mubr.f32.gmra.mrb[0].mxu0 %v550
        %v1129 = vpop.f32.mrb[0].mxu0
        %v1130 = vadd.f32 %v1061, %v1129
        %v1131 = vpop.f32.mrb[0].mxu0
        %1132 = vmatprep.mubr.f32.mxu0 %v657
        %1133 = vmatmul.mubr.f32.gmra.mrb[0].mxu0 %v551
        %v1134 = vpop.f32.mrb[0].mxu0
        %v1135 = vadd.f32 %v1061, %v1134
        %v1136 = vpop.f32.mrb[0].mxu0
        %1137 = vmatprep.mubr.f32.mxu0 %v660
        %1138 = vmatmul.mubr.f32.gmra.mrb[0].mxu0 %v553
        %v1139 = vpop.f32.mrb[0].mxu0
        %v1140 = vadd.f32 %v1061, %v1139
        %v1141 = vpop.f32.mrb[0].mxu0
        %1142 = vmatprep.mubr.f32.mxu0 %v662
        %1143 = vmatmul.mubr.f32.gmra.mrb[0].mxu0 %v554
        %v1144 = vpop.f32.mrb[0].mxu0
        %v1145 = vadd.f32 %v1061, %v1144
        %v1146 = vpop.f32.mrb[0].mxu0
        %1147 = vmatprep.mubr.f32.mxu0 %v665
        %1148 = vmatmul.mubr.f32.gmra.mrb[0].mxu0 %v556
        %v1149 = vpop.f32.mrb[0].mxu0
        %v1150 = vadd.f32 %v1061, %v1149
        %v1151 = vpop.f32.mrb[0].mxu0
        %1152 = vmatprep.mubr.f32.mxu0 %v667
        %1153 = vmatmul.mubr.f32.gmra.mrb[0].mxu0 %v557
        %v1154 = vpop.f32.mrb[0].mxu0
        %v1155 = vadd.f32 %v1061, %v1154
        %v1156 = vpop.f32.mrb[0].mxu0
        %1157 = vmatprep.mubr.f32.mxu0 %v670
        %1158 = vmatmul.mubr.f32.gmra.mrb[0].mxu0 %v559
        %v1159 = vpop.f32.mrb[0].mxu0
        %v1160 = vadd.f32 %v1061, %v1159
        %v1161 = vpop.f32.mrb[0].mxu0
        %1162 = vmatprep.mubr.f32.mxu0 %v672
        %1163 = vmatmul.mubr.f32.gmra.mrb[0].mxu0 %v560
        %v1164 = vpop.f32.mrb[0].mxu0
        %v1165 = vadd.f32 %v1061, %v1164
        %v1166 = vpop.f32.mrb[0].mxu0
        %1167 = vmatprep.mubr.f32.mxu0 %v675
        %1168 = vmatmul.mubr.f32.gmra.mrb[0].mxu0 %v562
        %v1169 = vpop.f32.mrb[0].mxu0
        %v1170 = vadd.f32 %v1061, %v1169
        %v1171 = vpop.f32.mrb[0].mxu0
        %1172 = vmatprep.mubr.f32.mxu0 %v677
        %1173 = vmatmul.mubr.f32.gmra.mrb[0].mxu0 %v563
        %v1174 = vpop.f32.mrb[0].mxu0
        %v1175 = vadd.f32 %v1061, %v1174
        %v1176 = vpop.f32.mrb[0].mxu0
        %1177 = vmatprep.mubr.f32.mxu0 %v680
        %1178 = vmatmul.mubr.f32.gmra.mrb[0].mxu0 %v565
        %v1179 = vpop.f32.mrb[0].mxu0
        %v1180 = vadd.f32 %v1061, %v1179
        %v1181 = vpop.f32.mrb[0].mxu0
        %1182 = vmatprep.mubr.f32.mxu0 %v682
        %1183 = vmatmul.mubr.f32.gmra.mrb[0].mxu0 %v566
        %v1184 = vpop.f32.mrb[0].mxu0
        %v1185 = vadd.f32 %v1061, %v1184
        %v1186 = vpop.f32.mrb[0].mxu0
        %1187 = vmatprep.mubr.f32.mxu0 %v685
        %1188 = vmatmul.mubr.f32.gmra.mrb[0].mxu0 %v568
        %v1189 = vpop.f32.mrb[0].mxu0
        %v1190 = vadd.f32 %v1061, %v1189
        %v1191 = vpop.f32.mrb[0].mxu0
        %1192 = vmatprep.mubr.f32.mxu0 %v687
        %1193 = vmatmul.mubr.f32.gmra.mrb[0].mxu0 %v569
        %v1194 = vpop.f32.mrb[0].mxu0
        %v1195 = vadd.f32 %v1061, %v1194
        %v1196 = vpop.f32.mrb[0].mxu0
        %1197 = vmatprep.mubr.f32.mxu0 %v690
        %1198 = vmatmul.mubr.f32.gmra.mrb[0].mxu0 %v571
        %v1199 = vpop.f32.mrb[0].mxu0
        %v1200 = vadd.f32 %v1061, %v1199
        %v1201 = vpop.f32.mrb[0].mxu0
        %1202 = vmatprep.mubr.f32.mxu0 %v692
        %1203 = vmatmul.mubr.f32.gmra.mrb[0].mxu0 %v572
        %v1204 = vpop.f32.mrb[0].mxu0
        %v1205 = vadd.f32 %v1061, %v1204
        %v1206 = vpop.f32.mrb[0].mxu0
        %1207 = vmatprep.mubr.f32.mxu0 %v695
        %1208 = vmatmul.mubr.f32.gmra.mrb[0].mxu0 %v574
        %v1209 = vpop.f32.mrb[0].mxu0
        %v1210 = vadd.f32 %v1061, %v1209
        %v1211 = vpop.f32.mrb[0].mxu0
        %1212 = vmatprep.mubr.f32.mxu0 %v697
        %1213 = vmatmul.mubr.f32.gmra.mrb[0].mxu0 %v575
        %v1214 = vpop.f32.mrb[0].mxu0
        %v1215 = vadd.f32 %v1061, %v1214
        %v1216 = vpop.f32.mrb[0].mxu0
        %1217 = vmatprep.mubr.f32.mxu0 %v700
        %1218 = vmatmul.mubr.f32.gmra.mrb[0].mxu0 %v577
        %v1219 = vpop.f32.mrb[0].mxu0
        %v1220 = vadd.f32 %v1061, %v1219
        %v1221 = vpop.f32.mrb[0].mxu0
        %1222 = vmatprep.mubr.f32.mxu0 %v702
        %1223 = vmatmul.mubr.f32.gmra.mrb[0].mxu0 %v578
        %v1224 = vpop.f32.mrb[0].mxu0
        %v1225 = vadd.f32 %v1061, %v1224
        %v1226 = vpop.f32.mrb[0].mxu0
        %1227 = vmatprep.mubr.f32.mxu0 %v705
        %1228 = vmatmul.mubr.f32.gmra.mrb[0].mxu0 %v580
        %v1229 = vpop.f32.mrb[0].mxu0
        %v1230 = vadd.f32 %v1061, %v1229
        %v1231 = vpop.f32.mrb[0].mxu0
        %1232 = vmatprep.mubr.f32.mxu0 %v707
        %1233 = vmatmul.mubr.f32.gmra.mrb[0].mxu0 %v581
        %v1234 = vpop.f32.mrb[0].mxu0
        %v1235 = vadd.f32 %v1061, %v1234
        %v1236 = vpop.f32.mrb[0].mxu0
        %1237 = vmatprep.mubr.f32.mxu0 %v710
        %1238 = vmatmul.mubr.f32.gmra.mrb[0].mxu0 %v583
        %v1239 = vpop.f32.mrb[0].mxu0
        %v1240 = vadd.f32 %v1061, %v1239
        %v1241 = vpop.f32.mrb[0].mxu0
        %1242 = vmatprep.mubr.f32.mxu0 %v712
        %1243 = vmatmul.mubr.f32.gmra.mrb[0].mxu0 %v584
        %v1244 = vpop.f32.mrb[0].mxu0
        %v1245 = vadd.f32 %v1061, %v1244
        %v1246 = vpop.f32.mrb[0].mxu0
        %1247 = vmatprep.mubr.f32.mxu0 %v715
        %1248 = vmatmul.mubr.f32.gmra.mrb[0].mxu0 %v586
        %v1249 = vpop.f32.mrb[0].mxu0
        %v1250 = vadd.f32 %v1061, %v1249
        %v1251 = vpop.f32.mrb[0].mxu0
        %1252 = vmatprep.mubr.f32.mxu0 %v717
        %1253 = vmatmul.mubr.f32.gmra.mrb[0].mxu0 %v587
        %v1254 = vpop.f32.mrb[0].mxu0
        %v1255 = vadd.f32 %v1061, %v1254
        %v1256 = vpop.f32.mrb[0].mxu0
        %1257 = vmatprep.mubr.f32.mxu0 %v720
        %1258 = vmatmul.mubr.f32.gmra.mrb[0].mxu0 %v589
        %v1259 = vpop.f32.mrb[0].mxu0
        %v1260 = vadd.f32 %v1061, %v1259
        %v1261 = vpop.f32.mrb[0].mxu0
        %1262 = vmatprep.mubr.f32.mxu0 %v722
        %1263 = vmatmul.mubr.f32.gmra.mrb[0].mxu0 %v590
        %v1264 = vpop.f32.mrb[0].mxu0
        %v1265 = vadd.f32 %v1061, %v1264
        %v1266 = vpop.f32.mrb[0].mxu0
        %1267 = vmatprep.mubr.f32.mxu0 %v725
        %1268 = vmatmul.mubr.f32.gmra.mrb[0].mxu0 %v592
        %v1269 = vpop.f32.mrb[0].mxu0
        %v1270 = vadd.f32 %v1061, %v1269
        %v1271 = vpop.f32.mrb[0].mxu0
        %1272 = vmatprep.mubr.f32.mxu0 %v727
        %1273 = vmatmul.mubr.f32.gmra.mrb[0].mxu0 %v593
        %v1274 = vpop.f32.mrb[0].mxu0
        %v1275 = vadd.f32 %v1061, %v1274
        %v1276 = vpop.f32.mrb[0].mxu0
        %1277 = vmatprep.mubr.f32.mxu0 %v730
        %1278 = vmatmul.mubr.f32.gmra.mrb[0].mxu0 %v595
        %v1279 = vpop.f32.mrb[0].mxu0
        %v1280 = vadd.f32 %v1061, %v1279
        %v1281 = vpop.f32.mrb[0].mxu0
        %1282 = vmatprep.mubr.f32.mxu0 %v732
        %1283 = vmatmul.mubr.f32.gmra.mrb[0].mxu0 %v596
        %v1284 = vpop.f32.mrb[0].mxu0
        %v1285 = vadd.f32 %v1061, %v1284
        %v1286 = vpop.f32.mrb[0].mxu0
        %1287 = vdwg.mxu0
        %1288 = vmatprep.subr.mxu0 0.0
        %1289 = vmatpush1.msra.mxu0 %v944
        %1290 = vmatprep.subr.mxu0 0.0
        %1291 = vmatpush1.msra.mxu0 %v945
        %1292 = vmatprep.subr.mxu0 0.0
        %1293 = vmatpush1.msra.mxu0 %v946
        %1294 = vmatprep.subr.mxu0 0.0
        %1295 = vmatpush1.msra.mxu0 %v947
        %1296 = vmatprep.subr.mxu0 0.0
        %1297 = vmatpush1.msra.mxu0 %v948
        %1298 = vmatprep.subr.mxu0 0.0
        %1299 = vmatpush1.msra.mxu0 %v949
        %1300 = vmatprep.subr.mxu0 0.0
        %1301 = vmatpush1.msra.mxu0 %v950
        %1302 = vmatprep.subr.mxu0 0.0
        %1303 = vmatpush1.msra.mxu0 %v951
        %1304 = vmatprep.subr.mxu0 0.0
        %1305 = vmatpush1.msra.mxu0 %v952
        %1306 = vmatprep.subr.mxu0 0.0
        %1307 = vmatpush1.msra.mxu0 %v953
        %1308 = vmatprep.subr.mxu0 0.0
        %1309 = vmatpush1.msra.mxu0 %v954
        %1310 = vmatprep.subr.mxu0 0.0
        %1311 = vmatpush1.msra.mxu0 %v955
        %1312 = vmatprep.subr.mxu0 0.0
        %1313 = vmatpush1.msra.mxu0 %v956
        %1314 = vmatprep.subr.mxu0 0.0
        %1315 = vmatpush1.msra.mxu0 %v957
        %1316 = vmatprep.subr.mxu0 0.0
        %1317 = vmatpush1.msra.mxu0 %v958
        %1318 = vmatprep.subr.mxu0 0.0
        %1319 = vmatpush1.msra.mxu0 %v959
        %1320 = vmatprep.subr.mxu0 0.0
        %1321 = vmatpush1.msra.mxu0 %v960
        %1322 = vmatprep.subr.mxu0 0.0
        %1323 = vmatpush1.msra.mxu0 %v961
        %1324 = vmatprep.subr.mxu0 0.0
        %1325 = vmatpush1.msra.mxu0 %v962
        %1326 = vmatprep.subr.mxu0 0.0
        %1327 = vmatpush1.msra.mxu0 %v963
        %1328 = vmatprep.subr.mxu0 0.0
        %1329 = vmatpush1.msra.mxu0 %v964
        %1330 = vmatprep.subr.mxu0 0.0
        %1331 = vmatpush1.msra.mxu0 %v965
        %1332 = vmatprep.subr.mxu0 0.0
        %1333 = vmatpush1.msra.mxu0 %v966
        %1334 = vmatprep.subr.mxu0 0.0
        %1335 = vmatpush1.msra.mxu0 %v967
        %1336 = vmatprep.subr.mxu0 0.0
        %1337 = vmatpush1.msra.mxu0 %v968
        %1338 = vmatprep.subr.mxu0 0.0
        %1339 = vmatpush1.msra.mxu0 %v969
        %1340 = vmatprep.subr.mxu0 0.0
        %1341 = vmatpush1.msra.mxu0 %v970
        %1342 = vmatprep.subr.mxu0 0.0
        %1343 = vmatpush1.msra.mxu0 %v971
        %1344 = vmatprep.subr.mxu0 0.0
        %1345 = vmatpush1.msra.mxu0 %v972
        %1346 = vmatprep.subr.mxu0 0.0
        %1347 = vmatpush1.msra.mxu0 %v973
        %1348 = vmatprep.subr.mxu0 0.0
        %1349 = vmatpush1.msra.mxu0 %v974
        %1350 = vmatprep.subr.mxu0 0.0
        %1351 = vmatpush1.msra.mxu0 %v975
        %1352 = vmatprep.mubr.f32.mxu0 %v553
        %1353 = vmatmul.mubr.f32.gmra.mrb[0].mxu0 %v768
        %v1354 = vpop.f32.mrb[0].mxu0
        %v1355 = vadd.f32 %v1130, %v1354
        %v1356 = vpop.f32.mrb[0].mxu0
        %1357 = vmatprep.mubr.f32.mxu0 %v554
        %1358 = vmatmul.mubr.f32.gmra.mrb[0].mxu0 %v770
        %v1359 = vpop.f32.mrb[0].mxu0
        %v1360 = vadd.f32 %v1135, %v1359
        %v1361 = vpop.f32.mrb[0].mxu0
        %1362 = vmatprep.mubr.f32.mxu0 %v556
        %1363 = vmatmul.mubr.f32.gmra.mrb[0].mxu0 %v773
        %v1364 = vpop.f32.mrb[0].mxu0
        %v1365 = vadd.f32 %v1140, %v1364
        %v1366 = vpop.f32.mrb[0].mxu0
        %1367 = vmatprep.mubr.f32.mxu0 %v557
        %1368 = vmatmul.mubr.f32.gmra.mrb[0].mxu0 %v775
        %v1369 = vpop.f32.mrb[0].mxu0
        %v1370 = vadd.f32 %v1145, %v1369
        %v1371 = vpop.f32.mrb[0].mxu0
        %1372 = vmatprep.mubr.f32.mxu0 %v559
        %1373 = vmatmul.mubr.f32.gmra.mrb[0].mxu0 %v778
        %v1374 = vpop.f32.mrb[0].mxu0
        %v1375 = vadd.f32 %v1150, %v1374
        %v1376 = vpop.f32.mrb[0].mxu0
        %1377 = vmatprep.mubr.f32.mxu0 %v560
        %1378 = vmatmul.mubr.f32.gmra.mrb[0].mxu0 %v780
        %v1379 = vpop.f32.mrb[0].mxu0
        %v1380 = vadd.f32 %v1155, %v1379
        %v1381 = vpop.f32.mrb[0].mxu0
        %1382 = vmatprep.mubr.f32.mxu0 %v562
        %1383 = vmatmul.mubr.f32.gmra.mrb[0].mxu0 %v783
        %v1384 = vpop.f32.mrb[0].mxu0
        %v1385 = vadd.f32 %v1160, %v1384
        %v1386 = vpop.f32.mrb[0].mxu0
        %1387 = vmatprep.mubr.f32.mxu0 %v563
        %1388 = vmatmul.mubr.f32.gmra.mrb[0].mxu0 %v785
        %v1389 = vpop.f32.mrb[0].mxu0
        %v1390 = vadd.f32 %v1165, %v1389
        %v1391 = vpop.f32.mrb[0].mxu0
        %1392 = vmatprep.mubr.f32.mxu0 %v565
        %1393 = vmatmul.mubr.f32.gmra.mrb[0].mxu0 %v788
        %v1394 = vpop.f32.mrb[0].mxu0
        %v1395 = vadd.f32 %v1170, %v1394
        %v1396 = vpop.f32.mrb[0].mxu0
        %1397 = vmatprep.mubr.f32.mxu0 %v566
        %1398 = vmatmul.mubr.f32.gmra.mrb[0].mxu0 %v790
        %v1399 = vpop.f32.mrb[0].mxu0
        %v1400 = vadd.f32 %v1175, %v1399
        %v1401 = vpop.f32.mrb[0].mxu0
        %1402 = vmatprep.mubr.f32.mxu0 %v568
        %1403 = vmatmul.mubr.f32.gmra.mrb[0].mxu0 %v793
        %v1404 = vpop.f32.mrb[0].mxu0
        %v1405 = vadd.f32 %v1180, %v1404
        %v1406 = vpop.f32.mrb[0].mxu0
        %1407 = vmatprep.mubr.f32.mxu0 %v569
        %1408 = vmatmul.mubr.f32.gmra.mrb[0].mxu0 %v795
        %v1409 = vpop.f32.mrb[0].mxu0
        %v1410 = vadd.f32 %v1185, %v1409
        %v1411 = vpop.f32.mrb[0].mxu0
        %1412 = vmatprep.mubr.f32.mxu0 %v571
        %1413 = vmatmul.mubr.f32.gmra.mrb[0].mxu0 %v798
        %v1414 = vpop.f32.mrb[0].mxu0
        %v1415 = vadd.f32 %v1190, %v1414
        %v1416 = vpop.f32.mrb[0].mxu0
        %1417 = vmatprep.mubr.f32.mxu0 %v572
        %1418 = vmatmul.mubr.f32.gmra.mrb[0].mxu0 %v800
        %v1419 = vpop.f32.mrb[0].mxu0
        %v1420 = vadd.f32 %v1195, %v1419
        %v1421 = vpop.f32.mrb[0].mxu0
        %1422 = vmatprep.mubr.f32.mxu0 %v574
        %1423 = vmatmul.mubr.f32.gmra.mrb[0].mxu0 %v803
        %v1424 = vpop.f32.mrb[0].mxu0
        %v1425 = vadd.f32 %v1200, %v1424
        %v1426 = vpop.f32.mrb[0].mxu0
        %1427 = vmatprep.mubr.f32.mxu0 %v575
        %1428 = vmatmul.mubr.f32.gmra.mrb[0].mxu0 %v805
        %v1429 = vpop.f32.mrb[0].mxu0
        %v1430 = vadd.f32 %v1205, %v1429
        %v1431 = vpop.f32.mrb[0].mxu0
        %1432 = vmatprep.mubr.f32.mxu0 %v577
        %1433 = vmatmul.mubr.f32.gmra.mrb[0].mxu0 %v808
        %v1434 = vpop.f32.mrb[0].mxu0
        %v1435 = vadd.f32 %v1210, %v1434
        %v1436 = vpop.f32.mrb[0].mxu0
        %1437 = vmatprep.mubr.f32.mxu0 %v578
        %1438 = vmatmul.mubr.f32.gmra.mrb[0].mxu0 %v810
        %v1439 = vpop.f32.mrb[0].mxu0
        %v1440 = vadd.f32 %v1215, %v1439
        %v1441 = vpop.f32.mrb[0].mxu0
        %1442 = vmatprep.mubr.f32.mxu0 %v580
        %1443 = vmatmul.mubr.f32.gmra.mrb[0].mxu0 %v813
        %v1444 = vpop.f32.mrb[0].mxu0
        %v1445 = vadd.f32 %v1220, %v1444
        %v1446 = vpop.f32.mrb[0].mxu0
        %1447 = vmatprep.mubr.f32.mxu0 %v581
        %1448 = vmatmul.mubr.f32.gmra.mrb[0].mxu0 %v815
        %v1449 = vpop.f32.mrb[0].mxu0
        %v1450 = vadd.f32 %v1225, %v1449
        %v1451 = vpop.f32.mrb[0].mxu0
        %1452 = vmatprep.mubr.f32.mxu0 %v583
        %1453 = vmatmul.mubr.f32.gmra.mrb[0].mxu0 %v818
        %v1454 = vpop.f32.mrb[0].mxu0
        %v1455 = vadd.f32 %v1230, %v1454
        %v1456 = vpop.f32.mrb[0].mxu0
        %1457 = vmatprep.mubr.f32.mxu0 %v584
        %1458 = vmatmul.mubr.f32.gmra.mrb[0].mxu0 %v820
        %v1459 = vpop.f32.mrb[0].mxu0
        %v1460 = vadd.f32 %v1235, %v1459
        %v1461 = vpop.f32.mrb[0].mxu0
        %1462 = vmatprep.mubr.f32.mxu0 %v586
        %1463 = vmatmul.mubr.f32.gmra.mrb[0].mxu0 %v823
        %v1464 = vpop.f32.mrb[0].mxu0
        %v1465 = vadd.f32 %v1240, %v1464
        %v1466 = vpop.f32.mrb[0].mxu0
        %1467 = vmatprep.mubr.f32.mxu0 %v587
        %1468 = vmatmul.mubr.f32.gmra.mrb[0].mxu0 %v825
        %v1469 = vpop.f32.mrb[0].mxu0
        %v1470 = vadd.f32 %v1245, %v1469
        %v1471 = vpop.f32.mrb[0].mxu0
        %1472 = vmatprep.mubr.f32.mxu0 %v589
        %1473 = vmatmul.mubr.f32.gmra.mrb[0].mxu0 %v828
        %v1474 = vpop.f32.mrb[0].mxu0
        %v1475 = vadd.f32 %v1250, %v1474
        %v1476 = vpop.f32.mrb[0].mxu0
        %1477 = vmatprep.mubr.f32.mxu0 %v590
        %1478 = vmatmul.mubr.f32.gmra.mrb[0].mxu0 %v830
        %v1479 = vpop.f32.mrb[0].mxu0
        %v1480 = vadd.f32 %v1255, %v1479
        %v1481 = vpop.f32.mrb[0].mxu0
        %1482 = vmatprep.mubr.f32.mxu0 %v592
        %1483 = vmatmul.mubr.f32.gmra.mrb[0].mxu0 %v833
        %v1484 = vpop.f32.mrb[0].mxu0
        %v1485 = vadd.f32 %v1260, %v1484
        %v1486 = vpop.f32.mrb[0].mxu0
        %1487 = vmatprep.mubr.f32.mxu0 %v593
        %1488 = vmatmul.mubr.f32.gmra.mrb[0].mxu0 %v835
        %v1489 = vpop.f32.mrb[0].mxu0
        %v1490 = vadd.f32 %v1265, %v1489
        %v1491 = vpop.f32.mrb[0].mxu0
        %1492 = vmatprep.mubr.f32.mxu0 %v595
        %1493 = vmatmul.mubr.f32.gmra.mrb[0].mxu0 %v838
        %v1494 = vpop.f32.mrb[0].mxu0
        %v1495 = vadd.f32 %v1270, %v1494
        %v1496 = vpop.f32.mrb[0].mxu0
        %1497 = vmatprep.mubr.f32.mxu0 %v596
        %1498 = vmatmul.mubr.f32.gmra.mrb[0].mxu0 %v840
        %v1499 = vpop.f32.mrb[0].mxu0
        %v1500 = vadd.f32 %v1275, %v1499
        %v1501 = vpop.f32.mrb[0].mxu0
        %1502 = vmatprep.mubr.f32.mxu0 %v598
        %1503 = vmatmul.mubr.f32.gmra.mrb[0].mxu0 %v843
        %v1504 = vpop.f32.mrb[0].mxu0
        %v1505 = vadd.f32 %v1280, %v1504
        %v1506 = vpop.f32.mrb[0].mxu0
        %1507 = vmatprep.mubr.f32.mxu0 %v599
        %1508 = vmatmul.mubr.f32.gmra.mrb[0].mxu0 %v845
        %v1509 = vpop.f32.mrb[0].mxu0
        %v1510 = vadd.f32 %v1285, %v1509
        %v1511 = vpop.f32.mrb[0].mxu0
        %1512 = vdwg.mxu0
        %1513 = vmatprep.subr.mxu0 0.0
        %1514 = vmatpush1.msra.mxu0 %v976
        %1515 = vmatprep.subr.mxu0 0.0
        %1516 = vmatpush1.msra.mxu0 %v977
        %1517 = vmatprep.subr.mxu0 0.0
        %1518 = vmatpush1.msra.mxu0 %v978
        %1519 = vmatprep.subr.mxu0 0.0
        %1520 = vmatpush1.msra.mxu0 %v979
        %1521 = vmatprep.subr.mxu0 0.0
        %1522 = vmatpush1.msra.mxu0 %v980
        %1523 = vmatprep.subr.mxu0 0.0
        %1524 = vmatpush1.msra.mxu0 %v981
        %1525 = vmatprep.subr.mxu0 0.0
        %1526 = vmatpush1.msra.mxu0 %v982
        %1527 = vmatprep.subr.mxu0 0.0
        %1528 = vmatpush1.msra.mxu0 %v983
        %1529 = vmatprep.subr.mxu0 0.0
        %1530 = vmatpush1.msra.mxu0 %v984
        %1531 = vmatprep.subr.mxu0 0.0
        %1532 = vmatpush1.msra.mxu0 %v985
        %1533 = vmatprep.subr.mxu0 0.0
        %1534 = vmatpush1.msra.mxu0 %v986
        %1535 = vmatprep.subr.mxu0 0.0
        %1536 = vmatpush1.msra.mxu0 %v987
        %1537 = vmatprep.subr.mxu0 0.0
        %1538 = vmatpush1.msra.mxu0 %v988
        %1539 = vmatprep.subr.mxu0 0.0
        %1540 = vmatpush1.msra.mxu0 %v989
        %1541 = vmatprep.subr.mxu0 0.0
        %1542 = vmatpush1.msra.mxu0 %v990
        %1543 = vmatprep.subr.mxu0 0.0
        %1544 = vmatpush1.msra.mxu0 %v991
        %1545 = vmatprep.subr.mxu0 0.0
        %1546 = vmatpush1.msra.mxu0 %v992
        %1547 = vmatprep.subr.mxu0 0.0
        %1548 = vmatpush1.msra.mxu0 %v993
        %1549 = vmatprep.subr.mxu0 0.0
        %1550 = vmatpush1.msra.mxu0 %v994
        %1551 = vmatprep.subr.mxu0 0.0
        %1552 = vmatpush1.msra.mxu0 %v995
        %1553 = vmatprep.subr.mxu0 0.0
        %1554 = vmatpush1.msra.mxu0 %v996
        %1555 = vmatprep.subr.mxu0 0.0
        %1556 = vmatpush1.msra.mxu0 %v997
        %1557 = vmatprep.subr.mxu0 0.0
        %1558 = vmatpush1.msra.mxu0 %v998
        %1559 = vmatprep.subr.mxu0 0.0
        %1560 = vmatpush1.msra.mxu0 %v999
        %1561 = vmatprep.subr.mxu0 0.0
        %1562 = vmatpush1.msra.mxu0 %v1000
        %1563 = vmatprep.subr.mxu0 0.0
        %1564 = vmatpush1.msra.mxu0 %v1001
        %1565 = vmatprep.subr.mxu0 0.0
        %1566 = vmatpush1.msra.mxu0 %v1002
        %1567 = vmatprep.subr.mxu0 0.0
        %1568 = vmatpush1.msra.mxu0 %v1003
        %1569 = vmatprep.subr.mxu0 0.0
        %1570 = vmatpush1.msra.mxu0 %v1004
        %1571 = vmatprep.subr.mxu0 0.0
        %1572 = vmatpush1.msra.mxu0 %v1005
        %1573 = vmatprep.subr.mxu0 0.0
        %1574 = vmatpush1.msra.mxu0 %v1006
        %1575 = vmatprep.subr.mxu0 0.0
        %1576 = vmatpush1.msra.mxu0 %v1007
        %1577 = vmatprep.mubr.f32.mxu0 %v773
        %1578 = vmatmul.mubr.f32.gmra.mrb[0].mxu0 %v660
        %v1579 = vpop.f32.mrb[0].mxu0
        %v1580 = vadd.f32 %v1355, %v1579
        %v1581 = vpop.f32.mrb[0].mxu0
        %1582 = vmatprep.mubr.f32.mxu0 %v775
        %1583 = vmatmul.mubr.f32.gmra.mrb[0].mxu0 %v662
        %v1584 = vpop.f32.mrb[0].mxu0
        %v1585 = vadd.f32 %v1360, %v1584
        %v1586 = vpop.f32.mrb[0].mxu0
        %1587 = vmatprep.mubr.f32.mxu0 %v778
        %1588 = vmatmul.mubr.f32.gmra.mrb[0].mxu0 %v665
        %v1589 = vpop.f32.mrb[0].mxu0
        %v1590 = vadd.f32 %v1365, %v1589
        %v1591 = vpop.f32.mrb[0].mxu0
        %1592 = vmatprep.mubr.f32.mxu0 %v780
        %1593 = vmatmul.mubr.f32.gmra.mrb[0].mxu0 %v667
        %v1594 = vpop.f32.mrb[0].mxu0
        %v1595 = vadd.f32 %v1370, %v1594
        %v1596 = vpop.f32.mrb[0].mxu0
        %1597 = vmatprep.mubr.f32.mxu0 %v783
        %1598 = vmatmul.mubr.f32.gmra.mrb[0].mxu0 %v670
        %v1599 = vpop.f32.mrb[0].mxu0
        %v1600 = vadd.f32 %v1375, %v1599
        %v1601 = vpop.f32.mrb[0].mxu0
        %1602 = vmatprep.mubr.f32.mxu0 %v785
        %1603 = vmatmul.mubr.f32.gmra.mrb[0].mxu0 %v672
        %v1604 = vpop.f32.mrb[0].mxu0
        %v1605 = vadd.f32 %v1380, %v1604
        %v1606 = vpop.f32.mrb[0].mxu0
        %1607 = vmatprep.mubr.f32.mxu0 %v788
        %1608 = vmatmul.mubr.f32.gmra.mrb[0].mxu0 %v675
        %v1609 = vpop.f32.mrb[0].mxu0
        %v1610 = vadd.f32 %v1385, %v1609
        %v1611 = vpop.f32.mrb[0].mxu0
        %1612 = vmatprep.mubr.f32.mxu0 %v790
        %1613 = vmatmul.mubr.f32.gmra.mrb[0].mxu0 %v677
        %v1614 = vpop.f32.mrb[0].mxu0
        %v1615 = vadd.f32 %v1390, %v1614
        %v1616 = vpop.f32.mrb[0].mxu0
        %1617 = vmatprep.mubr.f32.mxu0 %v793
        %1618 = vmatmul.mubr.f32.gmra.mrb[0].mxu0 %v680
        %v1619 = vpop.f32.mrb[0].mxu0
        %v1620 = vadd.f32 %v1395, %v1619
        %v1621 = vpop.f32.mrb[0].mxu0
        %1622 = vmatprep.mubr.f32.mxu0 %v795
        %1623 = vmatmul.mubr.f32.gmra.mrb[0].mxu0 %v682
        %v1624 = vpop.f32.mrb[0].mxu0
        %v1625 = vadd.f32 %v1400, %v1624
        %v1626 = vpop.f32.mrb[0].mxu0
        %1627 = vmatprep.mubr.f32.mxu0 %v798
        %1628 = vmatmul.mubr.f32.gmra.mrb[0].mxu0 %v685
        %v1629 = vpop.f32.mrb[0].mxu0
        %v1630 = vadd.f32 %v1405, %v1629
        %v1631 = vpop.f32.mrb[0].mxu0
        %1632 = vmatprep.mubr.f32.mxu0 %v800
        %1633 = vmatmul.mubr.f32.gmra.mrb[0].mxu0 %v687
        %v1634 = vpop.f32.mrb[0].mxu0
        %v1635 = vadd.f32 %v1410, %v1634
        %v1636 = vpop.f32.mrb[0].mxu0
        %1637 = vmatprep.mubr.f32.mxu0 %v803
        %1638 = vmatmul.mubr.f32.gmra.mrb[0].mxu0 %v690
        %v1639 = vpop.f32.mrb[0].mxu0
        %v1640 = vadd.f32 %v1415, %v1639
        %v1641 = vpop.f32.mrb[0].mxu0
        %1642 = vmatprep.mubr.f32.mxu0 %v805
        %1643 = vmatmul.mubr.f32.gmra.mrb[0].mxu0 %v692
        %v1644 = vpop.f32.mrb[0].mxu0
        %v1645 = vadd.f32 %v1420, %v1644
        %v1646 = vpop.f32.mrb[0].mxu0
        %1647 = vmatprep.mubr.f32.mxu0 %v808
        %1648 = vmatmul.mubr.f32.gmra.mrb[0].mxu0 %v695
        %v1649 = vpop.f32.mrb[0].mxu0
        %v1650 = vadd.f32 %v1425, %v1649
        %v1651 = vpop.f32.mrb[0].mxu0
        %1652 = vmatprep.mubr.f32.mxu0 %v810
        %1653 = vmatmul.mubr.f32.gmra.mrb[0].mxu0 %v697
        %v1654 = vpop.f32.mrb[0].mxu0
        %v1655 = vadd.f32 %v1430, %v1654
        %v1656 = vpop.f32.mrb[0].mxu0
        %1657 = vmatprep.mubr.f32.mxu0 %v813
        %1658 = vmatmul.mubr.f32.gmra.mrb[0].mxu0 %v700
        %v1659 = vpop.f32.mrb[0].mxu0
        %v1660 = vadd.f32 %v1435, %v1659
        %v1661 = vpop.f32.mrb[0].mxu0
        %1662 = vmatprep.mubr.f32.mxu0 %v815
        %1663 = vmatmul.mubr.f32.gmra.mrb[0].mxu0 %v702
        %v1664 = vpop.f32.mrb[0].mxu0
        %v1665 = vadd.f32 %v1440, %v1664
        %v1666 = vpop.f32.mrb[0].mxu0
        %1667 = vmatprep.mubr.f32.mxu0 %v818
        %1668 = vmatmul.mubr.f32.gmra.mrb[0].mxu0 %v705
        %v1669 = vpop.f32.mrb[0].mxu0
        %v1670 = vadd.f32 %v1445, %v1669
        %v1671 = vpop.f32.mrb[0].mxu0
        %1672 = vmatprep.mubr.f32.mxu0 %v820
        %1673 = vmatmul.mubr.f32.gmra.mrb[0].mxu0 %v707
        %v1674 = vpop.f32.mrb[0].mxu0
        %v1675 = vadd.f32 %v1450, %v1674
        %v1676 = vpop.f32.mrb[0].mxu0
        %1677 = vmatprep.mubr.f32.mxu0 %v823
        %1678 = vmatmul.mubr.f32.gmra.mrb[0].mxu0 %v710
        %v1679 = vpop.f32.mrb[0].mxu0
        %v1680 = vadd.f32 %v1455, %v1679
        %v1681 = vpop.f32.mrb[0].mxu0
        %1682 = vmatprep.mubr.f32.mxu0 %v825
        %1683 = vmatmul.mubr.f32.gmra.mrb[0].mxu0 %v712
        %v1684 = vpop.f32.mrb[0].mxu0
        %v1685 = vadd.f32 %v1460, %v1684
        %v1686 = vpop.f32.mrb[0].mxu0
        %1687 = vmatprep.mubr.f32.mxu0 %v828
        %1688 = vmatmul.mubr.f32.gmra.mrb[0].mxu0 %v715
        %v1689 = vpop.f32.mrb[0].mxu0
        %v1690 = vadd.f32 %v1465, %v1689
        %v1691 = vpop.f32.mrb[0].mxu0
        %1692 = vmatprep.mubr.f32.mxu0 %v830
        %1693 = vmatmul.mubr.f32.gmra.mrb[0].mxu0 %v717
        %v1694 = vpop.f32.mrb[0].mxu0
        %v1695 = vadd.f32 %v1470, %v1694
        %v1696 = vpop.f32.mrb[0].mxu0
        %1697 = vmatprep.mubr.f32.mxu0 %v833
        %1698 = vmatmul.mubr.f32.gmra.mrb[0].mxu0 %v720
        %v1699 = vpop.f32.mrb[0].mxu0
        %v1700 = vadd.f32 %v1475, %v1699
        %v1701 = vpop.f32.mrb[0].mxu0
        %1702 = vmatprep.mubr.f32.mxu0 %v835
        %1703 = vmatmul.mubr.f32.gmra.mrb[0].mxu0 %v722
        %v1704 = vpop.f32.mrb[0].mxu0
        %v1705 = vadd.f32 %v1480, %v1704
        %v1706 = vpop.f32.mrb[0].mxu0
        %1707 = vmatprep.mubr.f32.mxu0 %v838
        %1708 = vmatmul.mubr.f32.gmra.mrb[0].mxu0 %v725
        %v1709 = vpop.f32.mrb[0].mxu0
        %v1710 = vadd.f32 %v1485, %v1709
        %v1711 = vpop.f32.mrb[0].mxu0
        %1712 = vmatprep.mubr.f32.mxu0 %v840
        %1713 = vmatmul.mubr.f32.gmra.mrb[0].mxu0 %v727
        %v1714 = vpop.f32.mrb[0].mxu0
        %v1715 = vadd.f32 %v1490, %v1714
        %v1716 = vpop.f32.mrb[0].mxu0
        %1717 = vmatprep.mubr.f32.mxu0 %v843
        %1718 = vmatmul.mubr.f32.gmra.mrb[0].mxu0 %v730
        %v1719 = vpop.f32.mrb[0].mxu0
        %v1720 = vadd.f32 %v1495, %v1719
        %v1721 = vpop.f32.mrb[0].mxu0
        %1722 = vmatprep.mubr.f32.mxu0 %v845
        %1723 = vmatmul.mubr.f32.gmra.mrb[0].mxu0 %v732
        %v1724 = vpop.f32.mrb[0].mxu0
        %v1725 = vadd.f32 %v1500, %v1724
        %v1726 = vpop.f32.mrb[0].mxu0
        %1727 = vmatprep.mubr.f32.mxu0 %v890
        %1728 = vmatmul.mubr.f32.gmra.mrb[0].mxu0 %v883
        %v1729 = vpop.f32.mrb[0].mxu0
        %v1730 = vadd.f32 %v1505, %v1729
        %v1731 = vpop.f32.mrb[0].mxu0
        %1732 = vmatprep.mubr.f32.mxu0 %v892
        %1733 = vmatmul.mubr.f32.gmra.mrb[0].mxu0 %v885
        %v1734 = vpop.f32.mrb[0].mxu0
        %v1735 = vadd.f32 %v1510, %v1734
        %v1736 = vpop.f32.mrb[0].mxu0
        %1737 = vdwg.mxu0
        %1738 = vmatprep.subr.mxu0 0.0
        %1739 = vmatpush1.msra.mxu0 %v1008
        %1740 = vmatprep.subr.mxu0 0.0
        %1741 = vmatpush1.msra.mxu0 %v1009
        %1742 = vmatprep.subr.mxu0 0.0
        %1743 = vmatpush1.msra.mxu0 %v1010
        %1744 = vmatprep.subr.mxu0 0.0
        %1745 = vmatpush1.msra.mxu0 %v1011
        %1746 = vmatprep.subr.mxu0 0.0
        %1747 = vmatpush1.msra.mxu0 %v1012
        %1748 = vmatprep.subr.mxu0 0.0
        %1749 = vmatpush1.msra.mxu0 %v1013
        %1750 = vmatprep.subr.mxu0 0.0
        %1751 = vmatpush1.msra.mxu0 %v1014
        %1752 = vmatprep.subr.mxu0 0.0
        %1753 = vmatpush1.msra.mxu0 %v1015
        %1754 = vmatprep.subr.mxu0 0.0
        %1755 = vmatpush1.msra.mxu0 %v1016
        %1756 = vmatprep.subr.mxu0 0.0
        %1757 = vmatpush1.msra.mxu0 %v1017
        %1758 = vmatprep.subr.mxu0 0.0
        %1759 = vmatpush1.msra.mxu0 %v1018
        %1760 = vmatprep.subr.mxu0 0.0
        %1761 = vmatpush1.msra.mxu0 %v1019
        %1762 = vmatprep.subr.mxu0 0.0
        %1763 = vmatpush1.msra.mxu0 %v1020
        %1764 = vmatprep.subr.mxu0 0.0
        %1765 = vmatpush1.msra.mxu0 %v1021
        %1766 = vmatprep.subr.mxu0 0.0
        %1767 = vmatpush1.msra.mxu0 %v1022
        %1768 = vmatprep.subr.mxu0 0.0
        %1769 = vmatpush1.msra.mxu0 %v1023
        %1770 = vmatprep.subr.mxu0 0.0
        %1771 = vmatpush1.msra.mxu0 %v1024
        %1772 = vmatprep.subr.mxu0 0.0
        %1773 = vmatpush1.msra.mxu0 %v1025
        %1774 = vmatprep.subr.mxu0 0.0
        %1775 = vmatpush1.msra.mxu0 %v1026
        %1776 = vmatprep.subr.mxu0 0.0
        %1777 = vmatpush1.msra.mxu0 %v1027
        %1778 = vmatprep.subr.mxu0 0.0
        %1779 = vmatpush1.msra.mxu0 %v1028
        %1780 = vmatprep.subr.mxu0 0.0
        %1781 = vmatpush1.msra.mxu0 %v1029
        %1782 = vmatprep.subr.mxu0 0.0
        %1783 = vmatpush1.msra.mxu0 %v1030
        %1784 = vmatprep.subr.mxu0 0.0
        %1785 = vmatpush1.msra.mxu0 %v1031
        %1786 = vmatprep.subr.mxu0 0.0
        %1787 = vmatpush1.msra.mxu0 %v1032
        %1788 = vmatprep.subr.mxu0 0.0
        %1789 = vmatpush1.msra.mxu0 %v1033
        %1790 = vmatprep.subr.mxu0 0.0
        %1791 = vmatpush1.msra.mxu0 %v1034
        %1792 = vmatprep.subr.mxu0 0.0
        %1793 = vmatpush1.msra.mxu0 %v1035
        %1794 = vmatprep.subr.mxu0 0.0
        %1795 = vmatpush1.msra.mxu0 %v1036
        %1796 = vmatprep.subr.mxu0 0.0
        %1797 = vmatpush1.msra.mxu0 %v1037
        %1798 = vmatprep.subr.mxu0 0.0
        %1799 = vmatpush1.msra.mxu0 %v1038
        %1800 = vmatprep.subr.mxu0 0.0
        %1801 = vmatpush1.msra.mxu0 %v1039
        %1802 = vmatprep.mubr.f32.mxu0 %v665
        %1803 = vmatmul.mubr.f32.gmra.mrb[0].mxu0 %v556
        %v1804 = vpop.f32.mrb[0].mxu0
        %v1805 = vadd.f32 %v1580, %v1804
        %v1806 = vpop.f32.mrb[0].mxu0
        %1807 = vmatprep.mubr.f32.mxu0 %v667
        %1808 = vmatmul.mubr.f32.gmra.mrb[0].mxu0 %v557
        %v1809 = vpop.f32.mrb[0].mxu0
        %v1810 = vadd.f32 %v1585, %v1809
        %v1811 = vpop.f32.mrb[0].mxu0
        %1812 = vmatprep.mubr.f32.mxu0 %v670
        %1813 = vmatmul.mubr.f32.gmra.mrb[0].mxu0 %v559
        %v1814 = vpop.f32.mrb[0].mxu0
        %v1815 = vadd.f32 %v1590, %v1814
        %v1816 = vpop.f32.mrb[0].mxu0
        %1817 = vmatprep.mubr.f32.mxu0 %v672
        %1818 = vmatmul.mubr.f32.gmra.mrb[0].mxu0 %v560
        %v1819 = vpop.f32.mrb[0].mxu0
        %v1820 = vadd.f32 %v1595, %v1819
        %v1821 = vpop.f32.mrb[0].mxu0
        %1822 = vmatprep.mubr.f32.mxu0 %v675
        %1823 = vmatmul.mubr.f32.gmra.mrb[0].mxu0 %v562
        %v1824 = vpop.f32.mrb[0].mxu0
        %v1825 = vadd.f32 %v1600, %v1824
        %v1826 = vpop.f32.mrb[0].mxu0
        %1827 = vmatprep.mubr.f32.mxu0 %v677
        %1828 = vmatmul.mubr.f32.gmra.mrb[0].mxu0 %v563
        %v1829 = vpop.f32.mrb[0].mxu0
        %v1830 = vadd.f32 %v1605, %v1829
        %v1831 = vpop.f32.mrb[0].mxu0
        %1832 = vmatprep.mubr.f32.mxu0 %v680
        %1833 = vmatmul.mubr.f32.gmra.mrb[0].mxu0 %v565
        %v1834 = vpop.f32.mrb[0].mxu0
        %v1835 = vadd.f32 %v1610, %v1834
        %v1836 = vpop.f32.mrb[0].mxu0
        %1837 = vmatprep.mubr.f32.mxu0 %v682
        %1838 = vmatmul.mubr.f32.gmra.mrb[0].mxu0 %v566
        %v1839 = vpop.f32.mrb[0].mxu0
        %v1840 = vadd.f32 %v1615, %v1839
        %v1841 = vpop.f32.mrb[0].mxu0
        %1842 = vmatprep.mubr.f32.mxu0 %v685
        %1843 = vmatmul.mubr.f32.gmra.mrb[0].mxu0 %v568
        %v1844 = vpop.f32.mrb[0].mxu0
        %v1845 = vadd.f32 %v1620, %v1844
        %v1846 = vpop.f32.mrb[0].mxu0
        %1847 = vmatprep.mubr.f32.mxu0 %v687
        %1848 = vmatmul.mubr.f32.gmra.mrb[0].mxu0 %v569
        %v1849 = vpop.f32.mrb[0].mxu0
        %v1850 = vadd.f32 %v1625, %v1849
        %v1851 = vpop.f32.mrb[0].mxu0
        %1852 = vmatprep.mubr.f32.mxu0 %v690
        %1853 = vmatmul.mubr.f32.gmra.mrb[0].mxu0 %v571
        %v1854 = vpop.f32.mrb[0].mxu0
        %v1855 = vadd.f32 %v1630, %v1854
        %v1856 = vpop.f32.mrb[0].mxu0
        %1857 = vmatprep.mubr.f32.mxu0 %v692
        %1858 = vmatmul.mubr.f32.gmra.mrb[0].mxu0 %v572
        %v1859 = vpop.f32.mrb[0].mxu0
        %v1860 = vadd.f32 %v1635, %v1859
        %v1861 = vpop.f32.mrb[0].mxu0
        %1862 = vmatprep.mubr.f32.mxu0 %v695
        %1863 = vmatmul.mubr.f32.gmra.mrb[0].mxu0 %v574
        %v1864 = vpop.f32.mrb[0].mxu0
        %v1865 = vadd.f32 %v1640, %v1864
        %v1866 = vpop.f32.mrb[0].mxu0
        %1867 = vmatprep.mubr.f32.mxu0 %v697
        %1868 = vmatmul.mubr.f32.gmra.mrb[0].mxu0 %v575
        %v1869 = vpop.f32.mrb[0].mxu0
        %v1870 = vadd.f32 %v1645, %v1869
        %v1871 = vpop.f32.mrb[0].mxu0
        %1872 = vmatprep.mubr.f32.mxu0 %v700
        %1873 = vmatmul.mubr.f32.gmra.mrb[0].mxu0 %v577
        %v1874 = vpop.f32.mrb[0].mxu0
        %v1875 = vadd.f32 %v1650, %v1874
        %v1876 = vpop.f32.mrb[0].mxu0
        %1877 = vmatprep.mubr.f32.mxu0 %v702
        %1878 = vmatmul.mubr.f32.gmra.mrb[0].mxu0 %v578
        %v1879 = vpop.f32.mrb[0].mxu0
        %v1880 = vadd.f32 %v1655, %v1879
        %v1881 = vpop.f32.mrb[0].mxu0
        %1882 = vmatprep.mubr.f32.mxu0 %v705
        %1883 = vmatmul.mubr.f32.gmra.mrb[0].mxu0 %v580
        %v1884 = vpop.f32.mrb[0].mxu0
        %v1885 = vadd.f32 %v1660, %v1884
        %v1886 = vpop.f32.mrb[0].mxu0
        %1887 = vmatprep.mubr.f32.mxu0 %v707
        %1888 = vmatmul.mubr.f32.gmra.mrb[0].mxu0 %v581
        %v1889 = vpop.f32.mrb[0].mxu0
        %v1890 = vadd.f32 %v1665, %v1889
        %v1891 = vpop.f32.mrb[0].mxu0
        %1892 = vmatprep.mubr.f32.mxu0 %v710
        %1893 = vmatmul.mubr.f32.gmra.mrb[0].mxu0 %v583
        %v1894 = vpop.f32.mrb[0].mxu0
        %v1895 = vadd.f32 %v1670, %v1894
        %v1896 = vpop.f32.mrb[0].mxu0
        %1897 = vmatprep.mubr.f32.mxu0 %v712
        %1898 = vmatmul.mubr.f32.gmra.mrb[0].mxu0 %v584
        %v1899 = vpop.f32.mrb[0].mxu0
        %v1900 = vadd.f32 %v1675, %v1899
        %v1901 = vpop.f32.mrb[0].mxu0
        %1902 = vmatprep.mubr.f32.mxu0 %v715
        %1903 = vmatmul.mubr.f32.gmra.mrb[0].mxu0 %v586
        %v1904 = vpop.f32.mrb[0].mxu0
        %v1905 = vadd.f32 %v1680, %v1904
        %v1906 = vpop.f32.mrb[0].mxu0
        %1907 = vmatprep.mubr.f32.mxu0 %v717
        %1908 = vmatmul.mubr.f32.gmra.mrb[0].mxu0 %v587
        %v1909 = vpop.f32.mrb[0].mxu0
        %v1910 = vadd.f32 %v1685, %v1909
        %v1911 = vpop.f32.mrb[0].mxu0
        %1912 = vmatprep.mubr.f32.mxu0 %v720
        %1913 = vmatmul.mubr.f32.gmra.mrb[0].mxu0 %v589
        %v1914 = vpop.f32.mrb[0].mxu0
        %v1915 = vadd.f32 %v1690, %v1914
        %v1916 = vpop.f32.mrb[0].mxu0
        %1917 = vmatprep.mubr.f32.mxu0 %v722
        %1918 = vmatmul.mubr.f32.gmra.mrb[0].mxu0 %v590
        %v1919 = vpop.f32.mrb[0].mxu0
        %v1920 = vadd.f32 %v1695, %v1919
        %v1921 = vpop.f32.mrb[0].mxu0
        %1922 = vmatprep.mubr.f32.mxu0 %v725
        %1923 = vmatmul.mubr.f32.gmra.mrb[0].mxu0 %v592
        %v1924 = vpop.f32.mrb[0].mxu0
        %v1925 = vadd.f32 %v1700, %v1924
        %v1926 = vpop.f32.mrb[0].mxu0
        %1927 = vmatprep.mubr.f32.mxu0 %v727
        %1928 = vmatmul.mubr.f32.gmra.mrb[0].mxu0 %v593
        %v1929 = vpop.f32.mrb[0].mxu0
        %v1930 = vadd.f32 %v1705, %v1929
        %v1931 = vpop.f32.mrb[0].mxu0
        %1932 = vmatprep.mubr.f32.mxu0 %v730
        %1933 = vmatmul.mubr.f32.gmra.mrb[0].mxu0 %v595
        %v1934 = vpop.f32.mrb[0].mxu0
        %v1935 = vadd.f32 %v1710, %v1934
        %v1936 = vpop.f32.mrb[0].mxu0
        %1937 = vmatprep.mubr.f32.mxu0 %v732
        %1938 = vmatmul.mubr.f32.gmra.mrb[0].mxu0 %v596
        %v1939 = vpop.f32.mrb[0].mxu0
        %v1940 = vadd.f32 %v1715, %v1939
        %v1941 = vpop.f32.mrb[0].mxu0
        %1942 = vmatprep.mubr.f32.mxu0 %v883
        %1943 = vmatmul.mubr.f32.gmra.mrb[0].mxu0 %v598
        %v1944 = vpop.f32.mrb[0].mxu0
        %v1945 = vadd.f32 %v1720, %v1944
        %v1946 = vpop.f32.mrb[0].mxu0
        %1947 = vmatprep.mubr.f32.mxu0 %v885
        %1948 = vmatmul.mubr.f32.gmra.mrb[0].mxu0 %v599
        %v1949 = vpop.f32.mrb[0].mxu0
        %v1950 = vadd.f32 %v1725, %v1949
        %v1951 = vpop.f32.mrb[0].mxu0
        %1952 = vmatprep.mubr.f32.mxu0 %v900
        %1953 = vmatmul.mubr.f32.gmra.mrb[0].mxu0 %v601
        %v1954 = vpop.f32.mrb[0].mxu0
        %v1955 = vadd.f32 %v1730, %v1954
        %v1956 = vpop.f32.mrb[0].mxu0
        %1957 = vmatprep.mubr.f32.mxu0 %v902
        %1958 = vmatmul.mubr.f32.gmra.mrb[0].mxu0 %v602
        %v1959 = vpop.f32.mrb[0].mxu0
        %v1960 = vadd.f32 %v1735, %v1959
        %v1961 = vpop.f32.mrb[0].mxu0
        %1962 = vdwg.mxu0
        %1963 = vmatprep.subr.mxu0 0.0
        %1964 = vmatpush1.msra.mxu0 %v1040
        %1965 = vmatprep.subr.mxu0 0.0
        %1966 = vmatpush1.msra.mxu0 %v1041
        %1967 = vmatprep.subr.mxu0 0.0
        %1968 = vmatpush1.msra.mxu0 %v1042
        %1969 = vmatprep.subr.mxu0 0.0
        %1970 = vmatpush1.msra.mxu0 %v1043
        %1971 = vmatprep.subr.mxu0 0.0
        %1972 = vmatpush1.msra.mxu0 %v1044
        %1973 = vmatprep.subr.mxu0 0.0
        %1974 = vmatpush1.msra.mxu0 %v1045
        %1975 = vmatprep.subr.mxu0 0.0
        %1976 = vmatpush1.msra.mxu0 %v1046
        %1977 = vmatprep.subr.mxu0 0.0
        %1978 = vmatpush1.msra.mxu0 %v1047
        %1979 = vmatprep.subr.mxu0 0.0
        %1980 = vmatpush1.msra.mxu0 %v1048
        %1981 = vmatprep.subr.mxu0 0.0
        %1982 = vmatpush1.msra.mxu0 %v1049
        %1983 = vmatprep.subr.mxu0 0.0
        %1984 = vmatpush1.msra.mxu0 %v1050
        %1985 = vmatprep.subr.mxu0 0.0
        %1986 = vmatpush1.msra.mxu0 %v1051
        %1987 = vmatprep.subr.mxu0 0.0
        %1988 = vmatpush1.msra.mxu0 %v1052
        %1989 = vmatprep.subr.mxu0 0.0
        %1990 = vmatpush1.msra.mxu0 %v1053
        %1991 = vmatprep.subr.mxu0 0.0
        %1992 = vmatpush1.msra.mxu0 %v1054
        %1993 = vmatprep.subr.mxu0 0.0
        %1994 = vmatpush1.msra.mxu0 %v1055
        %1995 = vmatprep.subr.mxu0 0.0
        %1996 = vmatpush1.msra.mxu0 0.0
        %1997 = vmatprep.subr.mxu0 0.0
        %1998 = vmatpush1.msra.mxu0 0.0
        %1999 = vmatprep.subr.mxu0 0.0
        %2000 = vmatpush1.msra.mxu0 0.0
        %2001 = vmatprep.subr.mxu0 0.0
        %2002 = vmatpush1.msra.mxu0 0.0
        %2003 = vmatprep.subr.mxu0 0.0
        %2004 = vmatpush1.msra.mxu0 0.0
        %2005 = vmatprep.subr.mxu0 0.0
        %2006 = vmatpush1.msra.mxu0 0.0
        %2007 = vmatprep.subr.mxu0 0.0
        %2008 = vmatpush1.msra.mxu0 0.0
        %2009 = vmatprep.subr.mxu0 0.0
        %2010 = vmatpush1.msra.mxu0 0.0
        %2011 = vmatprep.subr.mxu0 0.0
        %2012 = vmatpush1.msra.mxu0 0.0
        %2013 = vmatprep.subr.mxu0 0.0
        %2014 = vmatpush1.msra.mxu0 0.0
        %2015 = vmatprep.subr.mxu0 0.0
        %2016 = vmatpush1.msra.mxu0 0.0
        %2017 = vmatprep.subr.mxu0 0.0
        %2018 = vmatpush1.msra.mxu0 0.0
        %2019 = vmatprep.subr.mxu0 0.0
        %2020 = vmatpush1.msra.mxu0 0.0
        %2021 = vmatprep.subr.mxu0 0.0
        %2022 = vmatpush1.msra.mxu0 0.0
        %2023 = vmatprep.subr.mxu0 0.0
        %2024 = vmatpush1.msra.mxu0 0.0
        %2025 = vmatprep.subr.mxu0 0.0
        %2026 = vmatpush1.msra.mxu0 0.0
        %2027 = vmatprep.mubr.f32.mxu0 0.0
        %2028 = vmatmul.mubr.f32.gmra.mrb[0].mxu0 %v778
        %v2029 = vpop.f32.mrb[0].mxu0
        %v2030 = vadd.f32 %v1805, %v2029
        %v2031 = vpop.f32.mrb[0].mxu0
        %2032 = vmatprep.mubr.f32.mxu0 0.0
        %2033 = vmatmul.mubr.f32.gmra.mrb[0].mxu0 %v780
        %v2034 = vpop.f32.mrb[0].mxu0
        %v2035 = vadd.f32 %v1810, %v2034
        %v2036 = vpop.f32.mrb[0].mxu0
        %2037 = vmatprep.mubr.f32.mxu0 0.0
        %2038 = vmatmul.mubr.f32.gmra.mrb[0].mxu0 %v783
        %v2039 = vpop.f32.mrb[0].mxu0
        %v2040 = vadd.f32 %v1815, %v2039
        %v2041 = vpop.f32.mrb[0].mxu0
        %2042 = vmatprep.mubr.f32.mxu0 0.0
        %2043 = vmatmul.mubr.f32.gmra.mrb[0].mxu0 %v785
        %v2044 = vpop.f32.mrb[0].mxu0
        %v2045 = vadd.f32 %v1820, %v2044
        %v2046 = vpop.f32.mrb[0].mxu0
        %2047 = vmatprep.mubr.f32.mxu0 0.0
        %2048 = vmatmul.mubr.f32.gmra.mrb[0].mxu0 %v788
        %v2049 = vpop.f32.mrb[0].mxu0
        %v2050 = vadd.f32 %v1825, %v2049
        %v2051 = vpop.f32.mrb[0].mxu0
        %2052 = vmatprep.mubr.f32.mxu0 0.0
        %2053 = vmatmul.mubr.f32.gmra.mrb[0].mxu0 %v790
        %v2054 = vpop.f32.mrb[0].mxu0
        %v2055 = vadd.f32 %v1830, %v2054
        %v2056 = vpop.f32.mrb[0].mxu0
        %2057 = vmatprep.mubr.f32.mxu0 0.0
        %2058 = vmatmul.mubr.f32.gmra.mrb[0].mxu0 %v793
        %v2059 = vpop.f32.mrb[0].mxu0
        %v2060 = vadd.f32 %v1835, %v2059
        %v2061 = vpop.f32.mrb[0].mxu0
        %2062 = vmatprep.mubr.f32.mxu0 0.0
        %2063 = vmatmul.mubr.f32.gmra.mrb[0].mxu0 %v795
        %v2064 = vpop.f32.mrb[0].mxu0
        %v2065 = vadd.f32 %v1840, %v2064
        %v2066 = vpop.f32.mrb[0].mxu0
        %2067 = vmatprep.mubr.f32.mxu0 0.0
        %2068 = vmatmul.mubr.f32.gmra.mrb[0].mxu0 %v798
        %v2069 = vpop.f32.mrb[0].mxu0
        %v2070 = vadd.f32 %v1845, %v2069
        %v2071 = vpop.f32.mrb[0].mxu0
        %2072 = vmatprep.mubr.f32.mxu0 0.0
        %2073 = vmatmul.mubr.f32.gmra.mrb[0].mxu0 %v800
        %v2074 = vpop.f32.mrb[0].mxu0
        %v2075 = vadd.f32 %v1850, %v2074
        %v2076 = vpop.f32.mrb[0].mxu0
        %2077 = vmatprep.mubr.f32.mxu0 0.0
        %2078 = vmatmul.mubr.f32.gmra.mrb[0].mxu0 %v803
        %v2079 = vpop.f32.mrb[0].mxu0
        %v2080 = vadd.f32 %v1855, %v2079
        %v2081 = vpop.f32.mrb[0].mxu0
        %2082 = vmatprep.mubr.f32.mxu0 0.0
        %2083 = vmatmul.mubr.f32.gmra.mrb[0].mxu0 %v805
        %v2084 = vpop.f32.mrb[0].mxu0
        %v2085 = vadd.f32 %v1860, %v2084
        %v2086 = vpop.f32.mrb[0].mxu0
        %2087 = vmatprep.mubr.f32.mxu0 0.0
        %2088 = vmatmul.mubr.f32.gmra.mrb[0].mxu0 %v808
        %v2089 = vpop.f32.mrb[0].mxu0
        %v2090 = vadd.f32 %v1865, %v2089
        %v2091 = vpop.f32.mrb[0].mxu0
        %2092 = vmatprep.mubr.f32.mxu0 0.0
        %2093 = vmatmul.mubr.f32.gmra.mrb[0].mxu0 %v810
        %v2094 = vpop.f32.mrb[0].mxu0
        %v2095 = vadd.f32 %v1870, %v2094
        %v2096 = vpop.f32.mrb[0].mxu0
        %2097 = vmatprep.mubr.f32.mxu0 0.0
        %2098 = vmatmul.mubr.f32.gmra.mrb[0].mxu0 %v813
        %v2099 = vpop.f32.mrb[0].mxu0
        %v2100 = vadd.f32 %v1875, %v2099
        %v2101 = vpop.f32.mrb[0].mxu0
        %2102 = vmatprep.mubr.f32.mxu0 0.0
        %2103 = vmatmul.mubr.f32.gmra.mrb[0].mxu0 %v815
        %v2104 = vpop.f32.mrb[0].mxu0
        %v2105 = vadd.f32 %v1880, %v2104
        %v2106 = vpop.f32.mrb[0].mxu0
        %2107 = vmatprep.mubr.f32.mxu0 0.0
        %2108 = vmatmul.mubr.f32.gmra.mrb[0].mxu0 %v818
        %v2109 = vpop.f32.mrb[0].mxu0
        %v2110 = vadd.f32 %v1885, %v2109
        %v2111 = vpop.f32.mrb[0].mxu0
        %2112 = vmatprep.mubr.f32.mxu0 0.0
        %2113 = vmatmul.mubr.f32.gmra.mrb[0].mxu0 %v820
        %v2114 = vpop.f32.mrb[0].mxu0
        %v2115 = vadd.f32 %v1890, %v2114
        %v2116 = vpop.f32.mrb[0].mxu0
        %2117 = vmatprep.mubr.f32.mxu0 0.0
        %2118 = vmatmul.mubr.f32.gmra.mrb[0].mxu0 %v823
        %v2119 = vpop.f32.mrb[0].mxu0
        %v2120 = vadd.f32 %v1895, %v2119
        %v2121 = vpop.f32.mrb[0].mxu0
        %2122 = vmatprep.mubr.f32.mxu0 0.0
        %2123 = vmatmul.mubr.f32.gmra.mrb[0].mxu0 %v825
        %v2124 = vpop.f32.mrb[0].mxu0
        %v2125 = vadd.f32 %v1900, %v2124
        %v2126 = vpop.f32.mrb[0].mxu0
        %2127 = vmatprep.mubr.f32.mxu0 0.0
        %2128 = vmatmul.mubr.f32.gmra.mrb[0].mxu0 %v828
        %v2129 = vpop.f32.mrb[0].mxu0
        %v2130 = vadd.f32 %v1905, %v2129
        %v2131 = vpop.f32.mrb[0].mxu0
        %2132 = vmatprep.mubr.f32.mxu0 0.0
        %2133 = vmatmul.mubr.f32.gmra.mrb[0].mxu0 %v830
        %v2134 = vpop.f32.mrb[0].mxu0
        %v2135 = vadd.f32 %v1910, %v2134
        %v2136 = vpop.f32.mrb[0].mxu0
        %2137 = vmatprep.mubr.f32.mxu0 0.0
        %2138 = vmatmul.mubr.f32.gmra.mrb[0].mxu0 %v833
        %v2139 = vpop.f32.mrb[0].mxu0
        %v2140 = vadd.f32 %v1915, %v2139
        %v2141 = vpop.f32.mrb[0].mxu0
        %2142 = vmatprep.mubr.f32.mxu0 0.0
        %2143 = vmatmul.mubr.f32.gmra.mrb[0].mxu0 %v835
        %v2144 = vpop.f32.mrb[0].mxu0
        %v2145 = vadd.f32 %v1920, %v2144
        %v2146 = vpop.f32.mrb[0].mxu0
        %2147 = vmatprep.mubr.f32.mxu0 0.0
        %2148 = vmatmul.mubr.f32.gmra.mrb[0].mxu0 %v838
        %v2149 = vpop.f32.mrb[0].mxu0
        %v2150 = vadd.f32 %v1925, %v2149
        %v2151 = vpop.f32.mrb[0].mxu0
        %2152 = vmatprep.mubr.f32.mxu0 0.0
        %2153 = vmatmul.mubr.f32.gmra.mrb[0].mxu0 %v840
        %v2154 = vpop.f32.mrb[0].mxu0
        %v2155 = vadd.f32 %v1930, %v2154
        %v2156 = vpop.f32.mrb[0].mxu0
        %2157 = vmatprep.mubr.f32.mxu0 0.0
        %2158 = vmatmul.mubr.f32.gmra.mrb[0].mxu0 %v843
        %v2159 = vpop.f32.mrb[0].mxu0
        %v2160 = vadd.f32 %v1935, %v2159
        %v2161 = vpop.f32.mrb[0].mxu0
        %2162 = vmatprep.mubr.f32.mxu0 0.0
        %2163 = vmatmul.mubr.f32.gmra.mrb[0].mxu0 %v845
        %v2164 = vpop.f32.mrb[0].mxu0
        %v2165 = vadd.f32 %v1940, %v2164
        %v2166 = vpop.f32.mrb[0].mxu0
        %2167 = vmatprep.mubr.f32.mxu0 0.0
        %2168 = vmatmul.mubr.f32.gmra.mrb[0].mxu0 %v890
        %v2169 = vpop.f32.mrb[0].mxu0
        %v2170 = vadd.f32 %v1945, %v2169
        %v2171 = vpop.f32.mrb[0].mxu0
        %2172 = vmatprep.mubr.f32.mxu0 0.0
        %2173 = vmatmul.mubr.f32.gmra.mrb[0].mxu0 %v892
        %v2174 = vpop.f32.mrb[0].mxu0
        %v2175 = vadd.f32 %v1950, %v2174
        %v2176 = vpop.f32.mrb[0].mxu0
        %2177 = vmatprep.mubr.f32.mxu0 0.0
        %2178 = vmatmul.mubr.f32.gmra.mrb[0].mxu0 %v907
        %v2179 = vpop.f32.mrb[0].mxu0
        %v2180 = vadd.f32 %v1955, %v2179
        %v2181 = vpop.f32.mrb[0].mxu0
        %2182 = vmatprep.mubr.f32.mxu0 0.0
        %2183 = vmatmul.mubr.f32.gmra.mrb[0].mxu0 %v909
        %v2184 = vpop.f32.mrb[0].mxu0
        %v2185 = vadd.f32 %v1960, %v2184
        %v2186 = vpop.f32.mrb[0].mxu0
        %2187 = vdwg.mxu0
        %v2188 = vmax.f32 %v2030, 0.0
        %v2189 = vmax.f32 %v2035, 0.0
        %v2190 = vmax.f32 %v2040, 0.0
        %v2191 = vmax.f32 %v2045, 0.0
        %v2192 = vmax.f32 %v2050, 0.0
        %v2193 = vmax.f32 %v2055, 0.0
        %v2194 = vmax.f32 %v2060, 0.0
        %v2195 = vmax.f32 %v2065, 0.0
        %v2196 = vmax.f32 %v2070, 0.0
        %v2197 = vmax.f32 %v2075, 0.0
        %v2198 = vmax.f32 %v2080, 0.0
        %v2199 = vmax.f32 %v2085, 0.0
        %v2200 = vmax.f32 %v2090, 0.0
        %v2201 = vmax.f32 %v2095, 0.0
        %v2202 = vmax.f32 %v2100, 0.0
        %v2203 = vmax.f32 %v2105, 0.0
        %v2204 = vmax.f32 %v2110, 0.0
        %v2205 = vmax.f32 %v2115, 0.0
        %v2206 = vmax.f32 %v2120, 0.0
        %v2207 = vmax.f32 %v2125, 0.0
        %v2208 = vmax.f32 %v2130, 0.0
        %v2209 = vmax.f32 %v2135, 0.0
        %v2210 = vmax.f32 %v2140, 0.0
        %v2211 = vmax.f32 %v2145, 0.0
        %v2212 = vmax.f32 %v2150, 0.0
        %v2213 = vmax.f32 %v2155, 0.0
        %v2214 = vmax.f32 %v2160, 0.0
        %v2215 = vmax.f32 %v2165, 0.0
        %v2216 = vmax.f32 %v2170, 0.0
        %v2217 = vmax.f32 %v2175, 0.0
        %v2218 = vmax.f32 %v2180, 0.0
        %v2219 = vmax.f32 %v2185, 0.0
        %v2220 = vmax.f32 %v2188, %v2190
        %v2221 = vmax.f32 %v2189, %v2191
        %v2222 = vmax.f32 %v2192, %v2194
        %v2223 = vmax.f32 %v2193, %v2195
        %v2224 = vmax.f32 %v2196, %v2198
        %v2225 = vmax.f32 %v2197, %v2199
        %v2226 = vmax.f32 %v2200, %v2202
        %v2227 = vmax.f32 %v2201, %v2203
        %v2228 = vmax.f32 %v2204, %v2206
        %v2229 = vmax.f32 %v2205, %v2207
        %v2230 = vmax.f32 %v2208, %v2210
        %v2231 = vmax.f32 %v2209, %v2211
        %v2232 = vmax.f32 %v2212, %v2214
        %v2233 = vmax.f32 %v2213, %v2215
        %v2234 = vmax.f32 %v2216, %v2218
        %v2235 = vmax.f32 %v2217, %v2219
        %v2252 = vcombine.high %v2220, %v2220
        %v2254 = vunpack.c.l.s4 1983009808
        %v2255 = vunpack.c.0.s8 %v2254
        %v2256 = vlaneseq
        %v2257 = vshrl.u32 %v2256, 7
        %v2258 = vsub.s32 %v2255, %v2257
        %v2259 = vrot.slane %v2220, %v2258
        %v2261 = vunpack.c.l.s4 1983009808
        %v2262 = vunpack.c.0.s8 %v2261
        %v2263 = vlaneseq
        %v2264 = vshrl.u32 %v2263, 7
        %v2265 = vsub.s32 %v2262, %v2264
        %v2266 = vrot.slane %v2252, %v2265
        %v2267 = vcombine.high %v2259, %v2259
        %v2268 = vcombine.high %v2266, %v2266
        %v2269 = vcombine.high %v2221, %v2221
        %v2271 = vunpack.c.l.s4 1983009808
        %v2272 = vunpack.c.0.s8 %v2271
        %v2273 = vlaneseq
        %v2274 = vshrl.u32 %v2273, 7
        %v2275 = vsub.s32 %v2272, %v2274
        %v2276 = vrot.slane %v2221, %v2275
        %v2278 = vunpack.c.l.s4 1983009808
        %v2279 = vunpack.c.0.s8 %v2278
        %v2280 = vlaneseq
        %v2281 = vshrl.u32 %v2280, 7
        %v2282 = vsub.s32 %v2279, %v2281
        %v2283 = vrot.slane %v2269, %v2282
        %v2284 = vcombine.high %v2276, %v2276
        %v2285 = vcombine.high %v2283, %v2283
        %v2286 = vcombine.high %v2222, %v2222
        %v2288 = vunpack.c.l.s4 1983009808
        %v2289 = vunpack.c.0.s8 %v2288
        %v2290 = vlaneseq
        %v2291 = vshrl.u32 %v2290, 7
        %v2292 = vsub.s32 %v2289, %v2291
        %v2293 = vrot.slane %v2222, %v2292
        %v2295 = vunpack.c.l.s4 1983009808
        %v2296 = vunpack.c.0.s8 %v2295
        %v2297 = vlaneseq
        %v2298 = vshrl.u32 %v2297, 7
        %v2299 = vsub.s32 %v2296, %v2298
        %v2300 = vrot.slane %v2286, %v2299
        %v2301 = vcombine.high %v2293, %v2293
        %v2302 = vcombine.high %v2300, %v2300
        %v2303 = vcombine.high %v2223, %v2223
        %v2305 = vunpack.c.l.s4 1983009808
        %v2306 = vunpack.c.0.s8 %v2305
        %v2307 = vlaneseq
        %v2308 = vshrl.u32 %v2307, 7
        %v2309 = vsub.s32 %v2306, %v2308
        %v2310 = vrot.slane %v2223, %v2309
        %v2312 = vunpack.c.l.s4 1983009808
        %v2313 = vunpack.c.0.s8 %v2312
        %v2314 = vlaneseq
        %v2315 = vshrl.u32 %v2314, 7
        %v2316 = vsub.s32 %v2313, %v2315
        %v2317 = vrot.slane %v2303, %v2316
        %v2318 = vcombine.high %v2310, %v2310
        %v2319 = vcombine.high %v2317, %v2317
        %v2320 = vcombine.high %v2224, %v2224
        %v2322 = vunpack.c.l.s4 1983009808
        %v2323 = vunpack.c.0.s8 %v2322
        %v2324 = vlaneseq
        %v2325 = vshrl.u32 %v2324, 7
        %v2326 = vsub.s32 %v2323, %v2325
        %v2327 = vrot.slane %v2224, %v2326
        %v2329 = vunpack.c.l.s4 1983009808
        %v2330 = vunpack.c.0.s8 %v2329
        %v2331 = vlaneseq
        %v2332 = vshrl.u32 %v2331, 7
        %v2333 = vsub.s32 %v2330, %v2332
        %v2334 = vrot.slane %v2320, %v2333
        %v2335 = vcombine.high %v2327, %v2327
        %v2336 = vcombine.high %v2334, %v2334
        %v2337 = vcombine.high %v2225, %v2225
        %v2339 = vunpack.c.l.s4 1983009808
        %v2340 = vunpack.c.0.s8 %v2339
        %v2341 = vlaneseq
        %v2342 = vshrl.u32 %v2341, 7
        %v2343 = vsub.s32 %v2340, %v2342
        %v2344 = vrot.slane %v2225, %v2343
        %v2346 = vunpack.c.l.s4 1983009808
        %v2347 = vunpack.c.0.s8 %v2346
        %v2348 = vlaneseq
        %v2349 = vshrl.u32 %v2348, 7
        %v2350 = vsub.s32 %v2347, %v2349
        %v2351 = vrot.slane %v2337, %v2350
        %v2352 = vcombine.high %v2344, %v2344
        %v2353 = vcombine.high %v2351, %v2351
        %v2354 = vcombine.high %v2226, %v2226
        %v2356 = vunpack.c.l.s4 1983009808
        %v2357 = vunpack.c.0.s8 %v2356
        %v2358 = vlaneseq
        %v2359 = vshrl.u32 %v2358, 7
        %v2360 = vsub.s32 %v2357, %v2359
        %v2361 = vrot.slane %v2226, %v2360
        %v2363 = vunpack.c.l.s4 1983009808
        %v2364 = vunpack.c.0.s8 %v2363
        %v2365 = vlaneseq
        %v2366 = vshrl.u32 %v2365, 7
        %v2367 = vsub.s32 %v2364, %v2366
        %v2368 = vrot.slane %v2354, %v2367
        %v2369 = vcombine.high %v2361, %v2361
        %v2370 = vcombine.high %v2368, %v2368
        %v2371 = vcombine.high %v2227, %v2227
        %v2373 = vunpack.c.l.s4 1983009808
        %v2374 = vunpack.c.0.s8 %v2373
        %v2375 = vlaneseq
        %v2376 = vshrl.u32 %v2375, 7
        %v2377 = vsub.s32 %v2374, %v2376
        %v2378 = vrot.slane %v2227, %v2377
        %v2380 = vunpack.c.l.s4 1983009808
        %v2381 = vunpack.c.0.s8 %v2380
        %v2382 = vlaneseq
        %v2383 = vshrl.u32 %v2382, 7
        %v2384 = vsub.s32 %v2381, %v2383
        %v2385 = vrot.slane %v2371, %v2384
        %v2386 = vcombine.high %v2378, %v2378
        %v2387 = vcombine.high %v2385, %v2385
        %v2388 = vcombine.high %v2228, %v2228
        %v2390 = vunpack.c.l.s4 1983009808
        %v2391 = vunpack.c.0.s8 %v2390
        %v2392 = vlaneseq
        %v2393 = vshrl.u32 %v2392, 7
        %v2394 = vsub.s32 %v2391, %v2393
        %v2395 = vrot.slane %v2228, %v2394
        %v2397 = vunpack.c.l.s4 1983009808
        %v2398 = vunpack.c.0.s8 %v2397
        %v2399 = vlaneseq
        %v2400 = vshrl.u32 %v2399, 7
        %v2401 = vsub.s32 %v2398, %v2400
        %v2402 = vrot.slane %v2388, %v2401
        %v2403 = vcombine.high %v2395, %v2395
        %v2404 = vcombine.high %v2402, %v2402
        %v2405 = vcombine.high %v2229, %v2229
        %v2407 = vunpack.c.l.s4 1983009808
        %v2408 = vunpack.c.0.s8 %v2407
        %v2409 = vlaneseq
        %v2410 = vshrl.u32 %v2409, 7
        %v2411 = vsub.s32 %v2408, %v2410
        %v2412 = vrot.slane %v2229, %v2411
        %v2414 = vunpack.c.l.s4 1983009808
        %v2415 = vunpack.c.0.s8 %v2414
        %v2416 = vlaneseq
        %v2417 = vshrl.u32 %v2416, 7
        %v2418 = vsub.s32 %v2415, %v2417
        %v2419 = vrot.slane %v2405, %v2418
        %v2420 = vcombine.high %v2412, %v2412
        %v2421 = vcombine.high %v2419, %v2419
        %v2422 = vcombine.high %v2230, %v2230
        %v2424 = vunpack.c.l.s4 1983009808
        %v2425 = vunpack.c.0.s8 %v2424
        %v2426 = vlaneseq
        %v2427 = vshrl.u32 %v2426, 7
        %v2428 = vsub.s32 %v2425, %v2427
        %v2429 = vrot.slane %v2230, %v2428
        %v2431 = vunpack.c.l.s4 1983009808
        %v2432 = vunpack.c.0.s8 %v2431
        %v2433 = vlaneseq
        %v2434 = vshrl.u32 %v2433, 7
        %v2435 = vsub.s32 %v2432, %v2434
        %v2436 = vrot.slane %v2422, %v2435
        %v2437 = vcombine.high %v2429, %v2429
        %v2438 = vcombine.high %v2436, %v2436
        %v2439 = vcombine.high %v2231, %v2231
        %v2441 = vunpack.c.l.s4 1983009808
        %v2442 = vunpack.c.0.s8 %v2441
        %v2443 = vlaneseq
        %v2444 = vshrl.u32 %v2443, 7
        %v2445 = vsub.s32 %v2442, %v2444
        %v2446 = vrot.slane %v2231, %v2445
        %v2448 = vunpack.c.l.s4 1983009808
        %v2449 = vunpack.c.0.s8 %v2448
        %v2450 = vlaneseq
        %v2451 = vshrl.u32 %v2450, 7
        %v2452 = vsub.s32 %v2449, %v2451
        %v2453 = vrot.slane %v2439, %v2452
        %v2454 = vcombine.high %v2446, %v2446
        %v2455 = vcombine.high %v2453, %v2453
        %v2456 = vcombine.high %v2232, %v2232
        %v2458 = vunpack.c.l.s4 1983009808
        %v2459 = vunpack.c.0.s8 %v2458
        %v2460 = vlaneseq
        %v2461 = vshrl.u32 %v2460, 7
        %v2462 = vsub.s32 %v2459, %v2461
        %v2463 = vrot.slane %v2232, %v2462
        %v2465 = vunpack.c.l.s4 1983009808
        %v2466 = vunpack.c.0.s8 %v2465
        %v2467 = vlaneseq
        %v2468 = vshrl.u32 %v2467, 7
        %v2469 = vsub.s32 %v2466, %v2468
        %v2470 = vrot.slane %v2456, %v2469
        %v2471 = vcombine.high %v2463, %v2463
        %v2472 = vcombine.high %v2470, %v2470
        %v2473 = vcombine.high %v2233, %v2233
        %v2475 = vunpack.c.l.s4 1983009808
        %v2476 = vunpack.c.0.s8 %v2475
        %v2477 = vlaneseq
        %v2478 = vshrl.u32 %v2477, 7
        %v2479 = vsub.s32 %v2476, %v2478
        %v2480 = vrot.slane %v2233, %v2479
        %v2482 = vunpack.c.l.s4 1983009808
        %v2483 = vunpack.c.0.s8 %v2482
        %v2484 = vlaneseq
        %v2485 = vshrl.u32 %v2484, 7
        %v2486 = vsub.s32 %v2483, %v2485
        %v2487 = vrot.slane %v2473, %v2486
        %v2488 = vcombine.high %v2480, %v2480
        %v2489 = vcombine.high %v2487, %v2487
        %v2490 = vcombine.high %v2234, %v2234
        %v2492 = vunpack.c.l.s4 1983009808
        %v2493 = vunpack.c.0.s8 %v2492
        %v2494 = vlaneseq
        %v2495 = vshrl.u32 %v2494, 7
        %v2496 = vsub.s32 %v2493, %v2495
        %v2497 = vrot.slane %v2234, %v2496
        %v2499 = vunpack.c.l.s4 1983009808
        %v2500 = vunpack.c.0.s8 %v2499
        %v2501 = vlaneseq
        %v2502 = vshrl.u32 %v2501, 7
        %v2503 = vsub.s32 %v2500, %v2502
        %v2504 = vrot.slane %v2490, %v2503
        %v2505 = vcombine.high %v2497, %v2497
        %v2506 = vcombine.high %v2504, %v2504
        %v2507 = vcombine.high %v2235, %v2235
        %v2509 = vunpack.c.l.s4 1983009808
        %v2510 = vunpack.c.0.s8 %v2509
        %v2511 = vlaneseq
        %v2512 = vshrl.u32 %v2511, 7
        %v2513 = vsub.s32 %v2510, %v2512
        %v2514 = vrot.slane %v2235, %v2513
        %v2516 = vunpack.c.l.s4 1983009808
        %v2517 = vunpack.c.0.s8 %v2516
        %v2518 = vlaneseq
        %v2519 = vshrl.u32 %v2518, 7
        %v2520 = vsub.s32 %v2517, %v2519
        %v2521 = vrot.slane %v2507, %v2520
        %v2522 = vcombine.high %v2514, %v2514
        %v2523 = vcombine.high %v2521, %v2521
        %v2588 = vrot.slane %v2259, 7
        %v2589 = vrot.slane %v2588, 2
        %v2590 = vrot.slane %v2267, 7
        %v2591 = vrot.slane %v2590, 2
        %v2592 = vrot.slane %v2266, 7
        %v2593 = vrot.slane %v2592, 2
        %v2594 = vrot.slane %v2268, 7
        %v2595 = vrot.slane %v2594, 2
        %v2596 = vrot.slane %v2276, 7
        %v2597 = vrot.slane %v2596, 2
        %v2598 = vrot.slane %v2284, 7
        %v2599 = vrot.slane %v2598, 2
        %v2600 = vrot.slane %v2283, 7
        %v2601 = vrot.slane %v2600, 2
        %v2602 = vrot.slane %v2285, 7
        %v2603 = vrot.slane %v2602, 2
        %v2604 = vrot.slane %v2293, 7
        %v2605 = vrot.slane %v2604, 2
        %v2606 = vrot.slane %v2301, 7
        %v2607 = vrot.slane %v2606, 2
        %v2608 = vrot.slane %v2300, 7
        %v2609 = vrot.slane %v2608, 2
        %v2610 = vrot.slane %v2302, 7
        %v2611 = vrot.slane %v2610, 2
        %v2612 = vrot.slane %v2310, 7
        %v2613 = vrot.slane %v2612, 2
        %v2614 = vrot.slane %v2318, 7
        %v2615 = vrot.slane %v2614, 2
        %v2616 = vrot.slane %v2317, 7
        %v2617 = vrot.slane %v2616, 2
        %v2618 = vrot.slane %v2319, 7
        %v2619 = vrot.slane %v2618, 2
        %v2620 = vrot.slane %v2327, 7
        %v2621 = vrot.slane %v2620, 2
        %v2622 = vrot.slane %v2335, 7
        %v2623 = vrot.slane %v2622, 2
        %v2624 = vrot.slane %v2334, 7
        %v2625 = vrot.slane %v2624, 2
        %v2626 = vrot.slane %v2336, 7
        %v2627 = vrot.slane %v2626, 2
        %v2628 = vrot.slane %v2344, 7
        %v2629 = vrot.slane %v2628, 2
        %v2630 = vrot.slane %v2352, 7
        %v2631 = vrot.slane %v2630, 2
        %v2632 = vrot.slane %v2351, 7
        %v2633 = vrot.slane %v2632, 2
        %v2634 = vrot.slane %v2353, 7
        %v2635 = vrot.slane %v2634, 2
        %v2636 = vrot.slane %v2361, 7
        %v2637 = vrot.slane %v2636, 2
        %v2638 = vrot.slane %v2369, 7
        %v2639 = vrot.slane %v2638, 2
        %v2640 = vrot.slane %v2368, 7
        %v2641 = vrot.slane %v2640, 2
        %v2642 = vrot.slane %v2370, 7
        %v2643 = vrot.slane %v2642, 2
        %v2644 = vrot.slane %v2378, 7
        %v2645 = vrot.slane %v2644, 2
        %v2646 = vrot.slane %v2386, 7
        %v2647 = vrot.slane %v2646, 2
        %v2648 = vrot.slane %v2385, 7
        %v2649 = vrot.slane %v2648, 2
        %v2650 = vrot.slane %v2387, 7
        %v2651 = vrot.slane %v2650, 2
        %v2652 = vrot.slane %v2395, 7
        %v2653 = vrot.slane %v2652, 2
        %v2654 = vrot.slane %v2403, 7
        %v2655 = vrot.slane %v2654, 2
        %v2656 = vrot.slane %v2402, 7
        %v2657 = vrot.slane %v2656, 2
        %v2658 = vrot.slane %v2404, 7
        %v2659 = vrot.slane %v2658, 2
        %v2660 = vrot.slane %v2412, 7
        %v2661 = vrot.slane %v2660, 2
        %v2662 = vrot.slane %v2420, 7
        %v2663 = vrot.slane %v2662, 2
        %v2664 = vrot.slane %v2419, 7
        %v2665 = vrot.slane %v2664, 2
        %v2666 = vrot.slane %v2421, 7
        %v2667 = vrot.slane %v2666, 2
        %v2668 = vrot.slane %v2429, 7
        %v2669 = vrot.slane %v2668, 2
        %v2670 = vrot.slane %v2437, 7
        %v2671 = vrot.slane %v2670, 2
        %v2672 = vrot.slane %v2436, 7
        %v2673 = vrot.slane %v2672, 2
        %v2674 = vrot.slane %v2438, 7
        %v2675 = vrot.slane %v2674, 2
        %v2676 = vrot.slane %v2446, 7
        %v2677 = vrot.slane %v2676, 2
        %v2678 = vrot.slane %v2454, 7
        %v2679 = vrot.slane %v2678, 2
        %v2680 = vrot.slane %v2453, 7
        %v2681 = vrot.slane %v2680, 2
        %v2682 = vrot.slane %v2455, 7
        %v2683 = vrot.slane %v2682, 2
        %v2684 = vrot.slane %v2463, 7
        %v2685 = vrot.slane %v2684, 2
        %v2686 = vrot.slane %v2471, 7
        %v2687 = vrot.slane %v2686, 2
        %v2688 = vrot.slane %v2470, 7
        %v2689 = vrot.slane %v2688, 2
        %v2690 = vrot.slane %v2472, 7
        %v2691 = vrot.slane %v2690, 2
        %v2692 = vrot.slane %v2480, 7
        %v2693 = vrot.slane %v2692, 2
        %v2694 = vrot.slane %v2488, 7
        %v2695 = vrot.slane %v2694, 2
        %v2696 = vrot.slane %v2487, 7
        %v2697 = vrot.slane %v2696, 2
        %v2698 = vrot.slane %v2489, 7
        %v2699 = vrot.slane %v2698, 2
        %v2700 = vrot.slane %v2497, 7
        %v2701 = vrot.slane %v2700, 2
        %v2702 = vrot.slane %v2505, 7
        %v2703 = vrot.slane %v2702, 2
        %v2704 = vrot.slane %v2504, 7
        %v2705 = vrot.slane %v2704, 2
        %v2706 = vrot.slane %v2506, 7
        %v2707 = vrot.slane %v2706, 2
        %v2708 = vrot.slane %v2514, 7
        %v2709 = vrot.slane %v2708, 2
        %v2710 = vrot.slane %v2522, 7
        %v2711 = vrot.slane %v2710, 2
        %v2712 = vrot.slane %v2521, 7
        %v2713 = vrot.slane %v2712, 2
        %v2714 = vrot.slane %v2523, 7
        %v2715 = vrot.slane %v2714, 2
        %v2780 = vmax.f32 %v2259, %v2589
        %v2781 = vmax.f32 %v2267, %v2591
        %v2782 = vmax.f32 %v2266, %v2593
        %v2783 = vmax.f32 %v2268, %v2595
        %v2784 = vmax.f32 %v2276, %v2597
        %v2785 = vmax.f32 %v2284, %v2599
        %v2786 = vmax.f32 %v2283, %v2601
        %v2787 = vmax.f32 %v2285, %v2603
        %v2788 = vmax.f32 %v2293, %v2605
        %v2789 = vmax.f32 %v2301, %v2607
        %v2790 = vmax.f32 %v2300, %v2609
        %v2791 = vmax.f32 %v2302, %v2611
        %v2792 = vmax.f32 %v2310, %v2613
        %v2793 = vmax.f32 %v2318, %v2615
        %v2794 = vmax.f32 %v2317, %v2617
        %v2795 = vmax.f32 %v2319, %v2619
        %v2796 = vmax.f32 %v2327, %v2621
        %v2797 = vmax.f32 %v2335, %v2623
        %v2798 = vmax.f32 %v2334, %v2625
        %v2799 = vmax.f32 %v2336, %v2627
        %v2800 = vmax.f32 %v2344, %v2629
        %v2801 = vmax.f32 %v2352, %v2631
        %v2802 = vmax.f32 %v2351, %v2633
        %v2803 = vmax.f32 %v2353, %v2635
        %v2804 = vmax.f32 %v2361, %v2637
        %v2805 = vmax.f32 %v2369, %v2639
        %v2806 = vmax.f32 %v2368, %v2641
        %v2807 = vmax.f32 %v2370, %v2643
        %v2808 = vmax.f32 %v2378, %v2645
        %v2809 = vmax.f32 %v2386, %v2647
        %v2810 = vmax.f32 %v2385, %v2649
        %v2811 = vmax.f32 %v2387, %v2651
        %v2812 = vmax.f32 %v2395, %v2653
        %v2813 = vmax.f32 %v2403, %v2655
        %v2814 = vmax.f32 %v2402, %v2657
        %v2815 = vmax.f32 %v2404, %v2659
        %v2816 = vmax.f32 %v2412, %v2661
        %v2817 = vmax.f32 %v2420, %v2663
        %v2818 = vmax.f32 %v2419, %v2665
        %v2819 = vmax.f32 %v2421, %v2667
        %v2820 = vmax.f32 %v2429, %v2669
        %v2821 = vmax.f32 %v2437, %v2671
        %v2822 = vmax.f32 %v2436, %v2673
        %v2823 = vmax.f32 %v2438, %v2675
        %v2824 = vmax.f32 %v2446, %v2677
        %v2825 = vmax.f32 %v2454, %v2679
        %v2826 = vmax.f32 %v2453, %v2681
        %v2827 = vmax.f32 %v2455, %v2683
        %v2828 = vmax.f32 %v2463, %v2685
        %v2829 = vmax.f32 %v2471, %v2687
        %v2830 = vmax.f32 %v2470, %v2689
        %v2831 = vmax.f32 %v2472, %v2691
        %v2832 = vmax.f32 %v2480, %v2693
        %v2833 = vmax.f32 %v2488, %v2695
        %v2834 = vmax.f32 %v2487, %v2697
        %v2835 = vmax.f32 %v2489, %v2699
        %v2836 = vmax.f32 %v2497, %v2701
        %v2837 = vmax.f32 %v2505, %v2703
        %v2838 = vmax.f32 %v2504, %v2705
        %v2839 = vmax.f32 %v2506, %v2707
        %v2840 = vmax.f32 %v2514, %v2709
        %v2841 = vmax.f32 %v2522, %v2711
        %v2842 = vmax.f32 %v2521, %v2713
        %v2843 = vmax.f32 %v2523, %v2715
        %2844 = vst [vmem:[#allocation3] sm:$0xff] 0.0
        %2845 = vst [vmem:[#allocation3 + $0x8] sm:$0x3] 0.0
        %s2846 = scalar_lea.vmem [#allocation3], 144
        %2847 = vst [vmem:[%s2846] sm:$0xff] 0.0
        %2848 = vst [vmem:[%s2846 + $0x8] sm:$0x3] 0.0
        %2849 = vst [vmem:[#allocation3] sm:$0x1] 0.0
        %2850 = vst [vmem:[#allocation3 + $0x10] sm:$0x1] 0.0
        %2851 = vst [vmem:[#allocation3 + $0x20] sm:$0x1] 0.0
        %2852 = vst [vmem:[#allocation3 + $0x30] sm:$0x1] 0.0
        %2853 = vst [vmem:[#allocation3 + $0x40] sm:$0x1] 0.0
        %2854 = vst [vmem:[#allocation3 + $0x50] sm:$0x1] 0.0
        %2855 = vst [vmem:[#allocation3 + $0x60] sm:$0x1] 0.0
        %2856 = vst [vmem:[#allocation3 + $0x70] sm:$0x1] 0.0
        %2857 = vst [vmem:[#allocation3 + $0x80] sm:$0x1] 0.0
        %2858 = vst [vmem:[#allocation3 + $0x90] sm:$0x1] 0.0
        %2859 = vst [vmem:[#allocation3 + $0x9] sm:$0x1] 0.0
        %2860 = vst [vmem:[#allocation3 + $0x19] sm:$0x1] 0.0
        %2861 = vst [vmem:[#allocation3 + $0x29] sm:$0x1] 0.0
        %2862 = vst [vmem:[#allocation3 + $0x39] sm:$0x1] 0.0
        %2863 = vst [vmem:[#allocation3 + $0x49] sm:$0x1] 0.0
        %2864 = vst [vmem:[#allocation3 + $0x59] sm:$0x1] 0.0
        %2865 = vst [vmem:[#allocation3 + $0x69] sm:$0x1] 0.0
        %2866 = vst [vmem:[#allocation3 + $0x79] sm:$0x1] 0.0
        %2867 = vst [vmem:[#allocation3 + $0x89] sm:$0x1] 0.0
        %2868 = vst [vmem:[#allocation3 + $0x99] sm:$0x1] 0.0
        %v2933 = vlaneseq
        %v2934 = vshrl.u32 %v2933, 7
        %v2935 = vsub.s32 0, %v2934
        %v2936 = vrot.slane %v2780, %v2935
        %v2937 = vlaneseq
        %v2938 = vshrl.u32 %v2937, 7
        %v2939 = vsub.s32 0, %v2938
        %v2940 = vrot.slane %v2781, %v2939
        %v2941 = vlaneseq
        %v2942 = vshrl.u32 %v2941, 7
        %v2943 = vsub.s32 0, %v2942
        %v2944 = vrot.slane %v2782, %v2943
        %v2945 = vlaneseq
        %v2946 = vshrl.u32 %v2945, 7
        %v2947 = vsub.s32 0, %v2946
        %v2948 = vrot.slane %v2783, %v2947
        %v2949 = vlaneseq
        %v2950 = vshrl.u32 %v2949, 7
        %v2951 = vsub.s32 0, %v2950
        %v2952 = vrot.slane %v2784, %v2951
        %v2953 = vlaneseq
        %v2954 = vshrl.u32 %v2953, 7
        %v2955 = vsub.s32 0, %v2954
        %v2956 = vrot.slane %v2785, %v2955
        %v2957 = vlaneseq
        %v2958 = vshrl.u32 %v2957, 7
        %v2959 = vsub.s32 0, %v2958
        %v2960 = vrot.slane %v2786, %v2959
        %v2961 = vlaneseq
        %v2962 = vshrl.u32 %v2961, 7
        %v2963 = vsub.s32 0, %v2962
        %v2964 = vrot.slane %v2787, %v2963
        %v2965 = vlaneseq
        %v2966 = vshrl.u32 %v2965, 7
        %v2967 = vsub.s32 0, %v2966
        %v2968 = vrot.slane %v2788, %v2967
        %v2969 = vlaneseq
        %v2970 = vshrl.u32 %v2969, 7
        %v2971 = vsub.s32 0, %v2970
        %v2972 = vrot.slane %v2789, %v2971
        %v2973 = vlaneseq
        %v2974 = vshrl.u32 %v2973, 7
        %v2975 = vsub.s32 0, %v2974
        %v2976 = vrot.slane %v2790, %v2975
        %v2977 = vlaneseq
        %v2978 = vshrl.u32 %v2977, 7
        %v2979 = vsub.s32 0, %v2978
        %v2980 = vrot.slane %v2791, %v2979
        %v2981 = vlaneseq
        %v2982 = vshrl.u32 %v2981, 7
        %v2983 = vsub.s32 0, %v2982
        %v2984 = vrot.slane %v2792, %v2983
        %v2985 = vlaneseq
        %v2986 = vshrl.u32 %v2985, 7
        %v2987 = vsub.s32 0, %v2986
        %v2988 = vrot.slane %v2793, %v2987
        %v2989 = vlaneseq
        %v2990 = vshrl.u32 %v2989, 7
        %v2991 = vsub.s32 0, %v2990
        %v2992 = vrot.slane %v2794, %v2991
        %v2993 = vlaneseq
        %v2994 = vshrl.u32 %v2993, 7
        %v2995 = vsub.s32 0, %v2994
        %v2996 = vrot.slane %v2795, %v2995
        %v2997 = vlaneseq
        %v2998 = vshrl.u32 %v2997, 7
        %v2999 = vsub.s32 0, %v2998
        %v3000 = vrot.slane %v2796, %v2999
        %v3001 = vlaneseq
        %v3002 = vshrl.u32 %v3001, 7
        %v3003 = vsub.s32 0, %v3002
        %v3004 = vrot.slane %v2797, %v3003
        %v3005 = vlaneseq
        %v3006 = vshrl.u32 %v3005, 7
        %v3007 = vsub.s32 0, %v3006
        %v3008 = vrot.slane %v2798, %v3007
        %v3009 = vlaneseq
        %v3010 = vshrl.u32 %v3009, 7
        %v3011 = vsub.s32 0, %v3010
        %v3012 = vrot.slane %v2799, %v3011
        %v3013 = vlaneseq
        %v3014 = vshrl.u32 %v3013, 7
        %v3015 = vsub.s32 0, %v3014
        %v3016 = vrot.slane %v2800, %v3015
        %v3017 = vlaneseq
        %v3018 = vshrl.u32 %v3017, 7
        %v3019 = vsub.s32 0, %v3018
        %v3020 = vrot.slane %v2801, %v3019
        %v3021 = vlaneseq
        %v3022 = vshrl.u32 %v3021, 7
        %v3023 = vsub.s32 0, %v3022
        %v3024 = vrot.slane %v2802, %v3023
        %v3025 = vlaneseq
        %v3026 = vshrl.u32 %v3025, 7
        %v3027 = vsub.s32 0, %v3026
        %v3028 = vrot.slane %v2803, %v3027
        %v3029 = vlaneseq
        %v3030 = vshrl.u32 %v3029, 7
        %v3031 = vsub.s32 0, %v3030
        %v3032 = vrot.slane %v2804, %v3031
        %v3033 = vlaneseq
        %v3034 = vshrl.u32 %v3033, 7
        %v3035 = vsub.s32 0, %v3034
        %v3036 = vrot.slane %v2805, %v3035
        %v3037 = vlaneseq
        %v3038 = vshrl.u32 %v3037, 7
        %v3039 = vsub.s32 0, %v3038
        %v3040 = vrot.slane %v2806, %v3039
        %v3041 = vlaneseq
        %v3042 = vshrl.u32 %v3041, 7
        %v3043 = vsub.s32 0, %v3042
        %v3044 = vrot.slane %v2807, %v3043
        %v3045 = vlaneseq
        %v3046 = vshrl.u32 %v3045, 7
        %v3047 = vsub.s32 0, %v3046
        %v3048 = vrot.slane %v2808, %v3047
        %v3049 = vlaneseq
        %v3050 = vshrl.u32 %v3049, 7
        %v3051 = vsub.s32 0, %v3050
        %v3052 = vrot.slane %v2809, %v3051
        %v3053 = vlaneseq
        %v3054 = vshrl.u32 %v3053, 7
        %v3055 = vsub.s32 0, %v3054
        %v3056 = vrot.slane %v2810, %v3055
        %v3057 = vlaneseq
        %v3058 = vshrl.u32 %v3057, 7
        %v3059 = vsub.s32 0, %v3058
        %v3060 = vrot.slane %v2811, %v3059
        %v3061 = vlaneseq
        %v3062 = vshrl.u32 %v3061, 7
        %v3063 = vsub.s32 0, %v3062
        %v3064 = vrot.slane %v2812, %v3063
        %v3065 = vlaneseq
        %v3066 = vshrl.u32 %v3065, 7
        %v3067 = vsub.s32 0, %v3066
        %v3068 = vrot.slane %v2813, %v3067
        %v3069 = vlaneseq
        %v3070 = vshrl.u32 %v3069, 7
        %v3071 = vsub.s32 0, %v3070
        %v3072 = vrot.slane %v2814, %v3071
        %v3073 = vlaneseq
        %v3074 = vshrl.u32 %v3073, 7
        %v3075 = vsub.s32 0, %v3074
        %v3076 = vrot.slane %v2815, %v3075
        %v3077 = vlaneseq
        %v3078 = vshrl.u32 %v3077, 7
        %v3079 = vsub.s32 0, %v3078
        %v3080 = vrot.slane %v2816, %v3079
        %v3081 = vlaneseq
        %v3082 = vshrl.u32 %v3081, 7
        %v3083 = vsub.s32 0, %v3082
        %v3084 = vrot.slane %v2817, %v3083
        %v3085 = vlaneseq
        %v3086 = vshrl.u32 %v3085, 7
        %v3087 = vsub.s32 0, %v3086
        %v3088 = vrot.slane %v2818, %v3087
        %v3089 = vlaneseq
        %v3090 = vshrl.u32 %v3089, 7
        %v3091 = vsub.s32 0, %v3090
        %v3092 = vrot.slane %v2819, %v3091
        %v3093 = vlaneseq
        %v3094 = vshrl.u32 %v3093, 7
        %v3095 = vsub.s32 0, %v3094
        %v3096 = vrot.slane %v2820, %v3095
        %v3097 = vlaneseq
        %v3098 = vshrl.u32 %v3097, 7
        %v3099 = vsub.s32 0, %v3098
        %v3100 = vrot.slane %v2821, %v3099
        %v3101 = vlaneseq
        %v3102 = vshrl.u32 %v3101, 7
        %v3103 = vsub.s32 0, %v3102
        %v3104 = vrot.slane %v2822, %v3103
        %v3105 = vlaneseq
        %v3106 = vshrl.u32 %v3105, 7
        %v3107 = vsub.s32 0, %v3106
        %v3108 = vrot.slane %v2823, %v3107
        %v3109 = vlaneseq
        %v3110 = vshrl.u32 %v3109, 7
        %v3111 = vsub.s32 0, %v3110
        %v3112 = vrot.slane %v2824, %v3111
        %v3113 = vlaneseq
        %v3114 = vshrl.u32 %v3113, 7
        %v3115 = vsub.s32 0, %v3114
        %v3116 = vrot.slane %v2825, %v3115
        %v3117 = vlaneseq
        %v3118 = vshrl.u32 %v3117, 7
        %v3119 = vsub.s32 0, %v3118
        %v3120 = vrot.slane %v2826, %v3119
        %v3121 = vlaneseq
        %v3122 = vshrl.u32 %v3121, 7
        %v3123 = vsub.s32 0, %v3122
        %v3124 = vrot.slane %v2827, %v3123
        %v3125 = vlaneseq
        %v3126 = vshrl.u32 %v3125, 7
        %v3127 = vsub.s32 0, %v3126
        %v3128 = vrot.slane %v2828, %v3127
        %v3129 = vlaneseq
        %v3130 = vshrl.u32 %v3129, 7
        %v3131 = vsub.s32 0, %v3130
        %v3132 = vrot.slane %v2829, %v3131
        %v3133 = vlaneseq
        %v3134 = vshrl.u32 %v3133, 7
        %v3135 = vsub.s32 0, %v3134
        %v3136 = vrot.slane %v2830, %v3135
        %v3137 = vlaneseq
        %v3138 = vshrl.u32 %v3137, 7
        %v3139 = vsub.s32 0, %v3138
        %v3140 = vrot.slane %v2831, %v3139
        %v3141 = vlaneseq
        %v3142 = vshrl.u32 %v3141, 7
        %v3143 = vsub.s32 0, %v3142
        %v3144 = vrot.slane %v2832, %v3143
        %v3145 = vlaneseq
        %v3146 = vshrl.u32 %v3145, 7
        %v3147 = vsub.s32 0, %v3146
        %v3148 = vrot.slane %v2833, %v3147
        %v3149 = vlaneseq
        %v3150 = vshrl.u32 %v3149, 7
        %v3151 = vsub.s32 0, %v3150
        %v3152 = vrot.slane %v2834, %v3151
        %v3153 = vlaneseq
        %v3154 = vshrl.u32 %v3153, 7
        %v3155 = vsub.s32 0, %v3154
        %v3156 = vrot.slane %v2835, %v3155
        %v3157 = vlaneseq
        %v3158 = vshrl.u32 %v3157, 7
        %v3159 = vsub.s32 0, %v3158
        %v3160 = vrot.slane %v2836, %v3159
        %v3161 = vlaneseq
        %v3162 = vshrl.u32 %v3161, 7
        %v3163 = vsub.s32 0, %v3162
        %v3164 = vrot.slane %v2837, %v3163
        %v3165 = vlaneseq
        %v3166 = vshrl.u32 %v3165, 7
        %v3167 = vsub.s32 0, %v3166
        %v3168 = vrot.slane %v2838, %v3167
        %v3169 = vlaneseq
        %v3170 = vshrl.u32 %v3169, 7
        %v3171 = vsub.s32 0, %v3170
        %v3172 = vrot.slane %v2839, %v3171
        %v3173 = vlaneseq
        %v3174 = vshrl.u32 %v3173, 7
        %v3175 = vsub.s32 0, %v3174
        %v3176 = vrot.slane %v2840, %v3175
        %v3177 = vlaneseq
        %v3178 = vshrl.u32 %v3177, 7
        %v3179 = vsub.s32 0, %v3178
        %v3180 = vrot.slane %v2841, %v3179
        %v3181 = vlaneseq
        %v3182 = vshrl.u32 %v3181, 7
        %v3183 = vsub.s32 0, %v3182
        %v3184 = vrot.slane %v2842, %v3183
        %v3185 = vlaneseq
        %v3186 = vshrl.u32 %v3185, 7
        %v3187 = vsub.s32 0, %v3186
        %v3188 = vrot.slane %v2843, %v3187
        %vm3189 = vcmask 1041409
        %v3190 = vsel %vm3189, %v2940, %v2936
        %vm3191 = vcmask 1042434
        %v3192 = vsel %vm3191, %v2944, %v3190
        %vm3193 = vcmask 1043459
        %v3194 = vsel %vm3193, %v2948, %v3192
        %vm3195 = vcmask 1044484
        %v3196 = vsel %vm3195, %v2952, %v3194
        %vm3197 = vcmask 1045509
        %v3198 = vsel %vm3197, %v2956, %v3196
        %vm3199 = vcmask 1046534
        %v3200 = vsel %vm3199, %v2960, %v3198
        %vm3201 = vcmask 1047559
        %v3202 = vsel %vm3201, %v2964, %v3200
        %v3203 = vsel %vm3189, %v2972, %v2968
        %v3204 = vsel %vm3191, %v2976, %v3203
        %v3205 = vsel %vm3193, %v2980, %v3204
        %v3206 = vsel %vm3195, %v2984, %v3205
        %v3207 = vsel %vm3197, %v2988, %v3206
        %v3208 = vsel %vm3199, %v2992, %v3207
        %v3209 = vsel %vm3201, %v2996, %v3208
        %v3210 = vsel %vm3189, %v3004, %v3000
        %v3211 = vsel %vm3191, %v3008, %v3210
        %v3212 = vsel %vm3193, %v3012, %v3211
        %v3213 = vsel %vm3195, %v3016, %v3212
        %v3214 = vsel %vm3197, %v3020, %v3213
        %v3215 = vsel %vm3199, %v3024, %v3214
        %v3216 = vsel %vm3201, %v3028, %v3215
        %v3217 = vsel %vm3189, %v3036, %v3032
        %v3218 = vsel %vm3191, %v3040, %v3217
        %v3219 = vsel %vm3193, %v3044, %v3218
        %v3220 = vsel %vm3195, %v3048, %v3219
        %v3221 = vsel %vm3197, %v3052, %v3220
        %v3222 = vsel %vm3199, %v3056, %v3221
        %v3223 = vsel %vm3201, %v3060, %v3222
        %v3224 = vsel %vm3189, %v3068, %v3064
        %v3225 = vsel %vm3191, %v3072, %v3224
        %v3226 = vsel %vm3193, %v3076, %v3225
        %v3227 = vsel %vm3195, %v3080, %v3226
        %v3228 = vsel %vm3197, %v3084, %v3227
        %v3229 = vsel %vm3199, %v3088, %v3228
        %v3230 = vsel %vm3201, %v3092, %v3229
        %v3231 = vsel %vm3189, %v3100, %v3096
        %v3232 = vsel %vm3191, %v3104, %v3231
        %v3233 = vsel %vm3193, %v3108, %v3232
        %v3234 = vsel %vm3195, %v3112, %v3233
        %v3235 = vsel %vm3197, %v3116, %v3234
        %v3236 = vsel %vm3199, %v3120, %v3235
        %v3237 = vsel %vm3201, %v3124, %v3236
        %v3238 = vsel %vm3189, %v3132, %v3128
        %v3239 = vsel %vm3191, %v3136, %v3238
        %v3240 = vsel %vm3193, %v3140, %v3239
        %v3241 = vsel %vm3195, %v3144, %v3240
        %v3242 = vsel %vm3197, %v3148, %v3241
        %v3243 = vsel %vm3199, %v3152, %v3242
        %v3244 = vsel %vm3201, %v3156, %v3243
        %v3245 = vsel %vm3189, %v3164, %v3160
        %v3246 = vsel %vm3191, %v3168, %v3245
        %v3247 = vsel %vm3193, %v3172, %v3246
        %v3248 = vsel %vm3195, %v3176, %v3247
        %v3249 = vsel %vm3197, %v3180, %v3248
        %v3250 = vsel %vm3199, %v3184, %v3249
        %v3251 = vsel %vm3201, %v3188, %v3250
        %s3260 = scalar_lea.vmem [#allocation3], 16
        %3261 = vst [vmem:[%s3260 + $0x1] sm:$0xff] %v3202
        %3262 = vst [vmem:[%s3260 + $0x11] sm:$0xff] %v3209
        %3263 = vst [vmem:[%s3260 + $0x21] sm:$0xff] %v3216
        %3264 = vst [vmem:[%s3260 + $0x31] sm:$0xff] %v3223
        %3265 = vst [vmem:[%s3260 + $0x41] sm:$0xff] %v3230
        %3266 = vst [vmem:[%s3260 + $0x51] sm:$0xff] %v3237
        %3267 = vst [vmem:[%s3260 + $0x61] sm:$0xff] %v3244
        %3268 = vst [vmem:[%s3260 + $0x71] sm:$0xff] %v3251
        %v3269 = vld [vmem:[#allocation3] sm:$0xff]
        %v3270 = vld [vmem:[#allocation3 + $0x8] sm:$0x3]
        %v3271 = vld [vmem:[#allocation3 + $0x10] sm:$0xff]
        %v3272 = vld [vmem:[#allocation3 + $0x18] sm:$0x3]
        %v3273 = vld [vmem:[#allocation3 + $0x20] sm:$0xff]
        %v3274 = vld [vmem:[#allocation3 + $0x28] sm:$0x3]
        %v3275 = vld [vmem:[#allocation3 + $0x30] sm:$0xff]
        %v3276 = vld [vmem:[#allocation3 + $0x38] sm:$0x3]
        %v3277 = vld [vmem:[#allocation3 + $0x40] sm:$0xff]
        %v3278 = vld [vmem:[#allocation3 + $0x48] sm:$0x3]
        %v3279 = vld [vmem:[#allocation3 + $0x50] sm:$0xff]
        %v3280 = vld [vmem:[#allocation3 + $0x58] sm:$0x3]
        %v3281 = vld [vmem:[#allocation3 + $0x60] sm:$0xff]
        %v3282 = vld [vmem:[#allocation3 + $0x68] sm:$0x3]
        %v3283 = vld [vmem:[#allocation3 + $0x70] sm:$0xff]
        %v3284 = vld [vmem:[#allocation3 + $0x78] sm:$0x3]
        %v3285 = vld [vmem:[#allocation3 + $0x80] sm:$0xff]
        %v3286 = vld [vmem:[#allocation3 + $0x88] sm:$0x3]
        %v3287 = vld [vmem:[#allocation3 + $0x90] sm:$0xff]
        %v3288 = vld [vmem:[#allocation3 + $0x98] sm:$0x3]
        %v3305 = vrot.slane %v3269, 1
        %v3306 = vrot.slane %v3270, 1
        %v3307 = vsel %vm652, %v3305, %v3306
        %v3308 = vrot.slane %v3271, 1
        %v3309 = vrot.slane %v3272, 1
        %v3310 = vsel %vm652, %v3308, %v3309
        %v3311 = vrot.slane %v3273, 1
        %v3312 = vrot.slane %v3274, 1
        %v3313 = vsel %vm652, %v3311, %v3312
        %v3314 = vrot.slane %v3275, 1
        %v3315 = vrot.slane %v3276, 1
        %v3316 = vsel %vm652, %v3314, %v3315
        %v3317 = vrot.slane %v3277, 1
        %v3318 = vrot.slane %v3278, 1
        %v3319 = vsel %vm652, %v3317, %v3318
        %v3320 = vrot.slane %v3279, 1
        %v3321 = vrot.slane %v3280, 1
        %v3322 = vsel %vm652, %v3320, %v3321
        %v3323 = vrot.slane %v3281, 1
        %v3324 = vrot.slane %v3282, 1
        %v3325 = vsel %vm652, %v3323, %v3324
        %v3326 = vrot.slane %v3283, 1
        %v3327 = vrot.slane %v3284, 1
        %v3328 = vsel %vm652, %v3326, %v3327
        %v3337 = vrot.slane %v3269, 2
        %v3338 = vrot.slane %v3270, 2
        %v3339 = vsel %vm765, %v3337, %v3338
        %v3340 = vrot.slane %v3271, 2
        %v3341 = vrot.slane %v3272, 2
        %v3342 = vsel %vm765, %v3340, %v3341
        %v3343 = vrot.slane %v3273, 2
        %v3344 = vrot.slane %v3274, 2
        %v3345 = vsel %vm765, %v3343, %v3344
        %v3346 = vrot.slane %v3275, 2
        %v3347 = vrot.slane %v3276, 2
        %v3348 = vsel %vm765, %v3346, %v3347
        %v3349 = vrot.slane %v3277, 2
        %v3350 = vrot.slane %v3278, 2
        %v3351 = vsel %vm765, %v3349, %v3350
        %v3352 = vrot.slane %v3279, 2
        %v3353 = vrot.slane %v3280, 2
        %v3354 = vsel %vm765, %v3352, %v3353
        %v3355 = vrot.slane %v3281, 2
        %v3356 = vrot.slane %v3282, 2
        %v3357 = vsel %vm765, %v3355, %v3356
        %v3358 = vrot.slane %v3283, 2
        %v3359 = vrot.slane %v3284, 2
        %v3360 = vsel %vm765, %v3358, %v3359
        %v3371 = vrot.slane %v3285, 1
        %v3372 = vrot.slane %v3286, 1
        %v3373 = vsel %vm652, %v3371, %v3372
        %v3375 = vrot.slane %v3285, 2
        %v3376 = vrot.slane %v3286, 2
        %v3377 = vsel %vm765, %v3375, %v3376
        %v3381 = vrot.slane %v3287, 1
        %v3382 = vrot.slane %v3288, 1
        %v3383 = vsel %vm652, %v3381, %v3382
        %v3385 = vrot.slane %v3287, 2
        %v3386 = vrot.slane %v3288, 2
        %v3387 = vsel %vm765, %v3385, %v3386
        %v3389 = vld [vmem:[#allocation5] sm:$0xff]
        %v3390 = vld [vmem:[#allocation5 + $0x8] sm:$0xff]
        %v3391 = vld [vmem:[#allocation5 + $0x10] sm:$0xff]
        %v3392 = vld [vmem:[#allocation5 + $0x18] sm:$0xff]
        %v3393 = vld [vmem:[#allocation5 + $0x20] sm:$0xff]
        %v3394 = vld [vmem:[#allocation5 + $0x28] sm:$0xff]
        %v3395 = vld [vmem:[#allocation5 + $0x30] sm:$0xff]
        %v3396 = vld [vmem:[#allocation5 + $0x38] sm:$0xff]
        %v3397 = vld [vmem:[#allocation5 + $0x40] sm:$0xff]
        %v3398 = vld [vmem:[#allocation5 + $0x48] sm:$0xff]
        %v3399 = vld [vmem:[#allocation5 + $0x50] sm:$0xff]
        %v3400 = vld [vmem:[#allocation5 + $0x58] sm:$0xff]
        %v3401 = vld [vmem:[#allocation5 + $0x60] sm:$0xff]
        %v3402 = vld [vmem:[#allocation5 + $0x68] sm:$0xff]
        %v3403 = vld [vmem:[#allocation5 + $0x70] sm:$0xff]
        %v3404 = vld [vmem:[#allocation5 + $0x78] sm:$0xff]
        %v3405 = vld [vmem:[#allocation5 + $0x80] sm:$0xff]
        %v3406 = vld [vmem:[#allocation5 + $0x88] sm:$0xff]
        %v3407 = vld [vmem:[#allocation5 + $0x90] sm:$0xff]
        %v3408 = vld [vmem:[#allocation5 + $0x98] sm:$0xff]
        %v3409 = vld [vmem:[#allocation5 + $0xa0] sm:$0xff]
        %v3410 = vld [vmem:[#allocation5 + $0xa8] sm:$0xff]
        %v3411 = vld [vmem:[#allocation5 + $0xb0] sm:$0xff]
        %v3412 = vld [vmem:[#allocation5 + $0xb8] sm:$0xff]
        %v3413 = vld [vmem:[#allocation5 + $0xc0] sm:$0xff]
        %v3414 = vld [vmem:[#allocation5 + $0xc8] sm:$0xff]
        %v3415 = vld [vmem:[#allocation5 + $0xd0] sm:$0xff]
        %v3416 = vld [vmem:[#allocation5 + $0xd8] sm:$0xff]
        %v3417 = vld [vmem:[#allocation5 + $0xe0] sm:$0xff]
        %v3418 = vld [vmem:[#allocation5 + $0xe8] sm:$0xff]
        %v3419 = vld [vmem:[#allocation5 + $0xf0] sm:$0xff]
        %v3420 = vld [vmem:[#allocation5 + $0xf8] sm:$0xff]
        %v3421 = vld [vmem:[#allocation5 + $0x100] sm:$0xff]
        %v3422 = vld [vmem:[#allocation5 + $0x108] sm:$0xff]
        %v3423 = vld [vmem:[#allocation5 + $0x110] sm:$0xff]
        %v3424 = vld [vmem:[#allocation5 + $0x118] sm:$0xff]
        %v3425 = vld [vmem:[#allocation5 + $0x120] sm:$0xff]
        %v3426 = vld [vmem:[#allocation5 + $0x128] sm:$0xff]
        %v3427 = vld [vmem:[#allocation5 + $0x130] sm:$0xff]
        %v3428 = vld [vmem:[#allocation5 + $0x138] sm:$0xff]
        %v3429 = vld [vmem:[#allocation5 + $0x140] sm:$0xff]
        %v3430 = vld [vmem:[#allocation5 + $0x148] sm:$0xff]
        %v3431 = vld [vmem:[#allocation5 + $0x150] sm:$0xff]
        %v3432 = vld [vmem:[#allocation5 + $0x158] sm:$0xff]
        %v3433 = vld [vmem:[#allocation5 + $0x160] sm:$0xff]
        %v3434 = vld [vmem:[#allocation5 + $0x168] sm:$0xff]
        %v3435 = vld [vmem:[#allocation5 + $0x170] sm:$0xff]
        %v3436 = vld [vmem:[#allocation5 + $0x178] sm:$0xff]
        %v3437 = vld [vmem:[#allocation5 + $0x180] sm:$0xff]
        %v3438 = vld [vmem:[#allocation5 + $0x188] sm:$0xff]
        %v3439 = vld [vmem:[#allocation5 + $0x190] sm:$0xff]
        %v3440 = vld [vmem:[#allocation5 + $0x198] sm:$0xff]
        %v3441 = vld [vmem:[#allocation5 + $0x1a0] sm:$0xff]
        %v3442 = vld [vmem:[#allocation5 + $0x1a8] sm:$0xff]
        %v3443 = vld [vmem:[#allocation5 + $0x1b0] sm:$0xff]
        %v3444 = vld [vmem:[#allocation5 + $0x1b8] sm:$0xff]
        %v3445 = vld [vmem:[#allocation5 + $0x1c0] sm:$0xff]
        %v3446 = vld [vmem:[#allocation5 + $0x1c8] sm:$0xff]
        %v3447 = vld [vmem:[#allocation5 + $0x1d0] sm:$0xff]
        %v3448 = vld [vmem:[#allocation5 + $0x1d8] sm:$0xff]
        %v3449 = vld [vmem:[#allocation5 + $0x1e0] sm:$0xff]
        %v3450 = vld [vmem:[#allocation5 + $0x1e8] sm:$0xff]
        %v3451 = vld [vmem:[#allocation5 + $0x1f0] sm:$0xff]
        %v3452 = vld [vmem:[#allocation5 + $0x1f8] sm:$0xff]
        %v3453 = vld [vmem:[#allocation5 + $0x200] sm:$0xff]
        %v3454 = vld [vmem:[#allocation5 + $0x208] sm:$0xff]
        %v3455 = vld [vmem:[#allocation5 + $0x210] sm:$0xff]
        %v3456 = vld [vmem:[#allocation5 + $0x218] sm:$0xff]
        %v3457 = vld [vmem:[#allocation5 + $0x220] sm:$0xff]
        %v3458 = vld [vmem:[#allocation5 + $0x228] sm:$0xff]
        %v3459 = vld [vmem:[#allocation5 + $0x230] sm:$0xff]
        %v3460 = vld [vmem:[#allocation5 + $0x238] sm:$0xff]
        %v3461 = vld [vmem:[#allocation5 + $0x240] sm:$0xff]
        %v3462 = vld [vmem:[#allocation5 + $0x248] sm:$0xff]
        %v3463 = vld [vmem:[#allocation5 + $0x250] sm:$0xff]
        %v3464 = vld [vmem:[#allocation5 + $0x258] sm:$0xff]
        %v3465 = vld [vmem:[#allocation5 + $0x260] sm:$0xff]
        %v3466 = vld [vmem:[#allocation5 + $0x268] sm:$0xff]
        %v3467 = vld [vmem:[#allocation5 + $0x270] sm:$0xff]
        %v3468 = vld [vmem:[#allocation5 + $0x278] sm:$0xff]
        %v3469 = vld [vmem:[#allocation5 + $0x280] sm:$0xff]
        %v3470 = vld [vmem:[#allocation5 + $0x288] sm:$0xff]
        %v3471 = vld [vmem:[#allocation5 + $0x290] sm:$0xff]
        %v3472 = vld [vmem:[#allocation5 + $0x298] sm:$0xff]
        %v3473 = vld [vmem:[#allocation5 + $0x2a0] sm:$0xff]
        %v3474 = vld [vmem:[#allocation5 + $0x2a8] sm:$0xff]
        %v3475 = vld [vmem:[#allocation5 + $0x2b0] sm:$0xff]
        %v3476 = vld [vmem:[#allocation5 + $0x2b8] sm:$0xff]
        %v3477 = vld [vmem:[#allocation5 + $0x2c0] sm:$0xff]
        %v3478 = vld [vmem:[#allocation5 + $0x2c8] sm:$0xff]
        %v3479 = vld [vmem:[#allocation5 + $0x2d0] sm:$0xff]
        %v3480 = vld [vmem:[#allocation5 + $0x2d8] sm:$0xff]
        %v3481 = vld [vmem:[#allocation5 + $0x2e0] sm:$0xff]
        %v3482 = vld [vmem:[#allocation5 + $0x2e8] sm:$0xff]
        %v3483 = vld [vmem:[#allocation5 + $0x2f0] sm:$0xff]
        %v3484 = vld [vmem:[#allocation5 + $0x2f8] sm:$0xff]
        %v3485 = vld [vmem:[#allocation5 + $0x300] sm:$0xff]
        %v3486 = vld [vmem:[#allocation5 + $0x308] sm:$0xff]
        %v3487 = vld [vmem:[#allocation5 + $0x310] sm:$0xff]
        %v3488 = vld [vmem:[#allocation5 + $0x318] sm:$0xff]
        %v3489 = vld [vmem:[#allocation5 + $0x320] sm:$0xff]
        %v3490 = vld [vmem:[#allocation5 + $0x328] sm:$0xff]
        %v3491 = vld [vmem:[#allocation5 + $0x330] sm:$0xff]
        %v3492 = vld [vmem:[#allocation5 + $0x338] sm:$0xff]
        %v3493 = vld [vmem:[#allocation5 + $0x340] sm:$0xff]
        %v3494 = vld [vmem:[#allocation5 + $0x348] sm:$0xff]
        %v3495 = vld [vmem:[#allocation5 + $0x350] sm:$0xff]
        %v3496 = vld [vmem:[#allocation5 + $0x358] sm:$0xff]
        %v3497 = vld [vmem:[#allocation5 + $0x360] sm:$0xff]
        %v3498 = vld [vmem:[#allocation5 + $0x368] sm:$0xff]
        %v3499 = vld [vmem:[#allocation5 + $0x370] sm:$0xff]
        %v3500 = vld [vmem:[#allocation5 + $0x378] sm:$0xff]
        %v3501 = vld [vmem:[#allocation5 + $0x380] sm:$0xff]
        %v3502 = vld [vmem:[#allocation5 + $0x388] sm:$0xff]
        %v3503 = vld [vmem:[#allocation5 + $0x390] sm:$0xff]
        %v3504 = vld [vmem:[#allocation5 + $0x398] sm:$0xff]
        %v3505 = vld [vmem:[#allocation5 + $0x3a0] sm:$0xff]
        %v3506 = vld [vmem:[#allocation5 + $0x3a8] sm:$0xff]
        %v3507 = vld [vmem:[#allocation5 + $0x3b0] sm:$0xff]
        %v3508 = vld [vmem:[#allocation5 + $0x3b8] sm:$0xff]
        %v3509 = vld [vmem:[#allocation5 + $0x3c0] sm:$0xff]
        %v3510 = vld [vmem:[#allocation5 + $0x3c8] sm:$0xff]
        %v3511 = vld [vmem:[#allocation5 + $0x3d0] sm:$0xff]
        %v3512 = vld [vmem:[#allocation5 + $0x3d8] sm:$0xff]
        %v3513 = vld [vmem:[#allocation5 + $0x3e0] sm:$0xff]
        %v3514 = vld [vmem:[#allocation5 + $0x3e8] sm:$0xff]
        %v3515 = vld [vmem:[#allocation5 + $0x3f0] sm:$0xff]
        %v3516 = vld [vmem:[#allocation5 + $0x3f8] sm:$0xff]
        %v3517 = vld [vmem:[#allocation5 + $0x400] sm:$0xff]
        %v3518 = vld [vmem:[#allocation5 + $0x408] sm:$0xff]
        %v3519 = vld [vmem:[#allocation5 + $0x410] sm:$0xff]
        %v3520 = vld [vmem:[#allocation5 + $0x418] sm:$0xff]
        %v3521 = vld [vmem:[#allocation5 + $0x420] sm:$0xff]
        %v3522 = vld [vmem:[#allocation5 + $0x428] sm:$0xff]
        %v3523 = vld [vmem:[#allocation5 + $0x430] sm:$0xff]
        %v3524 = vld [vmem:[#allocation5 + $0x438] sm:$0xff]
        %v3525 = vld [vmem:[#allocation5 + $0x440] sm:$0xff]
        %v3526 = vld [vmem:[#allocation5 + $0x448] sm:$0xff]
        %v3527 = vld [vmem:[#allocation5 + $0x450] sm:$0xff]
        %v3528 = vld [vmem:[#allocation5 + $0x458] sm:$0xff]
        %v3529 = vld [vmem:[#allocation5 + $0x460] sm:$0xff]
        %v3530 = vld [vmem:[#allocation5 + $0x468] sm:$0xff]
        %v3531 = vld [vmem:[#allocation5 + $0x470] sm:$0xff]
        %v3532 = vld [vmem:[#allocation5 + $0x478] sm:$0xff]
        %v3533 = vld [vmem:[%s4] sm:$0x1]
        %v3535 = vlaneseq
        %v3536 = vshrl.u32 %v3535, 7
        %v3537 = vsub.s32 0, %v3536
        %v3538 = vrot.slane %v3533, %v3537
        %3540 = vmatprep.subr.mxu0 0.0
        %3541 = vmatpush1.msra.mxu0 %v3389
        %3542 = vmatprep.subr.mxu0 0.0
        %3543 = vmatpush1.msra.mxu0 %v3390
        %3544 = vmatprep.subr.mxu0 0.0
        %3545 = vmatpush1.msra.mxu0 %v3391
        %3546 = vmatprep.subr.mxu0 0.0
        %3547 = vmatpush1.msra.mxu0 %v3392
        %3548 = vmatprep.subr.mxu0 0.0
        %3549 = vmatpush1.msra.mxu0 %v3393
        %3550 = vmatprep.subr.mxu0 0.0
        %3551 = vmatpush1.msra.mxu0 %v3394
        %3552 = vmatprep.subr.mxu0 0.0
        %3553 = vmatpush1.msra.mxu0 %v3395
        %3554 = vmatprep.subr.mxu0 0.0
        %3555 = vmatpush1.msra.mxu0 %v3396
        %3556 = vmatprep.subr.mxu0 0.0
        %3557 = vmatpush1.msra.mxu0 %v3397
        %3558 = vmatprep.subr.mxu0 0.0
        %3559 = vmatpush1.msra.mxu0 %v3398
        %3560 = vmatprep.subr.mxu0 0.0
        %3561 = vmatpush1.msra.mxu0 %v3399
        %3562 = vmatprep.subr.mxu0 0.0
        %3563 = vmatpush1.msra.mxu0 %v3400
        %3564 = vmatprep.subr.mxu0 0.0
        %3565 = vmatpush1.msra.mxu0 %v3401
        %3566 = vmatprep.subr.mxu0 0.0
        %3567 = vmatpush1.msra.mxu0 %v3402
        %3568 = vmatprep.subr.mxu0 0.0
        %3569 = vmatpush1.msra.mxu0 %v3403
        %3570 = vmatprep.subr.mxu0 0.0
        %3571 = vmatpush1.msra.mxu0 %v3404
        %3572 = vmatprep.subr.mxu0 0.0
        %3573 = vmatpush1.msra.mxu0 %v3405
        %3574 = vmatprep.subr.mxu0 0.0
        %3575 = vmatpush1.msra.mxu0 %v3406
        %3576 = vmatprep.subr.mxu0 0.0
        %3577 = vmatpush1.msra.mxu0 %v3407
        %3578 = vmatprep.subr.mxu0 0.0
        %3579 = vmatpush1.msra.mxu0 %v3408
        %3580 = vmatprep.subr.mxu0 0.0
        %3581 = vmatpush1.msra.mxu0 %v3409
        %3582 = vmatprep.subr.mxu0 0.0
        %3583 = vmatpush1.msra.mxu0 %v3410
        %3584 = vmatprep.subr.mxu0 0.0
        %3585 = vmatpush1.msra.mxu0 %v3411
        %3586 = vmatprep.subr.mxu0 0.0
        %3587 = vmatpush1.msra.mxu0 %v3412
        %3588 = vmatprep.subr.mxu0 0.0
        %3589 = vmatpush1.msra.mxu0 %v3413
        %3590 = vmatprep.subr.mxu0 0.0
        %3591 = vmatpush1.msra.mxu0 %v3414
        %3592 = vmatprep.subr.mxu0 0.0
        %3593 = vmatpush1.msra.mxu0 %v3415
        %3594 = vmatprep.subr.mxu0 0.0
        %3595 = vmatpush1.msra.mxu0 %v3416
        %3596 = vmatprep.subr.mxu0 0.0
        %3597 = vmatpush1.msra.mxu0 %v3417
        %3598 = vmatprep.subr.mxu0 0.0
        %3599 = vmatpush1.msra.mxu0 %v3418
        %3600 = vmatprep.subr.mxu0 0.0
        %3601 = vmatpush1.msra.mxu0 %v3419
        %3602 = vmatprep.subr.mxu0 0.0
        %3603 = vmatpush1.msra.mxu0 %v3420
        %3604 = vmatprep.mubr.f32.mxu0 %v3307
        %3605 = vmatmul.mubr.f32.gmra.mrb[0].mxu0 %v3269
        %v3606 = vpop.f32.mrb[0].mxu0
        %v3607 = vadd.f32 %v3538, %v3606
        %v3608 = vpop.f32.mrb[0].mxu0
        %3609 = vmatprep.mubr.f32.mxu0 %v3310
        %3610 = vmatmul.mubr.f32.gmra.mrb[0].mxu0 %v3271
        %v3611 = vpop.f32.mrb[0].mxu0
        %v3612 = vadd.f32 %v3538, %v3611
        %v3613 = vpop.f32.mrb[0].mxu0
        %3614 = vmatprep.mubr.f32.mxu0 %v3313
        %3615 = vmatmul.mubr.f32.gmra.mrb[0].mxu0 %v3273
        %v3616 = vpop.f32.mrb[0].mxu0
        %v3617 = vadd.f32 %v3538, %v3616
        %v3618 = vpop.f32.mrb[0].mxu0
        %3619 = vmatprep.mubr.f32.mxu0 %v3316
        %3620 = vmatmul.mubr.f32.gmra.mrb[0].mxu0 %v3275
        %v3621 = vpop.f32.mrb[0].mxu0
        %v3622 = vadd.f32 %v3538, %v3621
        %v3623 = vpop.f32.mrb[0].mxu0
        %3624 = vmatprep.mubr.f32.mxu0 %v3319
        %3625 = vmatmul.mubr.f32.gmra.mrb[0].mxu0 %v3277
        %v3626 = vpop.f32.mrb[0].mxu0
        %v3627 = vadd.f32 %v3538, %v3626
        %v3628 = vpop.f32.mrb[0].mxu0
        %3629 = vmatprep.mubr.f32.mxu0 %v3322
        %3630 = vmatmul.mubr.f32.gmra.mrb[0].mxu0 %v3279
        %v3631 = vpop.f32.mrb[0].mxu0
        %v3632 = vadd.f32 %v3538, %v3631
        %v3633 = vpop.f32.mrb[0].mxu0
        %3634 = vmatprep.mubr.f32.mxu0 %v3325
        %3635 = vmatmul.mubr.f32.gmra.mrb[0].mxu0 %v3281
        %v3636 = vpop.f32.mrb[0].mxu0
        %v3637 = vadd.f32 %v3538, %v3636
        %v3638 = vpop.f32.mrb[0].mxu0
        %3639 = vmatprep.mubr.f32.mxu0 %v3328
        %3640 = vmatmul.mubr.f32.gmra.mrb[0].mxu0 %v3283
        %v3641 = vpop.f32.mrb[0].mxu0
        %v3642 = vadd.f32 %v3538, %v3641
        %v3643 = vpop.f32.mrb[0].mxu0
        %3644 = vdwg.mxu0
        %3645 = vmatprep.subr.mxu0 0.0
        %3646 = vmatpush1.msra.mxu0 %v3421
        %3647 = vmatprep.subr.mxu0 0.0
        %3648 = vmatpush1.msra.mxu0 %v3422
        %3649 = vmatprep.subr.mxu0 0.0
        %3650 = vmatpush1.msra.mxu0 %v3423
        %3651 = vmatprep.subr.mxu0 0.0
        %3652 = vmatpush1.msra.mxu0 %v3424
        %3653 = vmatprep.subr.mxu0 0.0
        %3654 = vmatpush1.msra.mxu0 %v3425
        %3655 = vmatprep.subr.mxu0 0.0
        %3656 = vmatpush1.msra.mxu0 %v3426
        %3657 = vmatprep.subr.mxu0 0.0
        %3658 = vmatpush1.msra.mxu0 %v3427
        %3659 = vmatprep.subr.mxu0 0.0
        %3660 = vmatpush1.msra.mxu0 %v3428
        %3661 = vmatprep.subr.mxu0 0.0
        %3662 = vmatpush1.msra.mxu0 %v3429
        %3663 = vmatprep.subr.mxu0 0.0
        %3664 = vmatpush1.msra.mxu0 %v3430
        %3665 = vmatprep.subr.mxu0 0.0
        %3666 = vmatpush1.msra.mxu0 %v3431
        %3667 = vmatprep.subr.mxu0 0.0
        %3668 = vmatpush1.msra.mxu0 %v3432
        %3669 = vmatprep.subr.mxu0 0.0
        %3670 = vmatpush1.msra.mxu0 %v3433
        %3671 = vmatprep.subr.mxu0 0.0
        %3672 = vmatpush1.msra.mxu0 %v3434
        %3673 = vmatprep.subr.mxu0 0.0
        %3674 = vmatpush1.msra.mxu0 %v3435
        %3675 = vmatprep.subr.mxu0 0.0
        %3676 = vmatpush1.msra.mxu0 %v3436
        %3677 = vmatprep.subr.mxu0 0.0
        %3678 = vmatpush1.msra.mxu0 %v3437
        %3679 = vmatprep.subr.mxu0 0.0
        %3680 = vmatpush1.msra.mxu0 %v3438
        %3681 = vmatprep.subr.mxu0 0.0
        %3682 = vmatpush1.msra.mxu0 %v3439
        %3683 = vmatprep.subr.mxu0 0.0
        %3684 = vmatpush1.msra.mxu0 %v3440
        %3685 = vmatprep.subr.mxu0 0.0
        %3686 = vmatpush1.msra.mxu0 %v3441
        %3687 = vmatprep.subr.mxu0 0.0
        %3688 = vmatpush1.msra.mxu0 %v3442
        %3689 = vmatprep.subr.mxu0 0.0
        %3690 = vmatpush1.msra.mxu0 %v3443
        %3691 = vmatprep.subr.mxu0 0.0
        %3692 = vmatpush1.msra.mxu0 %v3444
        %3693 = vmatprep.subr.mxu0 0.0
        %3694 = vmatpush1.msra.mxu0 %v3445
        %3695 = vmatprep.subr.mxu0 0.0
        %3696 = vmatpush1.msra.mxu0 %v3446
        %3697 = vmatprep.subr.mxu0 0.0
        %3698 = vmatpush1.msra.mxu0 %v3447
        %3699 = vmatprep.subr.mxu0 0.0
        %3700 = vmatpush1.msra.mxu0 %v3448
        %3701 = vmatprep.subr.mxu0 0.0
        %3702 = vmatpush1.msra.mxu0 %v3449
        %3703 = vmatprep.subr.mxu0 0.0
        %3704 = vmatpush1.msra.mxu0 %v3450
        %3705 = vmatprep.subr.mxu0 0.0
        %3706 = vmatpush1.msra.mxu0 %v3451
        %3707 = vmatprep.subr.mxu0 0.0
        %3708 = vmatpush1.msra.mxu0 %v3452
        %3709 = vmatprep.mubr.f32.mxu0 %v3271
        %3710 = vmatmul.mubr.f32.gmra.mrb[0].mxu0 %v3339
        %v3711 = vpop.f32.mrb[0].mxu0
        %v3712 = vadd.f32 %v3607, %v3711
        %v3713 = vpop.f32.mrb[0].mxu0
        %3714 = vmatprep.mubr.f32.mxu0 %v3273
        %3715 = vmatmul.mubr.f32.gmra.mrb[0].mxu0 %v3342
        %v3716 = vpop.f32.mrb[0].mxu0
        %v3717 = vadd.f32 %v3612, %v3716
        %v3718 = vpop.f32.mrb[0].mxu0
        %3719 = vmatprep.mubr.f32.mxu0 %v3275
        %3720 = vmatmul.mubr.f32.gmra.mrb[0].mxu0 %v3345
        %v3721 = vpop.f32.mrb[0].mxu0
        %v3722 = vadd.f32 %v3617, %v3721
        %v3723 = vpop.f32.mrb[0].mxu0
        %3724 = vmatprep.mubr.f32.mxu0 %v3277
        %3725 = vmatmul.mubr.f32.gmra.mrb[0].mxu0 %v3348
        %v3726 = vpop.f32.mrb[0].mxu0
        %v3727 = vadd.f32 %v3622, %v3726
        %v3728 = vpop.f32.mrb[0].mxu0
        %3729 = vmatprep.mubr.f32.mxu0 %v3279
        %3730 = vmatmul.mubr.f32.gmra.mrb[0].mxu0 %v3351
        %v3731 = vpop.f32.mrb[0].mxu0
        %v3732 = vadd.f32 %v3627, %v3731
        %v3733 = vpop.f32.mrb[0].mxu0
        %3734 = vmatprep.mubr.f32.mxu0 %v3281
        %3735 = vmatmul.mubr.f32.gmra.mrb[0].mxu0 %v3354
        %v3736 = vpop.f32.mrb[0].mxu0
        %v3737 = vadd.f32 %v3632, %v3736
        %v3738 = vpop.f32.mrb[0].mxu0
        %3739 = vmatprep.mubr.f32.mxu0 %v3283
        %3740 = vmatmul.mubr.f32.gmra.mrb[0].mxu0 %v3357
        %v3741 = vpop.f32.mrb[0].mxu0
        %v3742 = vadd.f32 %v3637, %v3741
        %v3743 = vpop.f32.mrb[0].mxu0
        %3744 = vmatprep.mubr.f32.mxu0 %v3285
        %3745 = vmatmul.mubr.f32.gmra.mrb[0].mxu0 %v3360
        %v3746 = vpop.f32.mrb[0].mxu0
        %v3747 = vadd.f32 %v3642, %v3746
        %v3748 = vpop.f32.mrb[0].mxu0
        %3749 = vdwg.mxu0
        %3750 = vmatprep.subr.mxu0 0.0
        %3751 = vmatpush1.msra.mxu0 %v3453
        %3752 = vmatprep.subr.mxu0 0.0
        %3753 = vmatpush1.msra.mxu0 %v3454
        %3754 = vmatprep.subr.mxu0 0.0
        %3755 = vmatpush1.msra.mxu0 %v3455
        %3756 = vmatprep.subr.mxu0 0.0
        %3757 = vmatpush1.msra.mxu0 %v3456
        %3758 = vmatprep.subr.mxu0 0.0
        %3759 = vmatpush1.msra.mxu0 %v3457
        %3760 = vmatprep.subr.mxu0 0.0
        %3761 = vmatpush1.msra.mxu0 %v3458
        %3762 = vmatprep.subr.mxu0 0.0
        %3763 = vmatpush1.msra.mxu0 %v3459
        %3764 = vmatprep.subr.mxu0 0.0
        %3765 = vmatpush1.msra.mxu0 %v3460
        %3766 = vmatprep.subr.mxu0 0.0
        %3767 = vmatpush1.msra.mxu0 %v3461
        %3768 = vmatprep.subr.mxu0 0.0
        %3769 = vmatpush1.msra.mxu0 %v3462
        %3770 = vmatprep.subr.mxu0 0.0
        %3771 = vmatpush1.msra.mxu0 %v3463
        %3772 = vmatprep.subr.mxu0 0.0
        %3773 = vmatpush1.msra.mxu0 %v3464
        %3774 = vmatprep.subr.mxu0 0.0
        %3775 = vmatpush1.msra.mxu0 %v3465
        %3776 = vmatprep.subr.mxu0 0.0
        %3777 = vmatpush1.msra.mxu0 %v3466
        %3778 = vmatprep.subr.mxu0 0.0
        %3779 = vmatpush1.msra.mxu0 %v3467
        %3780 = vmatprep.subr.mxu0 0.0
        %3781 = vmatpush1.msra.mxu0 %v3468
        %3782 = vmatprep.subr.mxu0 0.0
        %3783 = vmatpush1.msra.mxu0 %v3469
        %3784 = vmatprep.subr.mxu0 0.0
        %3785 = vmatpush1.msra.mxu0 %v3470
        %3786 = vmatprep.subr.mxu0 0.0
        %3787 = vmatpush1.msra.mxu0 %v3471
        %3788 = vmatprep.subr.mxu0 0.0
        %3789 = vmatpush1.msra.mxu0 %v3472
        %3790 = vmatprep.subr.mxu0 0.0
        %3791 = vmatpush1.msra.mxu0 %v3473
        %3792 = vmatprep.subr.mxu0 0.0
        %3793 = vmatpush1.msra.mxu0 %v3474
        %3794 = vmatprep.subr.mxu0 0.0
        %3795 = vmatpush1.msra.mxu0 %v3475
        %3796 = vmatprep.subr.mxu0 0.0
        %3797 = vmatpush1.msra.mxu0 %v3476
        %3798 = vmatprep.subr.mxu0 0.0
        %3799 = vmatpush1.msra.mxu0 %v3477
        %3800 = vmatprep.subr.mxu0 0.0
        %3801 = vmatpush1.msra.mxu0 %v3478
        %3802 = vmatprep.subr.mxu0 0.0
        %3803 = vmatpush1.msra.mxu0 %v3479
        %3804 = vmatprep.subr.mxu0 0.0
        %3805 = vmatpush1.msra.mxu0 %v3480
        %3806 = vmatprep.subr.mxu0 0.0
        %3807 = vmatpush1.msra.mxu0 %v3481
        %3808 = vmatprep.subr.mxu0 0.0
        %3809 = vmatpush1.msra.mxu0 %v3482
        %3810 = vmatprep.subr.mxu0 0.0
        %3811 = vmatpush1.msra.mxu0 %v3483
        %3812 = vmatprep.subr.mxu0 0.0
        %3813 = vmatpush1.msra.mxu0 %v3484
        %3814 = vmatprep.mubr.f32.mxu0 %v3342
        %3815 = vmatmul.mubr.f32.gmra.mrb[0].mxu0 %v3310
        %v3816 = vpop.f32.mrb[0].mxu0
        %v3817 = vadd.f32 %v3712, %v3816
        %v3818 = vpop.f32.mrb[0].mxu0
        %3819 = vmatprep.mubr.f32.mxu0 %v3345
        %3820 = vmatmul.mubr.f32.gmra.mrb[0].mxu0 %v3313
        %v3821 = vpop.f32.mrb[0].mxu0
        %v3822 = vadd.f32 %v3717, %v3821
        %v3823 = vpop.f32.mrb[0].mxu0
        %3824 = vmatprep.mubr.f32.mxu0 %v3348
        %3825 = vmatmul.mubr.f32.gmra.mrb[0].mxu0 %v3316
        %v3826 = vpop.f32.mrb[0].mxu0
        %v3827 = vadd.f32 %v3722, %v3826
        %v3828 = vpop.f32.mrb[0].mxu0
        %3829 = vmatprep.mubr.f32.mxu0 %v3351
        %3830 = vmatmul.mubr.f32.gmra.mrb[0].mxu0 %v3319
        %v3831 = vpop.f32.mrb[0].mxu0
        %v3832 = vadd.f32 %v3727, %v3831
        %v3833 = vpop.f32.mrb[0].mxu0
        %3834 = vmatprep.mubr.f32.mxu0 %v3354
        %3835 = vmatmul.mubr.f32.gmra.mrb[0].mxu0 %v3322
        %v3836 = vpop.f32.mrb[0].mxu0
        %v3837 = vadd.f32 %v3732, %v3836
        %v3838 = vpop.f32.mrb[0].mxu0
        %3839 = vmatprep.mubr.f32.mxu0 %v3357
        %3840 = vmatmul.mubr.f32.gmra.mrb[0].mxu0 %v3325
        %v3841 = vpop.f32.mrb[0].mxu0
        %v3842 = vadd.f32 %v3737, %v3841
        %v3843 = vpop.f32.mrb[0].mxu0
        %3844 = vmatprep.mubr.f32.mxu0 %v3360
        %3845 = vmatmul.mubr.f32.gmra.mrb[0].mxu0 %v3328
        %v3846 = vpop.f32.mrb[0].mxu0
        %v3847 = vadd.f32 %v3742, %v3846
        %v3848 = vpop.f32.mrb[0].mxu0
        %3849 = vmatprep.mubr.f32.mxu0 %v3377
        %3850 = vmatmul.mubr.f32.gmra.mrb[0].mxu0 %v3373
        %v3851 = vpop.f32.mrb[0].mxu0
        %v3852 = vadd.f32 %v3747, %v3851
        %v3853 = vpop.f32.mrb[0].mxu0
        %3854 = vdwg.mxu0
        %3855 = vmatprep.subr.mxu0 0.0
        %3856 = vmatpush1.msra.mxu0 %v3485
        %3857 = vmatprep.subr.mxu0 0.0
        %3858 = vmatpush1.msra.mxu0 %v3486
        %3859 = vmatprep.subr.mxu0 0.0
        %3860 = vmatpush1.msra.mxu0 %v3487
        %3861 = vmatprep.subr.mxu0 0.0
        %3862 = vmatpush1.msra.mxu0 %v3488
        %3863 = vmatprep.subr.mxu0 0.0
        %3864 = vmatpush1.msra.mxu0 %v3489
        %3865 = vmatprep.subr.mxu0 0.0
        %3866 = vmatpush1.msra.mxu0 %v3490
        %3867 = vmatprep.subr.mxu0 0.0
        %3868 = vmatpush1.msra.mxu0 %v3491
        %3869 = vmatprep.subr.mxu0 0.0
        %3870 = vmatpush1.msra.mxu0 %v3492
        %3871 = vmatprep.subr.mxu0 0.0
        %3872 = vmatpush1.msra.mxu0 %v3493
        %3873 = vmatprep.subr.mxu0 0.0
        %3874 = vmatpush1.msra.mxu0 %v3494
        %3875 = vmatprep.subr.mxu0 0.0
        %3876 = vmatpush1.msra.mxu0 %v3495
        %3877 = vmatprep.subr.mxu0 0.0
        %3878 = vmatpush1.msra.mxu0 %v3496
        %3879 = vmatprep.subr.mxu0 0.0
        %3880 = vmatpush1.msra.mxu0 %v3497
        %3881 = vmatprep.subr.mxu0 0.0
        %3882 = vmatpush1.msra.mxu0 %v3498
        %3883 = vmatprep.subr.mxu0 0.0
        %3884 = vmatpush1.msra.mxu0 %v3499
        %3885 = vmatprep.subr.mxu0 0.0
        %3886 = vmatpush1.msra.mxu0 %v3500
        %3887 = vmatprep.subr.mxu0 0.0
        %3888 = vmatpush1.msra.mxu0 %v3501
        %3889 = vmatprep.subr.mxu0 0.0
        %3890 = vmatpush1.msra.mxu0 %v3502
        %3891 = vmatprep.subr.mxu0 0.0
        %3892 = vmatpush1.msra.mxu0 %v3503
        %3893 = vmatprep.subr.mxu0 0.0
        %3894 = vmatpush1.msra.mxu0 %v3504
        %3895 = vmatprep.subr.mxu0 0.0
        %3896 = vmatpush1.msra.mxu0 %v3505
        %3897 = vmatprep.subr.mxu0 0.0
        %3898 = vmatpush1.msra.mxu0 %v3506
        %3899 = vmatprep.subr.mxu0 0.0
        %3900 = vmatpush1.msra.mxu0 %v3507
        %3901 = vmatprep.subr.mxu0 0.0
        %3902 = vmatpush1.msra.mxu0 %v3508
        %3903 = vmatprep.subr.mxu0 0.0
        %3904 = vmatpush1.msra.mxu0 %v3509
        %3905 = vmatprep.subr.mxu0 0.0
        %3906 = vmatpush1.msra.mxu0 %v3510
        %3907 = vmatprep.subr.mxu0 0.0
        %3908 = vmatpush1.msra.mxu0 %v3511
        %3909 = vmatprep.subr.mxu0 0.0
        %3910 = vmatpush1.msra.mxu0 %v3512
        %3911 = vmatprep.subr.mxu0 0.0
        %3912 = vmatpush1.msra.mxu0 %v3513
        %3913 = vmatprep.subr.mxu0 0.0
        %3914 = vmatpush1.msra.mxu0 %v3514
        %3915 = vmatprep.subr.mxu0 0.0
        %3916 = vmatpush1.msra.mxu0 %v3515
        %3917 = vmatprep.subr.mxu0 0.0
        %3918 = vmatpush1.msra.mxu0 %v3516
        %3919 = vmatprep.mubr.f32.mxu0 %v3313
        %3920 = vmatmul.mubr.f32.gmra.mrb[0].mxu0 %v3273
        %v3921 = vpop.f32.mrb[0].mxu0
        %v3922 = vadd.f32 %v3817, %v3921
        %v3923 = vpop.f32.mrb[0].mxu0
        %3924 = vmatprep.mubr.f32.mxu0 %v3316
        %3925 = vmatmul.mubr.f32.gmra.mrb[0].mxu0 %v3275
        %v3926 = vpop.f32.mrb[0].mxu0
        %v3927 = vadd.f32 %v3822, %v3926
        %v3928 = vpop.f32.mrb[0].mxu0
        %3929 = vmatprep.mubr.f32.mxu0 %v3319
        %3930 = vmatmul.mubr.f32.gmra.mrb[0].mxu0 %v3277
        %v3931 = vpop.f32.mrb[0].mxu0
        %v3932 = vadd.f32 %v3827, %v3931
        %v3933 = vpop.f32.mrb[0].mxu0
        %3934 = vmatprep.mubr.f32.mxu0 %v3322
        %3935 = vmatmul.mubr.f32.gmra.mrb[0].mxu0 %v3279
        %v3936 = vpop.f32.mrb[0].mxu0
        %v3937 = vadd.f32 %v3832, %v3936
        %v3938 = vpop.f32.mrb[0].mxu0
        %3939 = vmatprep.mubr.f32.mxu0 %v3325
        %3940 = vmatmul.mubr.f32.gmra.mrb[0].mxu0 %v3281
        %v3941 = vpop.f32.mrb[0].mxu0
        %v3942 = vadd.f32 %v3837, %v3941
        %v3943 = vpop.f32.mrb[0].mxu0
        %3944 = vmatprep.mubr.f32.mxu0 %v3328
        %3945 = vmatmul.mubr.f32.gmra.mrb[0].mxu0 %v3283
        %v3946 = vpop.f32.mrb[0].mxu0
        %v3947 = vadd.f32 %v3842, %v3946
        %v3948 = vpop.f32.mrb[0].mxu0
        %3949 = vmatprep.mubr.f32.mxu0 %v3373
        %3950 = vmatmul.mubr.f32.gmra.mrb[0].mxu0 %v3285
        %v3951 = vpop.f32.mrb[0].mxu0
        %v3952 = vadd.f32 %v3847, %v3951
        %v3953 = vpop.f32.mrb[0].mxu0
        %3954 = vmatprep.mubr.f32.mxu0 %v3383
        %3955 = vmatmul.mubr.f32.gmra.mrb[0].mxu0 %v3287
        %v3956 = vpop.f32.mrb[0].mxu0
        %v3957 = vadd.f32 %v3852, %v3956
        %v3958 = vpop.f32.mrb[0].mxu0
        %3959 = vdwg.mxu0
        %3960 = vmatprep.subr.mxu0 0.0
        %3961 = vmatpush1.msra.mxu0 %v3517
        %3962 = vmatprep.subr.mxu0 0.0
        %3963 = vmatpush1.msra.mxu0 %v3518
        %3964 = vmatprep.subr.mxu0 0.0
        %3965 = vmatpush1.msra.mxu0 %v3519
        %3966 = vmatprep.subr.mxu0 0.0
        %3967 = vmatpush1.msra.mxu0 %v3520
        %3968 = vmatprep.subr.mxu0 0.0
        %3969 = vmatpush1.msra.mxu0 %v3521
        %3970 = vmatprep.subr.mxu0 0.0
        %3971 = vmatpush1.msra.mxu0 %v3522
        %3972 = vmatprep.subr.mxu0 0.0
        %3973 = vmatpush1.msra.mxu0 %v3523
        %3974 = vmatprep.subr.mxu0 0.0
        %3975 = vmatpush1.msra.mxu0 %v3524
        %3976 = vmatprep.subr.mxu0 0.0
        %3977 = vmatpush1.msra.mxu0 %v3525
        %3978 = vmatprep.subr.mxu0 0.0
        %3979 = vmatpush1.msra.mxu0 %v3526
        %3980 = vmatprep.subr.mxu0 0.0
        %3981 = vmatpush1.msra.mxu0 %v3527
        %3982 = vmatprep.subr.mxu0 0.0
        %3983 = vmatpush1.msra.mxu0 %v3528
        %3984 = vmatprep.subr.mxu0 0.0
        %3985 = vmatpush1.msra.mxu0 %v3529
        %3986 = vmatprep.subr.mxu0 0.0
        %3987 = vmatpush1.msra.mxu0 %v3530
        %3988 = vmatprep.subr.mxu0 0.0
        %3989 = vmatpush1.msra.mxu0 %v3531
        %3990 = vmatprep.subr.mxu0 0.0
        %3991 = vmatpush1.msra.mxu0 %v3532
        %3992 = vmatprep.subr.mxu0 0.0
        %3993 = vmatpush1.msra.mxu0 0.0
        %3994 = vmatprep.subr.mxu0 0.0
        %3995 = vmatpush1.msra.mxu0 0.0
        %3996 = vmatprep.subr.mxu0 0.0
        %3997 = vmatpush1.msra.mxu0 0.0
        %3998 = vmatprep.subr.mxu0 0.0
        %3999 = vmatpush1.msra.mxu0 0.0
        %4000 = vmatprep.subr.mxu0 0.0
        %4001 = vmatpush1.msra.mxu0 0.0
        %4002 = vmatprep.subr.mxu0 0.0
        %4003 = vmatpush1.msra.mxu0 0.0
        %4004 = vmatprep.subr.mxu0 0.0
        %4005 = vmatpush1.msra.mxu0 0.0
        %4006 = vmatprep.subr.mxu0 0.0
        %4007 = vmatpush1.msra.mxu0 0.0
        %4008 = vmatprep.subr.mxu0 0.0
        %4009 = vmatpush1.msra.mxu0 0.0
        %4010 = vmatprep.subr.mxu0 0.0
        %4011 = vmatpush1.msra.mxu0 0.0
        %4012 = vmatprep.subr.mxu0 0.0
        %4013 = vmatpush1.msra.mxu0 0.0
        %4014 = vmatprep.subr.mxu0 0.0
        %4015 = vmatpush1.msra.mxu0 0.0
        %4016 = vmatprep.subr.mxu0 0.0
        %4017 = vmatpush1.msra.mxu0 0.0
        %4018 = vmatprep.subr.mxu0 0.0
        %4019 = vmatpush1.msra.mxu0 0.0
        %4020 = vmatprep.subr.mxu0 0.0
        %4021 = vmatpush1.msra.mxu0 0.0
        %4022 = vmatprep.subr.mxu0 0.0
        %4023 = vmatpush1.msra.mxu0 0.0
        %4024 = vmatprep.mubr.f32.mxu0 0.0
        %4025 = vmatmul.mubr.f32.gmra.mrb[0].mxu0 %v3345
        %v4026 = vpop.f32.mrb[0].mxu0
        %v4027 = vadd.f32 %v3922, %v4026
        %v4028 = vpop.f32.mrb[0].mxu0
        %4029 = vmatprep.mubr.f32.mxu0 0.0
        %4030 = vmatmul.mubr.f32.gmra.mrb[0].mxu0 %v3348
        %v4031 = vpop.f32.mrb[0].mxu0
        %v4032 = vadd.f32 %v3927, %v4031
        %v4033 = vpop.f32.mrb[0].mxu0
        %4034 = vmatprep.mubr.f32.mxu0 0.0
        %4035 = vmatmul.mubr.f32.gmra.mrb[0].mxu0 %v3351
        %v4036 = vpop.f32.mrb[0].mxu0
        %v4037 = vadd.f32 %v3932, %v4036
        %v4038 = vpop.f32.mrb[0].mxu0
        %4039 = vmatprep.mubr.f32.mxu0 0.0
        %4040 = vmatmul.mubr.f32.gmra.mrb[0].mxu0 %v3354
        %v4041 = vpop.f32.mrb[0].mxu0
        %v4042 = vadd.f32 %v3937, %v4041
        %v4043 = vpop.f32.mrb[0].mxu0
        %4044 = vmatprep.mubr.f32.mxu0 0.0
        %4045 = vmatmul.mubr.f32.gmra.mrb[0].mxu0 %v3357
        %v4046 = vpop.f32.mrb[0].mxu0
        %v4047 = vadd.f32 %v3942, %v4046
        %v4048 = vpop.f32.mrb[0].mxu0
        %4049 = vmatprep.mubr.f32.mxu0 0.0
        %4050 = vmatmul.mubr.f32.gmra.mrb[0].mxu0 %v3360
        %v4051 = vpop.f32.mrb[0].mxu0
        %v4052 = vadd.f32 %v3947, %v4051
        %v4053 = vpop.f32.mrb[0].mxu0
        %4054 = vmatprep.mubr.f32.mxu0 0.0
        %4055 = vmatmul.mubr.f32.gmra.mrb[0].mxu0 %v3377
        %v4056 = vpop.f32.mrb[0].mxu0
        %v4057 = vadd.f32 %v3952, %v4056
        %v4058 = vpop.f32.mrb[0].mxu0
        %4059 = vmatprep.mubr.f32.mxu0 0.0
        %4060 = vmatmul.mubr.f32.gmra.mrb[0].mxu0 %v3387
        %v4061 = vpop.f32.mrb[0].mxu0
        %v4062 = vadd.f32 %v3957, %v4061
        %v4063 = vpop.f32.mrb[0].mxu0
        %4064 = vdwg.mxu0
        %v4065 = vmax.f32 %v4027, 0.0
        %v4066 = vmax.f32 %v4032, 0.0
        %v4067 = vmax.f32 %v4037, 0.0
        %v4068 = vmax.f32 %v4042, 0.0
        %v4069 = vmax.f32 %v4047, 0.0
        %v4070 = vmax.f32 %v4052, 0.0
        %v4071 = vmax.f32 %v4057, 0.0
        %v4072 = vmax.f32 %v4062, 0.0
        %v4073 = vmax.f32 %v4065, %v4066
        %v4074 = vmax.f32 %v4067, %v4068
        %v4075 = vmax.f32 %v4069, %v4070
        %v4076 = vmax.f32 %v4071, %v4072
        %v4081 = vcombine.high %v4073, %v4073
        %v4083 = vunpack.c.l.s4 1983009808
        %v4084 = vunpack.c.0.s8 %v4083
        %v4085 = vlaneseq
        %v4086 = vshrl.u32 %v4085, 7
        %v4087 = vsub.s32 %v4084, %v4086
        %v4088 = vrot.slane %v4073, %v4087
        %v4090 = vunpack.c.l.s4 1983009808
        %v4091 = vunpack.c.0.s8 %v4090
        %v4092 = vlaneseq
        %v4093 = vshrl.u32 %v4092, 7
        %v4094 = vsub.s32 %v4091, %v4093
        %v4095 = vrot.slane %v4081, %v4094
        %v4096 = vcombine.high %v4088, %v4088
        %v4097 = vcombine.high %v4095, %v4095
        %v4098 = vcombine.high %v4074, %v4074
        %v4100 = vunpack.c.l.s4 1983009808
        %v4101 = vunpack.c.0.s8 %v4100
        %v4102 = vlaneseq
        %v4103 = vshrl.u32 %v4102, 7
        %v4104 = vsub.s32 %v4101, %v4103
        %v4105 = vrot.slane %v4074, %v4104
        %v4107 = vunpack.c.l.s4 1983009808
        %v4108 = vunpack.c.0.s8 %v4107
        %v4109 = vlaneseq
        %v4110 = vshrl.u32 %v4109, 7
        %v4111 = vsub.s32 %v4108, %v4110
        %v4112 = vrot.slane %v4098, %v4111
        %v4113 = vcombine.high %v4105, %v4105
        %v4114 = vcombine.high %v4112, %v4112
        %v4115 = vcombine.high %v4075, %v4075
        %v4117 = vunpack.c.l.s4 1983009808
        %v4118 = vunpack.c.0.s8 %v4117
        %v4119 = vlaneseq
        %v4120 = vshrl.u32 %v4119, 7
        %v4121 = vsub.s32 %v4118, %v4120
        %v4122 = vrot.slane %v4075, %v4121
        %v4124 = vunpack.c.l.s4 1983009808
        %v4125 = vunpack.c.0.s8 %v4124
        %v4126 = vlaneseq
        %v4127 = vshrl.u32 %v4126, 7
        %v4128 = vsub.s32 %v4125, %v4127
        %v4129 = vrot.slane %v4115, %v4128
        %v4130 = vcombine.high %v4122, %v4122
        %v4131 = vcombine.high %v4129, %v4129
        %v4132 = vcombine.high %v4076, %v4076
        %v4134 = vunpack.c.l.s4 1983009808
        %v4135 = vunpack.c.0.s8 %v4134
        %v4136 = vlaneseq
        %v4137 = vshrl.u32 %v4136, 7
        %v4138 = vsub.s32 %v4135, %v4137
        %v4139 = vrot.slane %v4076, %v4138
        %v4141 = vunpack.c.l.s4 1983009808
        %v4142 = vunpack.c.0.s8 %v4141
        %v4143 = vlaneseq
        %v4144 = vshrl.u32 %v4143, 7
        %v4145 = vsub.s32 %v4142, %v4144
        %v4146 = vrot.slane %v4132, %v4145
        %v4147 = vcombine.high %v4139, %v4139
        %v4148 = vcombine.high %v4146, %v4146
        %v4165 = vrot.slane %v4088, 7
        %v4166 = vrot.slane %v4165, 2
        %v4167 = vrot.slane %v4096, 7
        %v4168 = vrot.slane %v4167, 2
        %v4169 = vrot.slane %v4095, 7
        %v4170 = vrot.slane %v4169, 2
        %v4171 = vrot.slane %v4097, 7
        %v4172 = vrot.slane %v4171, 2
        %v4173 = vrot.slane %v4105, 7
        %v4174 = vrot.slane %v4173, 2
        %v4175 = vrot.slane %v4113, 7
        %v4176 = vrot.slane %v4175, 2
        %v4177 = vrot.slane %v4112, 7
        %v4178 = vrot.slane %v4177, 2
        %v4179 = vrot.slane %v4114, 7
        %v4180 = vrot.slane %v4179, 2
        %v4181 = vrot.slane %v4122, 7
        %v4182 = vrot.slane %v4181, 2
        %v4183 = vrot.slane %v4130, 7
        %v4184 = vrot.slane %v4183, 2
        %v4185 = vrot.slane %v4129, 7
        %v4186 = vrot.slane %v4185, 2
        %v4187 = vrot.slane %v4131, 7
        %v4188 = vrot.slane %v4187, 2
        %v4189 = vrot.slane %v4139, 7
        %v4190 = vrot.slane %v4189, 2
        %v4191 = vrot.slane %v4147, 7
        %v4192 = vrot.slane %v4191, 2
        %v4193 = vrot.slane %v4146, 7
        %v4194 = vrot.slane %v4193, 2
        %v4195 = vrot.slane %v4148, 7
        %v4196 = vrot.slane %v4195, 2
        %v4213 = vmax.f32 %v4088, %v4166
        %v4214 = vmax.f32 %v4096, %v4168
        %v4215 = vmax.f32 %v4095, %v4170
        %v4216 = vmax.f32 %v4097, %v4172
        %v4217 = vmax.f32 %v4105, %v4174
        %v4218 = vmax.f32 %v4113, %v4176
        %v4219 = vmax.f32 %v4112, %v4178
        %v4220 = vmax.f32 %v4114, %v4180
        %v4221 = vmax.f32 %v4122, %v4182
        %v4222 = vmax.f32 %v4130, %v4184
        %v4223 = vmax.f32 %v4129, %v4186
        %v4224 = vmax.f32 %v4131, %v4188
        %v4225 = vmax.f32 %v4139, %v4190
        %v4226 = vmax.f32 %v4147, %v4192
        %v4227 = vmax.f32 %v4146, %v4194
        %v4228 = vmax.f32 %v4148, %v4196
        %4229 = vst [vmem:[#allocation4] sm:$0x3f] 0.0
        %s4230 = scalar_lea.vmem [#allocation4], 40
        %4231 = vst [vmem:[%s4230] sm:$0x3f] 0.0
        %4232 = vst [vmem:[#allocation4] sm:$0x1] 0.0
        %4233 = vst [vmem:[#allocation4 + $0x8] sm:$0x1] 0.0
        %4234 = vst [vmem:[#allocation4 + $0x10] sm:$0x1] 0.0
        %4235 = vst [vmem:[#allocation4 + $0x18] sm:$0x1] 0.0
        %4236 = vst [vmem:[#allocation4 + $0x20] sm:$0x1] 0.0
        %4237 = vst [vmem:[#allocation4 + $0x28] sm:$0x1] 0.0
        %4238 = vst [vmem:[#allocation4 + $0x5] sm:$0x1] 0.0
        %4239 = vst [vmem:[#allocation4 + $0xd] sm:$0x1] 0.0
        %4240 = vst [vmem:[#allocation4 + $0x15] sm:$0x1] 0.0
        %4241 = vst [vmem:[#allocation4 + $0x1d] sm:$0x1] 0.0
        %4242 = vst [vmem:[#allocation4 + $0x25] sm:$0x1] 0.0
        %4243 = vst [vmem:[#allocation4 + $0x2d] sm:$0x1] 0.0
        %v4260 = vlaneseq
        %v4261 = vshrl.u32 %v4260, 7
        %v4262 = vsub.s32 0, %v4261
        %v4263 = vrot.slane %v4213, %v4262
        %v4264 = vlaneseq
        %v4265 = vshrl.u32 %v4264, 7
        %v4266 = vsub.s32 0, %v4265
        %v4267 = vrot.slane %v4214, %v4266
        %v4268 = vlaneseq
        %v4269 = vshrl.u32 %v4268, 7
        %v4270 = vsub.s32 0, %v4269
        %v4271 = vrot.slane %v4215, %v4270
        %v4272 = vlaneseq
        %v4273 = vshrl.u32 %v4272, 7
        %v4274 = vsub.s32 0, %v4273
        %v4275 = vrot.slane %v4216, %v4274
        %v4276 = vlaneseq
        %v4277 = vshrl.u32 %v4276, 7
        %v4278 = vsub.s32 0, %v4277
        %v4279 = vrot.slane %v4217, %v4278
        %v4280 = vlaneseq
        %v4281 = vshrl.u32 %v4280, 7
        %v4282 = vsub.s32 0, %v4281
        %v4283 = vrot.slane %v4218, %v4282
        %v4284 = vlaneseq
        %v4285 = vshrl.u32 %v4284, 7
        %v4286 = vsub.s32 0, %v4285
        %v4287 = vrot.slane %v4219, %v4286
        %v4288 = vlaneseq
        %v4289 = vshrl.u32 %v4288, 7
        %v4290 = vsub.s32 0, %v4289
        %v4291 = vrot.slane %v4220, %v4290
        %v4292 = vlaneseq
        %v4293 = vshrl.u32 %v4292, 7
        %v4294 = vsub.s32 0, %v4293
        %v4295 = vrot.slane %v4221, %v4294
        %v4296 = vlaneseq
        %v4297 = vshrl.u32 %v4296, 7
        %v4298 = vsub.s32 0, %v4297
        %v4299 = vrot.slane %v4222, %v4298
        %v4300 = vlaneseq
        %v4301 = vshrl.u32 %v4300, 7
        %v4302 = vsub.s32 0, %v4301
        %v4303 = vrot.slane %v4223, %v4302
        %v4304 = vlaneseq
        %v4305 = vshrl.u32 %v4304, 7
        %v4306 = vsub.s32 0, %v4305
        %v4307 = vrot.slane %v4224, %v4306
        %v4308 = vlaneseq
        %v4309 = vshrl.u32 %v4308, 7
        %v4310 = vsub.s32 0, %v4309
        %v4311 = vrot.slane %v4225, %v4310
        %v4312 = vlaneseq
        %v4313 = vshrl.u32 %v4312, 7
        %v4314 = vsub.s32 0, %v4313
        %v4315 = vrot.slane %v4226, %v4314
        %v4316 = vlaneseq
        %v4317 = vshrl.u32 %v4316, 7
        %v4318 = vsub.s32 0, %v4317
        %v4319 = vrot.slane %v4227, %v4318
        %v4320 = vlaneseq
        %v4321 = vshrl.u32 %v4320, 7
        %v4322 = vsub.s32 0, %v4321
        %v4323 = vrot.slane %v4228, %v4322
        %v4324 = vsel %vm3189, %v4267, %v4263
        %v4325 = vsel %vm3191, %v4271, %v4324
        %v4326 = vsel %vm3193, %v4275, %v4325
        %v4327 = vsel %vm3189, %v4283, %v4279
        %v4328 = vsel %vm3191, %v4287, %v4327
        %v4329 = vsel %vm3193, %v4291, %v4328
        %v4330 = vsel %vm3189, %v4299, %v4295
        %v4331 = vsel %vm3191, %v4303, %v4330
        %v4332 = vsel %vm3193, %v4307, %v4331
        %v4333 = vsel %vm3189, %v4315, %v4311
        %v4334 = vsel %vm3191, %v4319, %v4333
        %v4335 = vsel %vm3193, %v4323, %v4334
        %s4340 = scalar_lea.vmem [#allocation4], 8
        %4341 = vst [vmem:[%s4340 + $0x1] sm:$0xf] %v4326
        %4342 = vst [vmem:[%s4340 + $0x9] sm:$0xf] %v4329
        %4343 = vst [vmem:[%s4340 + $0x11] sm:$0xf] %v4332
        %4344 = vst [vmem:[%s4340 + $0x19] sm:$0xf] %v4335
        %v4345 = vld [vmem:[#allocation4] sm:$0x3f]
        %v4346 = vld [vmem:[#allocation4 + $0x8] sm:$0x3f]
        %v4347 = vld [vmem:[#allocation4 + $0x10] sm:$0x3f]
        %v4348 = vld [vmem:[#allocation4 + $0x18] sm:$0x3f]
        %v4349 = vld [vmem:[#allocation4 + $0x20] sm:$0x3f]
        %v4350 = vld [vmem:[#allocation4 + $0x28] sm:$0x3f]
        %v4355 = vrot.slane %v4345, 1
        %v4356 = vrot.slane %v4346, 1
        %v4357 = vrot.slane %v4347, 1
        %v4358 = vrot.slane %v4348, 1
        %v4359 = vrot.slane %v4345, 2
        %v4360 = vrot.slane %v4346, 2
        %v4361 = vrot.slane %v4347, 2
        %v4362 = vrot.slane %v4348, 2
        %v4364 = vrot.slane %v4349, 1
        %v4365 = vrot.slane %v4349, 2
        %v4367 = vrot.slane %v4350, 1
        %v4368 = vrot.slane %v4350, 2
        %v4369 = vcombine.low %v4345, %v4355
        %v4370 = vcombine.low %v4359, %v4346
        %v4371 = vcombine.low %v4356, %v4360
        %v4372 = vcombine.low %v4347, %v4357
        %v4373 = vcombine.low %v4346, %v4356
        %v4374 = vcombine.low %v4360, %v4347
        %v4375 = vcombine.low %v4357, %v4361
        %v4376 = vcombine.low %v4348, %v4358
        %v4377 = vcombine.low %v4361, %v4348
        %v4378 = vcombine.low %v4358, %v4362
        %v4379 = vcombine.low %v4349, %v4364
        %v4380 = vcombine.low %v4362, %v4349
        %v4381 = vcombine.low %v4364, %v4365
        %v4382 = vcombine.low %v4350, %v4367
        %v4383 = vld [vmem:[#allocation7] sm:$0xff]
        %v4384 = vld [vmem:[#allocation7 + $0x8] sm:$0xff]
        %v4385 = vld [vmem:[#allocation7 + $0x10] sm:$0xff]
        %v4386 = vld [vmem:[#allocation7 + $0x18] sm:$0xff]
        %v4387 = vld [vmem:[#allocation7 + $0x20] sm:$0xff]
        %v4388 = vld [vmem:[#allocation7 + $0x28] sm:$0xff]
        %v4389 = vld [vmem:[#allocation7 + $0x30] sm:$0xff]
        %v4390 = vld [vmem:[#allocation7 + $0x38] sm:$0xff]
        %v4391 = vld [vmem:[#allocation7 + $0x40] sm:$0xff]
        %v4392 = vld [vmem:[#allocation7 + $0x48] sm:$0xff]
        %v4393 = vld [vmem:[#allocation7 + $0x50] sm:$0xff]
        %v4394 = vld [vmem:[#allocation7 + $0x58] sm:$0xff]
        %v4395 = vld [vmem:[#allocation7 + $0x60] sm:$0xff]
        %v4396 = vld [vmem:[#allocation7 + $0x68] sm:$0xff]
        %v4397 = vld [vmem:[#allocation7 + $0x70] sm:$0xff]
        %v4398 = vld [vmem:[#allocation7 + $0x78] sm:$0xff]
        %v4399 = vld [vmem:[#allocation7 + $0x80] sm:$0xff]
        %v4400 = vld [vmem:[#allocation7 + $0x88] sm:$0xff]
        %v4401 = vld [vmem:[#allocation7 + $0x90] sm:$0xff]
        %v4402 = vld [vmem:[#allocation7 + $0x98] sm:$0xff]
        %v4403 = vld [vmem:[#allocation7 + $0xa0] sm:$0xff]
        %v4404 = vld [vmem:[#allocation7 + $0xa8] sm:$0xff]
        %v4405 = vld [vmem:[#allocation7 + $0xb0] sm:$0xff]
        %v4406 = vld [vmem:[#allocation7 + $0xb8] sm:$0xff]
        %v4407 = vld [vmem:[#allocation7 + $0xc0] sm:$0xff]
        %v4408 = vld [vmem:[#allocation7 + $0xc8] sm:$0xff]
        %v4409 = vld [vmem:[#allocation7 + $0xd0] sm:$0xff]
        %v4410 = vld [vmem:[#allocation7 + $0xd8] sm:$0xff]
        %v4411 = vld [vmem:[#allocation7 + $0xe0] sm:$0xff]
        %v4412 = vld [vmem:[#allocation7 + $0xe8] sm:$0xff]
        %v4413 = vld [vmem:[#allocation7 + $0xf0] sm:$0xff]
        %v4414 = vld [vmem:[#allocation7 + $0xf8] sm:$0xff]
        %v4415 = vld [vmem:[#allocation7 + $0x100] sm:$0xff]
        %v4416 = vld [vmem:[#allocation7 + $0x108] sm:$0xff]
        %v4417 = vld [vmem:[#allocation7 + $0x110] sm:$0xff]
        %v4418 = vld [vmem:[#allocation7 + $0x118] sm:$0xff]
        %v4419 = vld [vmem:[#allocation7 + $0x120] sm:$0xff]
        %v4420 = vld [vmem:[#allocation7 + $0x128] sm:$0xff]
        %v4421 = vld [vmem:[#allocation7 + $0x130] sm:$0xff]
        %v4422 = vld [vmem:[#allocation7 + $0x138] sm:$0xff]
        %v4423 = vld [vmem:[#allocation7 + $0x140] sm:$0xff]
        %v4424 = vld [vmem:[#allocation7 + $0x148] sm:$0xff]
        %v4425 = vld [vmem:[#allocation7 + $0x150] sm:$0xff]
        %v4426 = vld [vmem:[#allocation7 + $0x158] sm:$0xff]
        %v4427 = vld [vmem:[#allocation7 + $0x160] sm:$0xff]
        %v4428 = vld [vmem:[#allocation7 + $0x168] sm:$0xff]
        %v4429 = vld [vmem:[#allocation7 + $0x170] sm:$0xff]
        %v4430 = vld [vmem:[#allocation7 + $0x178] sm:$0xff]
        %v4431 = vld [vmem:[#allocation7 + $0x180] sm:$0xff]
        %v4432 = vld [vmem:[#allocation7 + $0x188] sm:$0xff]
        %v4433 = vld [vmem:[#allocation7 + $0x190] sm:$0xff]
        %v4434 = vld [vmem:[#allocation7 + $0x198] sm:$0xff]
        %v4435 = vld [vmem:[#allocation7 + $0x1a0] sm:$0xff]
        %v4436 = vld [vmem:[#allocation7 + $0x1a8] sm:$0xff]
        %v4437 = vld [vmem:[#allocation7 + $0x1b0] sm:$0xff]
        %v4438 = vld [vmem:[#allocation7 + $0x1b8] sm:$0xff]
        %v4439 = vld [vmem:[#allocation7 + $0x1c0] sm:$0xff]
        %v4440 = vld [vmem:[#allocation7 + $0x1c8] sm:$0xff]
        %v4441 = vld [vmem:[#allocation7 + $0x1d0] sm:$0xff]
        %v4442 = vld [vmem:[#allocation7 + $0x1d8] sm:$0xff]
        %v4443 = vld [vmem:[#allocation7 + $0x1e0] sm:$0xff]
        %v4444 = vld [vmem:[#allocation7 + $0x1e8] sm:$0xff]
        %v4445 = vld [vmem:[#allocation7 + $0x1f0] sm:$0xff]
        %v4446 = vld [vmem:[#allocation7 + $0x1f8] sm:$0xff]
        %v4447 = vld [vmem:[#allocation7 + $0x200] sm:$0xff]
        %v4448 = vld [vmem:[#allocation7 + $0x208] sm:$0xff]
        %v4449 = vld [vmem:[#allocation7 + $0x210] sm:$0xff]
        %v4450 = vld [vmem:[#allocation7 + $0x218] sm:$0xff]
        %v4451 = vld [vmem:[#allocation7 + $0x220] sm:$0xff]
        %v4452 = vld [vmem:[#allocation7 + $0x228] sm:$0xff]
        %v4453 = vld [vmem:[#allocation7 + $0x230] sm:$0xff]
        %v4454 = vld [vmem:[#allocation7 + $0x238] sm:$0xff]
        %v4455 = vld [vmem:[#allocation7 + $0x240] sm:$0xff]
        %v4456 = vld [vmem:[#allocation7 + $0x248] sm:$0xff]
        %v4457 = vld [vmem:[#allocation7 + $0x250] sm:$0xff]
        %v4458 = vld [vmem:[#allocation7 + $0x258] sm:$0xff]
        %v4459 = vld [vmem:[#allocation7 + $0x260] sm:$0xff]
        %v4460 = vld [vmem:[#allocation7 + $0x268] sm:$0xff]
        %v4461 = vld [vmem:[#allocation7 + $0x270] sm:$0xff]
        %v4462 = vld [vmem:[#allocation7 + $0x278] sm:$0xff]
        %v4463 = vld [vmem:[#allocation7 + $0x280] sm:$0xff]
        %v4464 = vld [vmem:[#allocation7 + $0x288] sm:$0xff]
        %v4465 = vld [vmem:[#allocation7 + $0x290] sm:$0xff]
        %v4466 = vld [vmem:[#allocation7 + $0x298] sm:$0xff]
        %v4467 = vld [vmem:[#allocation7 + $0x2a0] sm:$0xff]
        %v4468 = vld [vmem:[#allocation7 + $0x2a8] sm:$0xff]
        %v4469 = vld [vmem:[#allocation7 + $0x2b0] sm:$0xff]
        %v4470 = vld [vmem:[#allocation7 + $0x2b8] sm:$0xff]
        %v4471 = vld [vmem:[#allocation7 + $0x2c0] sm:$0xff]
        %v4472 = vld [vmem:[#allocation7 + $0x2c8] sm:$0xff]
        %v4473 = vld [vmem:[#allocation7 + $0x2d0] sm:$0xff]
        %v4474 = vld [vmem:[#allocation7 + $0x2d8] sm:$0xff]
        %v4475 = vld [vmem:[#allocation7 + $0x2e0] sm:$0xff]
        %v4476 = vld [vmem:[#allocation7 + $0x2e8] sm:$0xff]
        %v4477 = vld [vmem:[#allocation7 + $0x2f0] sm:$0xff]
        %v4478 = vld [vmem:[#allocation7 + $0x2f8] sm:$0xff]
        %v4479 = vld [vmem:[#allocation7 + $0x300] sm:$0xff]
        %v4480 = vld [vmem:[#allocation7 + $0x308] sm:$0xff]
        %v4481 = vld [vmem:[#allocation7 + $0x310] sm:$0xff]
        %v4482 = vld [vmem:[#allocation7 + $0x318] sm:$0xff]
        %v4483 = vld [vmem:[#allocation7 + $0x320] sm:$0xff]
        %v4484 = vld [vmem:[#allocation7 + $0x328] sm:$0xff]
        %v4485 = vld [vmem:[#allocation7 + $0x330] sm:$0xff]
        %v4486 = vld [vmem:[#allocation7 + $0x338] sm:$0xff]
        %v4487 = vld [vmem:[#allocation7 + $0x340] sm:$0xff]
        %v4488 = vld [vmem:[#allocation7 + $0x348] sm:$0xff]
        %v4489 = vld [vmem:[#allocation7 + $0x350] sm:$0xff]
        %v4490 = vld [vmem:[#allocation7 + $0x358] sm:$0xff]
        %v4491 = vld [vmem:[#allocation7 + $0x360] sm:$0xff]
        %v4492 = vld [vmem:[#allocation7 + $0x368] sm:$0xff]
        %v4493 = vld [vmem:[#allocation7 + $0x370] sm:$0xff]
        %v4494 = vld [vmem:[#allocation7 + $0x378] sm:$0xff]
        %v4495 = vld [vmem:[#allocation7 + $0x380] sm:$0xff]
        %v4496 = vld [vmem:[#allocation7 + $0x388] sm:$0xff]
        %v4497 = vld [vmem:[#allocation7 + $0x390] sm:$0xff]
        %v4498 = vld [vmem:[#allocation7 + $0x398] sm:$0xff]
        %v4499 = vld [vmem:[#allocation7 + $0x3a0] sm:$0xff]
        %v4500 = vld [vmem:[#allocation7 + $0x3a8] sm:$0xff]
        %v4501 = vld [vmem:[#allocation7 + $0x3b0] sm:$0xff]
        %v4502 = vld [vmem:[#allocation7 + $0x3b8] sm:$0xff]
        %v4503 = vld [vmem:[#allocation7 + $0x3c0] sm:$0xff]
        %v4504 = vld [vmem:[#allocation7 + $0x3c8] sm:$0xff]
        %v4505 = vld [vmem:[#allocation7 + $0x3d0] sm:$0xff]
        %v4506 = vld [vmem:[#allocation7 + $0x3d8] sm:$0xff]
        %v4507 = vld [vmem:[#allocation7 + $0x3e0] sm:$0xff]
        %v4508 = vld [vmem:[#allocation7 + $0x3e8] sm:$0xff]
        %v4509 = vld [vmem:[#allocation7 + $0x3f0] sm:$0xff]
        %v4510 = vld [vmem:[#allocation7 + $0x3f8] sm:$0xff]
        %v4511 = vld [vmem:[#allocation7 + $0x400] sm:$0xff]
        %v4512 = vld [vmem:[#allocation7 + $0x408] sm:$0xff]
        %v4513 = vld [vmem:[#allocation7 + $0x410] sm:$0xff]
        %v4514 = vld [vmem:[#allocation7 + $0x418] sm:$0xff]
        %v4515 = vld [vmem:[#allocation7 + $0x420] sm:$0xff]
        %v4516 = vld [vmem:[#allocation7 + $0x428] sm:$0xff]
        %v4517 = vld [vmem:[#allocation7 + $0x430] sm:$0xff]
        %v4518 = vld [vmem:[#allocation7 + $0x438] sm:$0xff]
        %v4519 = vld [vmem:[#allocation7 + $0x440] sm:$0xff]
        %v4520 = vld [vmem:[#allocation7 + $0x448] sm:$0xff]
        %v4521 = vld [vmem:[#allocation7 + $0x450] sm:$0xff]
        %v4522 = vld [vmem:[#allocation7 + $0x458] sm:$0xff]
        %v4523 = vld [vmem:[#allocation7 + $0x460] sm:$0xff]
        %v4524 = vld [vmem:[#allocation7 + $0x468] sm:$0xff]
        %v4525 = vld [vmem:[#allocation7 + $0x470] sm:$0xff]
        %v4526 = vld [vmem:[#allocation7 + $0x478] sm:$0xff]
        %v4527 = vld [vmem:[%s6] sm:$0x1]
        %v4529 = vlaneseq
        %v4530 = vshrl.u32 %v4529, 7
        %v4531 = vsub.s32 0, %v4530
        %v4532 = vrot.slane %v4527, %v4531
        %v4534 = vcombine.low %v4369, %v4373
        %v4535 = vcombine.high %v4369, %v4373
        %v4536 = vcombine.low %v4370, %v4374
        %v4537 = vcombine.high %v4370, %v4374
        %v4538 = vcombine.low %v4371, %v4375
        %v4539 = vcombine.high %v4371, %v4375
        %v4540 = vcombine.low %v4372, %v4376
        %v4541 = vcombine.high %v4372, %v4376
        %v4542 = vcombine.low %v4361, %v4362
        %v4543 = vcombine.low %v4377, %v4380
        %v4544 = vcombine.high %v4377, %v4380
        %v4545 = vcombine.low %v4378, %v4381
        %v4546 = vcombine.high %v4378, %v4381
        %v4547 = vcombine.low %v4379, %v4382
        %v4548 = vcombine.high %v4379, %v4382
        %v4549 = vcombine.low %v4365, %v4368
        %4566 = vmatprep.subr.mxu0 0.0
        %4567 = vmatpush1.msra.mxu0 %v4383
        %4568 = vmatprep.subr.mxu0 0.0
        %4569 = vmatpush1.msra.mxu0 %v4384
        %4570 = vmatprep.subr.mxu0 0.0
        %4571 = vmatpush1.msra.mxu0 %v4385
        %4572 = vmatprep.subr.mxu0 0.0
        %4573 = vmatpush1.msra.mxu0 %v4386
        %4574 = vmatprep.subr.mxu0 0.0
        %4575 = vmatpush1.msra.mxu0 %v4387
        %4576 = vmatprep.subr.mxu0 0.0
        %4577 = vmatpush1.msra.mxu0 %v4388
        %4578 = vmatprep.subr.mxu0 0.0
        %4579 = vmatpush1.msra.mxu0 %v4389
        %4580 = vmatprep.subr.mxu0 0.0
        %4581 = vmatpush1.msra.mxu0 %v4390
        %4582 = vmatprep.subr.mxu0 0.0
        %4583 = vmatpush1.msra.mxu0 %v4391
        %4584 = vmatprep.subr.mxu0 0.0
        %4585 = vmatpush1.msra.mxu0 %v4392
        %4586 = vmatprep.subr.mxu0 0.0
        %4587 = vmatpush1.msra.mxu0 %v4393
        %4588 = vmatprep.subr.mxu0 0.0
        %4589 = vmatpush1.msra.mxu0 %v4394
        %4590 = vmatprep.subr.mxu0 0.0
        %4591 = vmatpush1.msra.mxu0 %v4395
        %4592 = vmatprep.subr.mxu0 0.0
        %4593 = vmatpush1.msra.mxu0 %v4396
        %4594 = vmatprep.subr.mxu0 0.0
        %4595 = vmatpush1.msra.mxu0 %v4397
        %4596 = vmatprep.subr.mxu0 0.0
        %4597 = vmatpush1.msra.mxu0 %v4398
        %4598 = vmatprep.subr.mxu0 0.0
        %4599 = vmatpush1.msra.mxu0 %v4399
        %4600 = vmatprep.subr.mxu0 0.0
        %4601 = vmatpush1.msra.mxu0 %v4400
        %4602 = vmatprep.subr.mxu0 0.0
        %4603 = vmatpush1.msra.mxu0 %v4401
        %4604 = vmatprep.subr.mxu0 0.0
        %4605 = vmatpush1.msra.mxu0 %v4402
        %4606 = vmatprep.subr.mxu0 0.0
        %4607 = vmatpush1.msra.mxu0 %v4403
        %4608 = vmatprep.subr.mxu0 0.0
        %4609 = vmatpush1.msra.mxu0 %v4404
        %4610 = vmatprep.subr.mxu0 0.0
        %4611 = vmatpush1.msra.mxu0 %v4405
        %4612 = vmatprep.subr.mxu0 0.0
        %4613 = vmatpush1.msra.mxu0 %v4406
        %4614 = vmatprep.subr.mxu0 0.0
        %4615 = vmatpush1.msra.mxu0 %v4407
        %4616 = vmatprep.subr.mxu0 0.0
        %4617 = vmatpush1.msra.mxu0 %v4408
        %4618 = vmatprep.subr.mxu0 0.0
        %4619 = vmatpush1.msra.mxu0 %v4409
        %4620 = vmatprep.subr.mxu0 0.0
        %4621 = vmatpush1.msra.mxu0 %v4410
        %4622 = vmatprep.subr.mxu0 0.0
        %4623 = vmatpush1.msra.mxu0 %v4411
        %4624 = vmatprep.subr.mxu0 0.0
        %4625 = vmatpush1.msra.mxu0 %v4412
        %4626 = vmatprep.subr.mxu0 0.0
        %4627 = vmatpush1.msra.mxu0 %v4413
        %4628 = vmatprep.subr.mxu0 0.0
        %4629 = vmatpush1.msra.mxu0 %v4414
        %4630 = vmatprep.mubr.f32.mxu0 %v4535
        %4631 = vmatmul.mubr.f32.gmra.mrb[0].mxu0 %v4534
        %v4632 = vpop.f32.mrb[0].mxu0
        %v4633 = vadd.f32 %v4532, %v4632
        %v4634 = vpop.f32.mrb[0].mxu0
        %4635 = vmatprep.mubr.f32.mxu0 %v4541
        %4636 = vmatmul.mubr.f32.gmra.mrb[0].mxu0 %v4540
        %v4637 = vpop.f32.mrb[0].mxu0
        %v4638 = vadd.f32 %v4532, %v4637
        %v4639 = vpop.f32.mrb[0].mxu0
        %4640 = vdwg.mxu0
        %4641 = vmatprep.subr.mxu0 0.0
        %4642 = vmatpush1.msra.mxu0 %v4415
        %4643 = vmatprep.subr.mxu0 0.0
        %4644 = vmatpush1.msra.mxu0 %v4416
        %4645 = vmatprep.subr.mxu0 0.0
        %4646 = vmatpush1.msra.mxu0 %v4417
        %4647 = vmatprep.subr.mxu0 0.0
        %4648 = vmatpush1.msra.mxu0 %v4418
        %4649 = vmatprep.subr.mxu0 0.0
        %4650 = vmatpush1.msra.mxu0 %v4419
        %4651 = vmatprep.subr.mxu0 0.0
        %4652 = vmatpush1.msra.mxu0 %v4420
        %4653 = vmatprep.subr.mxu0 0.0
        %4654 = vmatpush1.msra.mxu0 %v4421
        %4655 = vmatprep.subr.mxu0 0.0
        %4656 = vmatpush1.msra.mxu0 %v4422
        %4657 = vmatprep.subr.mxu0 0.0
        %4658 = vmatpush1.msra.mxu0 %v4423
        %4659 = vmatprep.subr.mxu0 0.0
        %4660 = vmatpush1.msra.mxu0 %v4424
        %4661 = vmatprep.subr.mxu0 0.0
        %4662 = vmatpush1.msra.mxu0 %v4425
        %4663 = vmatprep.subr.mxu0 0.0
        %4664 = vmatpush1.msra.mxu0 %v4426
        %4665 = vmatprep.subr.mxu0 0.0
        %4666 = vmatpush1.msra.mxu0 %v4427
        %4667 = vmatprep.subr.mxu0 0.0
        %4668 = vmatpush1.msra.mxu0 %v4428
        %4669 = vmatprep.subr.mxu0 0.0
        %4670 = vmatpush1.msra.mxu0 %v4429
        %4671 = vmatprep.subr.mxu0 0.0
        %4672 = vmatpush1.msra.mxu0 %v4430
        %4673 = vmatprep.subr.mxu0 0.0
        %4674 = vmatpush1.msra.mxu0 %v4431
        %4675 = vmatprep.subr.mxu0 0.0
        %4676 = vmatpush1.msra.mxu0 %v4432
        %4677 = vmatprep.subr.mxu0 0.0
        %4678 = vmatpush1.msra.mxu0 %v4433
        %4679 = vmatprep.subr.mxu0 0.0
        %4680 = vmatpush1.msra.mxu0 %v4434
        %4681 = vmatprep.subr.mxu0 0.0
        %4682 = vmatpush1.msra.mxu0 %v4435
        %4683 = vmatprep.subr.mxu0 0.0
        %4684 = vmatpush1.msra.mxu0 %v4436
        %4685 = vmatprep.subr.mxu0 0.0
        %4686 = vmatpush1.msra.mxu0 %v4437
        %4687 = vmatprep.subr.mxu0 0.0
        %4688 = vmatpush1.msra.mxu0 %v4438
        %4689 = vmatprep.subr.mxu0 0.0
        %4690 = vmatpush1.msra.mxu0 %v4439
        %4691 = vmatprep.subr.mxu0 0.0
        %4692 = vmatpush1.msra.mxu0 %v4440
        %4693 = vmatprep.subr.mxu0 0.0
        %4694 = vmatpush1.msra.mxu0 %v4441
        %4695 = vmatprep.subr.mxu0 0.0
        %4696 = vmatpush1.msra.mxu0 %v4442
        %4697 = vmatprep.subr.mxu0 0.0
        %4698 = vmatpush1.msra.mxu0 %v4443
        %4699 = vmatprep.subr.mxu0 0.0
        %4700 = vmatpush1.msra.mxu0 %v4444
        %4701 = vmatprep.subr.mxu0 0.0
        %4702 = vmatpush1.msra.mxu0 %v4445
        %4703 = vmatprep.subr.mxu0 0.0
        %4704 = vmatpush1.msra.mxu0 %v4446
        %4705 = vmatprep.mubr.f32.mxu0 %v4537
        %4706 = vmatmul.mubr.f32.gmra.mrb[0].mxu0 %v4536
        %v4707 = vpop.f32.mrb[0].mxu0
        %v4708 = vadd.f32 %v4633, %v4707
        %v4709 = vpop.f32.mrb[0].mxu0
        %4710 = vmatprep.mubr.f32.mxu0 %v4544
        %4711 = vmatmul.mubr.f32.gmra.mrb[0].mxu0 %v4543
        %v4712 = vpop.f32.mrb[0].mxu0
        %v4713 = vadd.f32 %v4638, %v4712
        %v4714 = vpop.f32.mrb[0].mxu0
        %4715 = vdwg.mxu0
        %4716 = vmatprep.subr.mxu0 0.0
        %4717 = vmatpush1.msra.mxu0 %v4447
        %4718 = vmatprep.subr.mxu0 0.0
        %4719 = vmatpush1.msra.mxu0 %v4448
        %4720 = vmatprep.subr.mxu0 0.0
        %4721 = vmatpush1.msra.mxu0 %v4449
        %4722 = vmatprep.subr.mxu0 0.0
        %4723 = vmatpush1.msra.mxu0 %v4450
        %4724 = vmatprep.subr.mxu0 0.0
        %4725 = vmatpush1.msra.mxu0 %v4451
        %4726 = vmatprep.subr.mxu0 0.0
        %4727 = vmatpush1.msra.mxu0 %v4452
        %4728 = vmatprep.subr.mxu0 0.0
        %4729 = vmatpush1.msra.mxu0 %v4453
        %4730 = vmatprep.subr.mxu0 0.0
        %4731 = vmatpush1.msra.mxu0 %v4454
        %4732 = vmatprep.subr.mxu0 0.0
        %4733 = vmatpush1.msra.mxu0 %v4455
        %4734 = vmatprep.subr.mxu0 0.0
        %4735 = vmatpush1.msra.mxu0 %v4456
        %4736 = vmatprep.subr.mxu0 0.0
        %4737 = vmatpush1.msra.mxu0 %v4457
        %4738 = vmatprep.subr.mxu0 0.0
        %4739 = vmatpush1.msra.mxu0 %v4458
        %4740 = vmatprep.subr.mxu0 0.0
        %4741 = vmatpush1.msra.mxu0 %v4459
        %4742 = vmatprep.subr.mxu0 0.0
        %4743 = vmatpush1.msra.mxu0 %v4460
        %4744 = vmatprep.subr.mxu0 0.0
        %4745 = vmatpush1.msra.mxu0 %v4461
        %4746 = vmatprep.subr.mxu0 0.0
        %4747 = vmatpush1.msra.mxu0 %v4462
        %4748 = vmatprep.subr.mxu0 0.0
        %4749 = vmatpush1.msra.mxu0 %v4463
        %4750 = vmatprep.subr.mxu0 0.0
        %4751 = vmatpush1.msra.mxu0 %v4464
        %4752 = vmatprep.subr.mxu0 0.0
        %4753 = vmatpush1.msra.mxu0 %v4465
        %4754 = vmatprep.subr.mxu0 0.0
        %4755 = vmatpush1.msra.mxu0 %v4466
        %4756 = vmatprep.subr.mxu0 0.0
        %4757 = vmatpush1.msra.mxu0 %v4467
        %4758 = vmatprep.subr.mxu0 0.0
        %4759 = vmatpush1.msra.mxu0 %v4468
        %4760 = vmatprep.subr.mxu0 0.0
        %4761 = vmatpush1.msra.mxu0 %v4469
        %4762 = vmatprep.subr.mxu0 0.0
        %4763 = vmatpush1.msra.mxu0 %v4470
        %4764 = vmatprep.subr.mxu0 0.0
        %4765 = vmatpush1.msra.mxu0 %v4471
        %4766 = vmatprep.subr.mxu0 0.0
        %4767 = vmatpush1.msra.mxu0 %v4472
        %4768 = vmatprep.subr.mxu0 0.0
        %4769 = vmatpush1.msra.mxu0 %v4473
        %4770 = vmatprep.subr.mxu0 0.0
        %4771 = vmatpush1.msra.mxu0 %v4474
        %4772 = vmatprep.subr.mxu0 0.0
        %4773 = vmatpush1.msra.mxu0 %v4475
        %4774 = vmatprep.subr.mxu0 0.0
        %4775 = vmatpush1.msra.mxu0 %v4476
        %4776 = vmatprep.subr.mxu0 0.0
        %4777 = vmatpush1.msra.mxu0 %v4477
        %4778 = vmatprep.subr.mxu0 0.0
        %4779 = vmatpush1.msra.mxu0 %v4478
        %4780 = vmatprep.mubr.f32.mxu0 %v4539
        %4781 = vmatmul.mubr.f32.gmra.mrb[0].mxu0 %v4538
        %v4782 = vpop.f32.mrb[0].mxu0
        %v4783 = vadd.f32 %v4708, %v4782
        %v4784 = vpop.f32.mrb[0].mxu0
        %4785 = vmatprep.mubr.f32.mxu0 %v4546
        %4786 = vmatmul.mubr.f32.gmra.mrb[0].mxu0 %v4545
        %v4787 = vpop.f32.mrb[0].mxu0
        %v4788 = vadd.f32 %v4713, %v4787
        %v4789 = vpop.f32.mrb[0].mxu0
        %4790 = vdwg.mxu0
        %4791 = vmatprep.subr.mxu0 0.0
        %4792 = vmatpush1.msra.mxu0 %v4479
        %4793 = vmatprep.subr.mxu0 0.0
        %4794 = vmatpush1.msra.mxu0 %v4480
        %4795 = vmatprep.subr.mxu0 0.0
        %4796 = vmatpush1.msra.mxu0 %v4481
        %4797 = vmatprep.subr.mxu0 0.0
        %4798 = vmatpush1.msra.mxu0 %v4482
        %4799 = vmatprep.subr.mxu0 0.0
        %4800 = vmatpush1.msra.mxu0 %v4483
        %4801 = vmatprep.subr.mxu0 0.0
        %4802 = vmatpush1.msra.mxu0 %v4484
        %4803 = vmatprep.subr.mxu0 0.0
        %4804 = vmatpush1.msra.mxu0 %v4485
        %4805 = vmatprep.subr.mxu0 0.0
        %4806 = vmatpush1.msra.mxu0 %v4486
        %4807 = vmatprep.subr.mxu0 0.0
        %4808 = vmatpush1.msra.mxu0 %v4487
        %4809 = vmatprep.subr.mxu0 0.0
        %4810 = vmatpush1.msra.mxu0 %v4488
        %4811 = vmatprep.subr.mxu0 0.0
        %4812 = vmatpush1.msra.mxu0 %v4489
        %4813 = vmatprep.subr.mxu0 0.0
        %4814 = vmatpush1.msra.mxu0 %v4490
        %4815 = vmatprep.subr.mxu0 0.0
        %4816 = vmatpush1.msra.mxu0 %v4491
        %4817 = vmatprep.subr.mxu0 0.0
        %4818 = vmatpush1.msra.mxu0 %v4492
        %4819 = vmatprep.subr.mxu0 0.0
        %4820 = vmatpush1.msra.mxu0 %v4493
        %4821 = vmatprep.subr.mxu0 0.0
        %4822 = vmatpush1.msra.mxu0 %v4494
        %4823 = vmatprep.subr.mxu0 0.0
        %4824 = vmatpush1.msra.mxu0 %v4495
        %4825 = vmatprep.subr.mxu0 0.0
        %4826 = vmatpush1.msra.mxu0 %v4496
        %4827 = vmatprep.subr.mxu0 0.0
        %4828 = vmatpush1.msra.mxu0 %v4497
        %4829 = vmatprep.subr.mxu0 0.0
        %4830 = vmatpush1.msra.mxu0 %v4498
        %4831 = vmatprep.subr.mxu0 0.0
        %4832 = vmatpush1.msra.mxu0 %v4499
        %4833 = vmatprep.subr.mxu0 0.0
        %4834 = vmatpush1.msra.mxu0 %v4500
        %4835 = vmatprep.subr.mxu0 0.0
        %4836 = vmatpush1.msra.mxu0 %v4501
        %4837 = vmatprep.subr.mxu0 0.0
        %4838 = vmatpush1.msra.mxu0 %v4502
        %4839 = vmatprep.subr.mxu0 0.0
        %4840 = vmatpush1.msra.mxu0 %v4503
        %4841 = vmatprep.subr.mxu0 0.0
        %4842 = vmatpush1.msra.mxu0 %v4504
        %4843 = vmatprep.subr.mxu0 0.0
        %4844 = vmatpush1.msra.mxu0 %v4505
        %4845 = vmatprep.subr.mxu0 0.0
        %4846 = vmatpush1.msra.mxu0 %v4506
        %4847 = vmatprep.subr.mxu0 0.0
        %4848 = vmatpush1.msra.mxu0 %v4507
        %4849 = vmatprep.subr.mxu0 0.0
        %4850 = vmatpush1.msra.mxu0 %v4508
        %4851 = vmatprep.subr.mxu0 0.0
        %4852 = vmatpush1.msra.mxu0 %v4509
        %4853 = vmatprep.subr.mxu0 0.0
        %4854 = vmatpush1.msra.mxu0 %v4510
        %4855 = vmatprep.mubr.f32.mxu0 %v4541
        %4856 = vmatmul.mubr.f32.gmra.mrb[0].mxu0 %v4540
        %v4857 = vpop.f32.mrb[0].mxu0
        %v4858 = vadd.f32 %v4783, %v4857
        %v4859 = vpop.f32.mrb[0].mxu0
        %4860 = vmatprep.mubr.f32.mxu0 %v4548
        %4861 = vmatmul.mubr.f32.gmra.mrb[0].mxu0 %v4547
        %v4862 = vpop.f32.mrb[0].mxu0
        %v4863 = vadd.f32 %v4788, %v4862
        %v4864 = vpop.f32.mrb[0].mxu0
        %4865 = vdwg.mxu0
        %4866 = vmatprep.subr.mxu0 0.0
        %4867 = vmatpush1.msra.mxu0 %v4511
        %4868 = vmatprep.subr.mxu0 0.0
        %4869 = vmatpush1.msra.mxu0 %v4512
        %4870 = vmatprep.subr.mxu0 0.0
        %4871 = vmatpush1.msra.mxu0 %v4513
        %4872 = vmatprep.subr.mxu0 0.0
        %4873 = vmatpush1.msra.mxu0 %v4514
        %4874 = vmatprep.subr.mxu0 0.0
        %4875 = vmatpush1.msra.mxu0 %v4515
        %4876 = vmatprep.subr.mxu0 0.0
        %4877 = vmatpush1.msra.mxu0 %v4516
        %4878 = vmatprep.subr.mxu0 0.0
        %4879 = vmatpush1.msra.mxu0 %v4517
        %4880 = vmatprep.subr.mxu0 0.0
        %4881 = vmatpush1.msra.mxu0 %v4518
        %4882 = vmatprep.subr.mxu0 0.0
        %4883 = vmatpush1.msra.mxu0 %v4519
        %4884 = vmatprep.subr.mxu0 0.0
        %4885 = vmatpush1.msra.mxu0 %v4520
        %4886 = vmatprep.subr.mxu0 0.0
        %4887 = vmatpush1.msra.mxu0 %v4521
        %4888 = vmatprep.subr.mxu0 0.0
        %4889 = vmatpush1.msra.mxu0 %v4522
        %4890 = vmatprep.subr.mxu0 0.0
        %4891 = vmatpush1.msra.mxu0 %v4523
        %4892 = vmatprep.subr.mxu0 0.0
        %4893 = vmatpush1.msra.mxu0 %v4524
        %4894 = vmatprep.subr.mxu0 0.0
        %4895 = vmatpush1.msra.mxu0 %v4525
        %4896 = vmatprep.subr.mxu0 0.0
        %4897 = vmatpush1.msra.mxu0 %v4526
        %4898 = vmatprep.subr.mxu0 0.0
        %4899 = vmatpush1.msra.mxu0 0.0
        %4900 = vmatprep.subr.mxu0 0.0
        %4901 = vmatpush1.msra.mxu0 0.0
        %4902 = vmatprep.subr.mxu0 0.0
        %4903 = vmatpush1.msra.mxu0 0.0
        %4904 = vmatprep.subr.mxu0 0.0
        %4905 = vmatpush1.msra.mxu0 0.0
        %4906 = vmatprep.subr.mxu0 0.0
        %4907 = vmatpush1.msra.mxu0 0.0
        %4908 = vmatprep.subr.mxu0 0.0
        %4909 = vmatpush1.msra.mxu0 0.0
        %4910 = vmatprep.subr.mxu0 0.0
        %4911 = vmatpush1.msra.mxu0 0.0
        %4912 = vmatprep.subr.mxu0 0.0
        %4913 = vmatpush1.msra.mxu0 0.0
        %4914 = vmatprep.subr.mxu0 0.0
        %4915 = vmatpush1.msra.mxu0 0.0
        %4916 = vmatprep.subr.mxu0 0.0
        %4917 = vmatpush1.msra.mxu0 0.0
        %4918 = vmatprep.subr.mxu0 0.0
        %4919 = vmatpush1.msra.mxu0 0.0
        %4920 = vmatprep.subr.mxu0 0.0
        %4921 = vmatpush1.msra.mxu0 0.0
        %4922 = vmatprep.subr.mxu0 0.0
        %4923 = vmatpush1.msra.mxu0 0.0
        %4924 = vmatprep.subr.mxu0 0.0
        %4925 = vmatpush1.msra.mxu0 0.0
        %4926 = vmatprep.subr.mxu0 0.0
        %4927 = vmatpush1.msra.mxu0 0.0
        %4928 = vmatprep.subr.mxu0 0.0
        %4929 = vmatpush1.msra.mxu0 0.0
        %4930 = vmatprep.mubr.f32.mxu0 0.0
        %4931 = vmatmul.mubr.f32.gmra.mrb[0].mxu0 %v4542
        %v4932 = vpop.f32.mrb[0].mxu0
        %v4933 = vadd.f32 %v4858, %v4932
        %v4934 = vpop.f32.mrb[0].mxu0
        %4935 = vmatprep.mubr.f32.mxu0 0.0
        %4936 = vmatmul.mubr.f32.gmra.mrb[0].mxu0 %v4549
        %v4937 = vpop.f32.mrb[0].mxu0
        %v4938 = vadd.f32 %v4863, %v4937
        %v4939 = vpop.f32.mrb[0].mxu0
        %4940 = vdwg.mxu0
        %v4941 = vmax.f32 %v4933, 0.0
        %v4942 = vmax.f32 %v4938, 0.0
        %v4945 = vcombine.high %v4941, %v4941
        %v4946 = vcombine.high %v4942, %v4942
        %v4949 = vmax.f32 %v4941, %v4945
        %v4950 = vmax.f32 %v4942, %v4946
        %v4954 = vunpack.c.l.s4 1983009808
        %v4955 = vunpack.c.0.s8 %v4954
        %v4956 = vlaneseq
        %v4957 = vshrl.u32 %v4956, 7
        %v4958 = vsub.s32 %v4955, %v4957
        %v4959 = vrot.slane %v4949, %v4958
        %v4960 = vcombine.high %v4959, %v4959
        %v4962 = vunpack.c.l.s4 1983009808
        %v4963 = vunpack.c.0.s8 %v4962
        %v4964 = vlaneseq
        %v4965 = vshrl.u32 %v4964, 7
        %v4966 = vsub.s32 %v4963, %v4965
        %v4967 = vrot.slane %v4950, %v4966
        %v4968 = vcombine.high %v4967, %v4967
        %v4973 = vrot.slane %v4959, 7
        %v4974 = vrot.slane %v4973, 2
        %v4975 = vrot.slane %v4960, 7
        %v4976 = vrot.slane %v4975, 2
        %v4977 = vrot.slane %v4967, 7
        %v4978 = vrot.slane %v4977, 2
        %v4979 = vrot.slane %v4968, 7
        %v4980 = vrot.slane %v4979, 2
        %v4985 = vmax.f32 %v4959, %v4974
        %v4986 = vmax.f32 %v4960, %v4976
        %v4987 = vmax.f32 %v4967, %v4978
        %v4988 = vmax.f32 %v4968, %v4980
        %v4993 = vlaneseq
        %v4994 = vshrl.u32 %v4993, 7
        %v4995 = vsub.s32 0, %v4994
        %v4996 = vrot.slane %v4985, %v4995
        %v4997 = vlaneseq
        %v4998 = vshrl.u32 %v4997, 7
        %v4999 = vsub.s32 0, %v4998
        %v5000 = vrot.slane %v4986, %v4999
        %v5001 = vlaneseq
        %v5002 = vshrl.u32 %v5001, 7
        %v5003 = vsub.s32 0, %v5002
        %v5004 = vrot.slane %v4987, %v5003
        %v5005 = vlaneseq
        %v5006 = vshrl.u32 %v5005, 7
        %v5007 = vsub.s32 0, %v5006
        %v5008 = vrot.slane %v4988, %v5007
        %v5009 = vsel %vm3189, %v5000, %v4996
        %v5010 = vsel %vm3189, %v5008, %v5004
        %vm5013 = vcmask 1040384
        %v5014 = vsel %vm5013, %v5009, 0.0
        %v5015 = vrot.slane %v5009, 1
        %v5016 = vsel %vm5013, %v5015, 0.0
        %v5017 = vsel %vm5013, %v5010, 0.0
        %v5018 = vrot.slane %v5010, 1
        %v5019 = vsel %vm5013, %v5018, 0.0
        %v5020 = vld [vmem:[#allocation9] sm:$0xff]
        %v5021 = vld [vmem:[#allocation9 + $0x8] sm:$0xff]
        %v5022 = vld [vmem:[#allocation9 + $0x10] sm:$0xff]
        %v5023 = vld [vmem:[#allocation9 + $0x18] sm:$0xff]
        %v5024 = vld [vmem:[#allocation9 + $0x20] sm:$0xff]
        %v5025 = vld [vmem:[#allocation9 + $0x28] sm:$0xff]
        %v5026 = vld [vmem:[#allocation9 + $0x30] sm:$0xff]
        %v5027 = vld [vmem:[#allocation9 + $0x38] sm:$0xff]
        %v5028 = vld [vmem:[#allocation9 + $0x40] sm:$0xff]
        %v5029 = vld [vmem:[#allocation9 + $0x48] sm:$0xff]
        %v5030 = vld [vmem:[#allocation9 + $0x50] sm:$0xff]
        %v5031 = vld [vmem:[#allocation9 + $0x58] sm:$0xff]
        %v5032 = vld [vmem:[#allocation9 + $0x60] sm:$0xff]
        %v5033 = vld [vmem:[#allocation9 + $0x68] sm:$0xff]
        %v5034 = vld [vmem:[#allocation9 + $0x70] sm:$0xff]
        %v5035 = vld [vmem:[#allocation9 + $0x78] sm:$0xff]
        %v5036 = vld [vmem:[#allocation9 + $0x80] sm:$0xff]
        %v5037 = vld [vmem:[#allocation9 + $0x88] sm:$0xff]
        %v5038 = vld [vmem:[#allocation9 + $0x90] sm:$0xff]
        %v5039 = vld [vmem:[#allocation9 + $0x98] sm:$0xff]
        %v5040 = vld [vmem:[#allocation9 + $0xa0] sm:$0xff]
        %v5041 = vld [vmem:[#allocation9 + $0xa8] sm:$0xff]
        %v5042 = vld [vmem:[#allocation9 + $0xb0] sm:$0xff]
        %v5043 = vld [vmem:[#allocation9 + $0xb8] sm:$0xff]
        %v5044 = vld [vmem:[#allocation9 + $0xc0] sm:$0xff]
        %v5045 = vld [vmem:[#allocation9 + $0xc8] sm:$0xff]
        %v5046 = vld [vmem:[#allocation9 + $0xd0] sm:$0xff]
        %v5047 = vld [vmem:[#allocation9 + $0xd8] sm:$0xff]
        %v5048 = vld [vmem:[#allocation9 + $0xe0] sm:$0xff]
        %v5049 = vld [vmem:[#allocation9 + $0xe8] sm:$0xff]
        %v5050 = vld [vmem:[#allocation9 + $0xf0] sm:$0xff]
        %v5051 = vld [vmem:[#allocation9 + $0xf8] sm:$0xff]
        %v5052 = vld [vmem:[#allocation9 + $0x100] sm:$0xff]
        %v5053 = vld [vmem:[#allocation9 + $0x108] sm:$0xff]
        %v5054 = vld [vmem:[#allocation9 + $0x110] sm:$0xff]
        %v5055 = vld [vmem:[#allocation9 + $0x118] sm:$0xff]
        %v5056 = vld [vmem:[#allocation9 + $0x120] sm:$0xff]
        %v5057 = vld [vmem:[#allocation9 + $0x128] sm:$0xff]
        %v5058 = vld [vmem:[#allocation9 + $0x130] sm:$0xff]
        %v5059 = vld [vmem:[#allocation9 + $0x138] sm:$0xff]
        %v5060 = vld [vmem:[#allocation9 + $0x140] sm:$0xff]
        %v5061 = vld [vmem:[#allocation9 + $0x148] sm:$0xff]
        %v5062 = vld [vmem:[#allocation9 + $0x150] sm:$0xff]
        %v5063 = vld [vmem:[#allocation9 + $0x158] sm:$0xff]
        %v5064 = vld [vmem:[#allocation9 + $0x160] sm:$0xff]
        %v5065 = vld [vmem:[#allocation9 + $0x168] sm:$0xff]
        %v5066 = vld [vmem:[#allocation9 + $0x170] sm:$0xff]
        %v5067 = vld [vmem:[#allocation9 + $0x178] sm:$0xff]
        %v5068 = vld [vmem:[#allocation9 + $0x180] sm:$0xff]
        %v5069 = vld [vmem:[#allocation9 + $0x188] sm:$0xff]
        %v5070 = vld [vmem:[#allocation9 + $0x190] sm:$0xff]
        %v5071 = vld [vmem:[#allocation9 + $0x198] sm:$0xff]
        %v5072 = vld [vmem:[#allocation9 + $0x1a0] sm:$0xff]
        %v5073 = vld [vmem:[#allocation9 + $0x1a8] sm:$0xff]
        %v5074 = vld [vmem:[#allocation9 + $0x1b0] sm:$0xff]
        %v5075 = vld [vmem:[#allocation9 + $0x1b8] sm:$0xff]
        %v5076 = vld [vmem:[#allocation9 + $0x1c0] sm:$0xff]
        %v5077 = vld [vmem:[#allocation9 + $0x1c8] sm:$0xff]
        %v5078 = vld [vmem:[#allocation9 + $0x1d0] sm:$0xff]
        %v5079 = vld [vmem:[#allocation9 + $0x1d8] sm:$0xff]
        %v5080 = vld [vmem:[#allocation9 + $0x1e0] sm:$0xff]
        %v5081 = vld [vmem:[#allocation9 + $0x1e8] sm:$0xff]
        %v5082 = vld [vmem:[#allocation9 + $0x1f0] sm:$0xff]
        %v5083 = vld [vmem:[#allocation9 + $0x1f8] sm:$0xff]
        %v5084 = vld [vmem:[#allocation9 + $0x200] sm:$0xff]
        %v5085 = vld [vmem:[#allocation9 + $0x208] sm:$0xff]
        %v5086 = vld [vmem:[#allocation9 + $0x210] sm:$0xff]
        %v5087 = vld [vmem:[#allocation9 + $0x218] sm:$0xff]
        %v5088 = vld [vmem:[#allocation9 + $0x220] sm:$0xff]
        %v5089 = vld [vmem:[#allocation9 + $0x228] sm:$0xff]
        %v5090 = vld [vmem:[#allocation9 + $0x230] sm:$0xff]
        %v5091 = vld [vmem:[#allocation9 + $0x238] sm:$0xff]
        %v5092 = vld [vmem:[#allocation9 + $0x240] sm:$0xff]
        %v5093 = vld [vmem:[#allocation9 + $0x248] sm:$0xff]
        %v5094 = vld [vmem:[#allocation9 + $0x250] sm:$0xff]
        %v5095 = vld [vmem:[#allocation9 + $0x258] sm:$0xff]
        %v5096 = vld [vmem:[#allocation9 + $0x260] sm:$0xff]
        %v5097 = vld [vmem:[#allocation9 + $0x268] sm:$0xff]
        %v5098 = vld [vmem:[#allocation9 + $0x270] sm:$0xff]
        %v5099 = vld [vmem:[#allocation9 + $0x278] sm:$0xff]
        %v5100 = vld [vmem:[#allocation9 + $0x280] sm:$0xff]
        %v5101 = vld [vmem:[#allocation9 + $0x288] sm:$0xff]
        %v5102 = vld [vmem:[#allocation9 + $0x290] sm:$0xff]
        %v5103 = vld [vmem:[#allocation9 + $0x298] sm:$0xff]
        %v5104 = vld [vmem:[#allocation9 + $0x2a0] sm:$0xff]
        %v5105 = vld [vmem:[#allocation9 + $0x2a8] sm:$0xff]
        %v5106 = vld [vmem:[#allocation9 + $0x2b0] sm:$0xff]
        %v5107 = vld [vmem:[#allocation9 + $0x2b8] sm:$0xff]
        %v5108 = vld [vmem:[#allocation9 + $0x2c0] sm:$0xff]
        %v5109 = vld [vmem:[#allocation9 + $0x2c8] sm:$0xff]
        %v5110 = vld [vmem:[#allocation9 + $0x2d0] sm:$0xff]
        %v5111 = vld [vmem:[#allocation9 + $0x2d8] sm:$0xff]
        %v5112 = vld [vmem:[#allocation9 + $0x2e0] sm:$0xff]
        %v5113 = vld [vmem:[#allocation9 + $0x2e8] sm:$0xff]
        %v5114 = vld [vmem:[#allocation9 + $0x2f0] sm:$0xff]
        %v5115 = vld [vmem:[#allocation9 + $0x2f8] sm:$0xff]
        %v5116 = vld [vmem:[#allocation9 + $0x300] sm:$0xff]
        %v5117 = vld [vmem:[#allocation9 + $0x308] sm:$0xff]
        %v5118 = vld [vmem:[#allocation9 + $0x310] sm:$0xff]
        %v5119 = vld [vmem:[#allocation9 + $0x318] sm:$0xff]
        %v5120 = vld [vmem:[#allocation9 + $0x320] sm:$0xff]
        %v5121 = vld [vmem:[#allocation9 + $0x328] sm:$0xff]
        %v5122 = vld [vmem:[#allocation9 + $0x330] sm:$0xff]
        %v5123 = vld [vmem:[#allocation9 + $0x338] sm:$0xff]
        %v5124 = vld [vmem:[#allocation9 + $0x340] sm:$0xff]
        %v5125 = vld [vmem:[#allocation9 + $0x348] sm:$0xff]
        %v5126 = vld [vmem:[#allocation9 + $0x350] sm:$0xff]
        %v5127 = vld [vmem:[#allocation9 + $0x358] sm:$0xff]
        %v5128 = vld [vmem:[#allocation9 + $0x360] sm:$0xff]
        %v5129 = vld [vmem:[#allocation9 + $0x368] sm:$0xff]
        %v5130 = vld [vmem:[#allocation9 + $0x370] sm:$0xff]
        %v5131 = vld [vmem:[#allocation9 + $0x378] sm:$0xff]
        %v5132 = vld [vmem:[#allocation9 + $0x380] sm:$0xff]
        %v5133 = vld [vmem:[#allocation9 + $0x388] sm:$0xff]
        %v5134 = vld [vmem:[#allocation9 + $0x390] sm:$0xff]
        %v5135 = vld [vmem:[#allocation9 + $0x398] sm:$0xff]
        %v5136 = vld [vmem:[#allocation9 + $0x3a0] sm:$0xff]
        %v5137 = vld [vmem:[#allocation9 + $0x3a8] sm:$0xff]
        %v5138 = vld [vmem:[#allocation9 + $0x3b0] sm:$0xff]
        %v5139 = vld [vmem:[#allocation9 + $0x3b8] sm:$0xff]
        %v5140 = vld [vmem:[#allocation9 + $0x3c0] sm:$0xff]
        %v5141 = vld [vmem:[#allocation9 + $0x3c8] sm:$0xff]
        %v5142 = vld [vmem:[#allocation9 + $0x3d0] sm:$0xff]
        %v5143 = vld [vmem:[#allocation9 + $0x3d8] sm:$0xff]
        %v5144 = vld [vmem:[#allocation9 + $0x3e0] sm:$0xff]
        %v5145 = vld [vmem:[#allocation9 + $0x3e8] sm:$0xff]
        %v5146 = vld [vmem:[#allocation9 + $0x3f0] sm:$0xff]
        %v5147 = vld [vmem:[#allocation9 + $0x3f8] sm:$0xff]
        %v5148 = vld [vmem:[#allocation9 + $0x400] sm:$0xff]
        %v5149 = vld [vmem:[#allocation9 + $0x408] sm:$0xff]
        %v5150 = vld [vmem:[#allocation9 + $0x410] sm:$0xff]
        %v5151 = vld [vmem:[#allocation9 + $0x418] sm:$0xff]
        %v5152 = vld [vmem:[#allocation9 + $0x420] sm:$0xff]
        %v5153 = vld [vmem:[#allocation9 + $0x428] sm:$0xff]
        %v5154 = vld [vmem:[#allocation9 + $0x430] sm:$0xff]
        %v5155 = vld [vmem:[#allocation9 + $0x438] sm:$0xff]
        %v5156 = vld [vmem:[#allocation9 + $0x440] sm:$0xff]
        %v5157 = vld [vmem:[#allocation9 + $0x448] sm:$0xff]
        %v5158 = vld [vmem:[#allocation9 + $0x450] sm:$0xff]
        %v5159 = vld [vmem:[#allocation9 + $0x458] sm:$0xff]
        %v5160 = vld [vmem:[#allocation9 + $0x460] sm:$0xff]
        %v5161 = vld [vmem:[#allocation9 + $0x468] sm:$0xff]
        %v5162 = vld [vmem:[#allocation9 + $0x470] sm:$0xff]
        %v5163 = vld [vmem:[#allocation9 + $0x478] sm:$0xff]
        %v5164 = vld [vmem:[#allocation9 + $0x480] sm:$0xff]
        %v5165 = vld [vmem:[#allocation9 + $0x488] sm:$0xff]
        %v5166 = vld [vmem:[#allocation9 + $0x490] sm:$0xff]
        %v5167 = vld [vmem:[#allocation9 + $0x498] sm:$0xff]
        %v5168 = vld [vmem:[#allocation9 + $0x4a0] sm:$0xff]
        %v5169 = vld [vmem:[#allocation9 + $0x4a8] sm:$0xff]
        %v5170 = vld [vmem:[#allocation9 + $0x4b0] sm:$0xff]
        %v5171 = vld [vmem:[#allocation9 + $0x4b8] sm:$0xff]
        %v5172 = vld [vmem:[#allocation9 + $0x4c0] sm:$0xff]
        %v5173 = vld [vmem:[#allocation9 + $0x4c8] sm:$0xff]
        %v5174 = vld [vmem:[#allocation9 + $0x4d0] sm:$0xff]
        %v5175 = vld [vmem:[#allocation9 + $0x4d8] sm:$0xff]
        %v5176 = vld [vmem:[#allocation9 + $0x4e0] sm:$0xff]
        %v5177 = vld [vmem:[#allocation9 + $0x4e8] sm:$0xff]
        %v5178 = vld [vmem:[#allocation9 + $0x4f0] sm:$0xff]
        %v5179 = vld [vmem:[#allocation9 + $0x4f8] sm:$0xff]
        %v5180 = vld [vmem:[#allocation9 + $0x500] sm:$0xff]
        %v5181 = vld [vmem:[#allocation9 + $0x508] sm:$0xff]
        %v5182 = vld [vmem:[#allocation9 + $0x510] sm:$0xff]
        %v5183 = vld [vmem:[#allocation9 + $0x518] sm:$0xff]
        %v5184 = vld [vmem:[#allocation9 + $0x520] sm:$0xff]
        %v5185 = vld [vmem:[#allocation9 + $0x528] sm:$0xff]
        %v5186 = vld [vmem:[#allocation9 + $0x530] sm:$0xff]
        %v5187 = vld [vmem:[#allocation9 + $0x538] sm:$0xff]
        %v5188 = vld [vmem:[#allocation9 + $0x540] sm:$0xff]
        %v5189 = vld [vmem:[#allocation9 + $0x548] sm:$0xff]
        %v5190 = vld [vmem:[#allocation9 + $0x550] sm:$0xff]
        %v5191 = vld [vmem:[#allocation9 + $0x558] sm:$0xff]
        %v5192 = vld [vmem:[#allocation9 + $0x560] sm:$0xff]
        %v5193 = vld [vmem:[#allocation9 + $0x568] sm:$0xff]
        %v5194 = vld [vmem:[#allocation9 + $0x570] sm:$0xff]
        %v5195 = vld [vmem:[#allocation9 + $0x578] sm:$0xff]
        %v5196 = vld [vmem:[#allocation9 + $0x580] sm:$0xff]
        %v5197 = vld [vmem:[#allocation9 + $0x588] sm:$0xff]
        %v5198 = vld [vmem:[#allocation9 + $0x590] sm:$0xff]
        %v5199 = vld [vmem:[#allocation9 + $0x598] sm:$0xff]
        %v5200 = vld [vmem:[#allocation9 + $0x5a0] sm:$0xff]
        %v5201 = vld [vmem:[#allocation9 + $0x5a8] sm:$0xff]
        %v5202 = vld [vmem:[#allocation9 + $0x5b0] sm:$0xff]
        %v5203 = vld [vmem:[#allocation9 + $0x5b8] sm:$0xff]
        %v5204 = vld [vmem:[#allocation9 + $0x5c0] sm:$0xff]
        %v5205 = vld [vmem:[#allocation9 + $0x5c8] sm:$0xff]
        %v5206 = vld [vmem:[#allocation9 + $0x5d0] sm:$0xff]
        %v5207 = vld [vmem:[#allocation9 + $0x5d8] sm:$0xff]
        %v5208 = vld [vmem:[#allocation9 + $0x5e0] sm:$0xff]
        %v5209 = vld [vmem:[#allocation9 + $0x5e8] sm:$0xff]
        %v5210 = vld [vmem:[#allocation9 + $0x5f0] sm:$0xff]
        %v5211 = vld [vmem:[#allocation9 + $0x5f8] sm:$0xff]
        %v5212 = vld [vmem:[#allocation9 + $0x600] sm:$0xff]
        %v5213 = vld [vmem:[#allocation9 + $0x608] sm:$0xff]
        %v5214 = vld [vmem:[#allocation9 + $0x610] sm:$0xff]
        %v5215 = vld [vmem:[#allocation9 + $0x618] sm:$0xff]
        %v5216 = vld [vmem:[#allocation9 + $0x620] sm:$0xff]
        %v5217 = vld [vmem:[#allocation9 + $0x628] sm:$0xff]
        %v5218 = vld [vmem:[#allocation9 + $0x630] sm:$0xff]
        %v5219 = vld [vmem:[#allocation9 + $0x638] sm:$0xff]
        %v5220 = vld [vmem:[#allocation9 + $0x640] sm:$0xff]
        %v5221 = vld [vmem:[#allocation9 + $0x648] sm:$0xff]
        %v5222 = vld [vmem:[#allocation9 + $0x650] sm:$0xff]
        %v5223 = vld [vmem:[#allocation9 + $0x658] sm:$0xff]
        %v5224 = vld [vmem:[#allocation9 + $0x660] sm:$0xff]
        %v5225 = vld [vmem:[#allocation9 + $0x668] sm:$0xff]
        %v5226 = vld [vmem:[#allocation9 + $0x670] sm:$0xff]
        %v5227 = vld [vmem:[#allocation9 + $0x678] sm:$0xff]
        %v5228 = vld [vmem:[#allocation9 + $0x680] sm:$0xff]
        %v5229 = vld [vmem:[#allocation9 + $0x688] sm:$0xff]
        %v5230 = vld [vmem:[#allocation9 + $0x690] sm:$0xff]
        %v5231 = vld [vmem:[#allocation9 + $0x698] sm:$0xff]
        %v5232 = vld [vmem:[#allocation9 + $0x6a0] sm:$0xff]
        %v5233 = vld [vmem:[#allocation9 + $0x6a8] sm:$0xff]
        %v5234 = vld [vmem:[#allocation9 + $0x6b0] sm:$0xff]
        %v5235 = vld [vmem:[#allocation9 + $0x6b8] sm:$0xff]
        %v5236 = vld [vmem:[#allocation9 + $0x6c0] sm:$0xff]
        %v5237 = vld [vmem:[#allocation9 + $0x6c8] sm:$0xff]
        %v5238 = vld [vmem:[#allocation9 + $0x6d0] sm:$0xff]
        %v5239 = vld [vmem:[#allocation9 + $0x6d8] sm:$0xff]
        %v5240 = vld [vmem:[#allocation9 + $0x6e0] sm:$0xff]
        %v5241 = vld [vmem:[#allocation9 + $0x6e8] sm:$0xff]
        %v5242 = vld [vmem:[#allocation9 + $0x6f0] sm:$0xff]
        %v5243 = vld [vmem:[#allocation9 + $0x6f8] sm:$0xff]
        %v5244 = vld [vmem:[#allocation9 + $0x700] sm:$0xff]
        %v5245 = vld [vmem:[#allocation9 + $0x708] sm:$0xff]
        %v5246 = vld [vmem:[#allocation9 + $0x710] sm:$0xff]
        %v5247 = vld [vmem:[#allocation9 + $0x718] sm:$0xff]
        %v5248 = vld [vmem:[#allocation9 + $0x720] sm:$0xff]
        %v5249 = vld [vmem:[#allocation9 + $0x728] sm:$0xff]
        %v5250 = vld [vmem:[#allocation9 + $0x730] sm:$0xff]
        %v5251 = vld [vmem:[#allocation9 + $0x738] sm:$0xff]
        %v5252 = vld [vmem:[#allocation9 + $0x740] sm:$0xff]
        %v5253 = vld [vmem:[#allocation9 + $0x748] sm:$0xff]
        %v5254 = vld [vmem:[#allocation9 + $0x750] sm:$0xff]
        %v5255 = vld [vmem:[#allocation9 + $0x758] sm:$0xff]
        %v5256 = vld [vmem:[#allocation9 + $0x760] sm:$0xff]
        %v5257 = vld [vmem:[#allocation9 + $0x768] sm:$0xff]
        %v5258 = vld [vmem:[#allocation9 + $0x770] sm:$0xff]
        %v5259 = vld [vmem:[#allocation9 + $0x778] sm:$0xff]
        %v5260 = vld [vmem:[#allocation9 + $0x780] sm:$0xff]
        %v5261 = vld [vmem:[#allocation9 + $0x788] sm:$0xff]
        %v5262 = vld [vmem:[#allocation9 + $0x790] sm:$0xff]
        %v5263 = vld [vmem:[#allocation9 + $0x798] sm:$0xff]
        %v5264 = vld [vmem:[#allocation9 + $0x7a0] sm:$0xff]
        %v5265 = vld [vmem:[#allocation9 + $0x7a8] sm:$0xff]
        %v5266 = vld [vmem:[#allocation9 + $0x7b0] sm:$0xff]
        %v5267 = vld [vmem:[#allocation9 + $0x7b8] sm:$0xff]
        %v5268 = vld [vmem:[#allocation9 + $0x7c0] sm:$0xff]
        %v5269 = vld [vmem:[#allocation9 + $0x7c8] sm:$0xff]
        %v5270 = vld [vmem:[#allocation9 + $0x7d0] sm:$0xff]
        %v5271 = vld [vmem:[#allocation9 + $0x7d8] sm:$0xff]
        %v5272 = vld [vmem:[#allocation9 + $0x7e0] sm:$0xff]
        %v5273 = vld [vmem:[#allocation9 + $0x7e8] sm:$0xff]
        %v5274 = vld [vmem:[#allocation9 + $0x7f0] sm:$0xff]
        %v5275 = vld [vmem:[#allocation9 + $0x7f8] sm:$0xff]
        %v5276 = vld [vmem:[%s8] sm:$0xf]
        %v5278 = vlaneseq
        %v5279 = vshrl.u32 %v5278, 7
        %v5280 = vsub.s32 0, %v5279
        %v5281 = vrot.slane %v5276, %v5280
        %v5282 = vlaneseq
        %v5283 = vshrl.u32 %v5282, 7
        %v5284 = vsub.s32 1, %v5283
        %v5285 = vrot.slane %v5276, %v5284
        %v5286 = vlaneseq
        %v5287 = vshrl.u32 %v5286, 7
        %v5288 = vsub.s32 2, %v5287
        %v5289 = vrot.slane %v5276, %v5288
        %v5290 = vlaneseq
        %v5291 = vshrl.u32 %v5290, 7
        %v5292 = vsub.s32 3, %v5291
        %v5293 = vrot.slane %v5276, %v5292
        %5298 = vmatprep.subr.mxu0 %v5021
        %5299 = vmatpush1.msra.mxu0 %v5020
        %5300 = vmatprep.subr.mxu0 %v5025
        %5301 = vmatpush1.msra.mxu0 %v5024
        %5302 = vmatprep.subr.mxu0 %v5029
        %5303 = vmatpush1.msra.mxu0 %v5028
        %5304 = vmatprep.subr.mxu0 %v5033
        %5305 = vmatpush1.msra.mxu0 %v5032
        %5306 = vmatprep.subr.mxu0 %v5037
        %5307 = vmatpush1.msra.mxu0 %v5036
        %5308 = vmatprep.subr.mxu0 %v5041
        %5309 = vmatpush1.msra.mxu0 %v5040
        %5310 = vmatprep.subr.mxu0 %v5045
        %5311 = vmatpush1.msra.mxu0 %v5044
        %5312 = vmatprep.subr.mxu0 %v5049
        %5313 = vmatpush1.msra.mxu0 %v5048
        %5314 = vmatprep.subr.mxu0 %v5053
        %5315 = vmatpush1.msra.mxu0 %v5052
        %5316 = vmatprep.subr.mxu0 %v5057
        %5317 = vmatpush1.msra.mxu0 %v5056
        %5318 = vmatprep.subr.mxu0 %v5061
        %5319 = vmatpush1.msra.mxu0 %v5060
        %5320 = vmatprep.subr.mxu0 %v5065
        %5321 = vmatpush1.msra.mxu0 %v5064
        %5322 = vmatprep.subr.mxu0 %v5069
        %5323 = vmatpush1.msra.mxu0 %v5068
        %5324 = vmatprep.subr.mxu0 %v5073
        %5325 = vmatpush1.msra.mxu0 %v5072
        %5326 = vmatprep.subr.mxu0 %v5077
        %5327 = vmatpush1.msra.mxu0 %v5076
        %5328 = vmatprep.subr.mxu0 %v5081
        %5329 = vmatpush1.msra.mxu0 %v5080
        %5330 = vmatprep.subr.mxu0 %v5085
        %5331 = vmatpush1.msra.mxu0 %v5084
        %5332 = vmatprep.subr.mxu0 %v5089
        %5333 = vmatpush1.msra.mxu0 %v5088
        %5334 = vmatprep.subr.mxu0 %v5093
        %5335 = vmatpush1.msra.mxu0 %v5092
        %5336 = vmatprep.subr.mxu0 %v5097
        %5337 = vmatpush1.msra.mxu0 %v5096
        %5338 = vmatprep.subr.mxu0 %v5101
        %5339 = vmatpush1.msra.mxu0 %v5100
        %5340 = vmatprep.subr.mxu0 %v5105
        %5341 = vmatpush1.msra.mxu0 %v5104
        %5342 = vmatprep.subr.mxu0 %v5109
        %5343 = vmatpush1.msra.mxu0 %v5108
        %5344 = vmatprep.subr.mxu0 %v5113
        %5345 = vmatpush1.msra.mxu0 %v5112
        %5346 = vmatprep.subr.mxu0 %v5117
        %5347 = vmatpush1.msra.mxu0 %v5116
        %5348 = vmatprep.subr.mxu0 %v5121
        %5349 = vmatpush1.msra.mxu0 %v5120
        %5350 = vmatprep.subr.mxu0 %v5125
        %5351 = vmatpush1.msra.mxu0 %v5124
        %5352 = vmatprep.subr.mxu0 %v5129
        %5353 = vmatpush1.msra.mxu0 %v5128
        %5354 = vmatprep.subr.mxu0 %v5133
        %5355 = vmatpush1.msra.mxu0 %v5132
        %5356 = vmatprep.subr.mxu0 %v5137
        %5357 = vmatpush1.msra.mxu0 %v5136
        %5358 = vmatprep.subr.mxu0 %v5141
        %5359 = vmatpush1.msra.mxu0 %v5140
        %5360 = vmatprep.subr.mxu0 %v5145
        %5361 = vmatpush1.msra.mxu0 %v5144
        %5362 = vmatprep.mubr.f32.mxu0 %v5016
        %5363 = vmatmul.mubr.f32.gmra.mrb[0].mxu0 %v5014
        %v5364 = vpop.f32.mrb[0].mxu0
        %v5365 = vadd.f32 %v5281, %v5364
        %v5366 = vpop.f32.mrb[0].mxu0
        %v5367 = vadd.f32 %v5285, %v5366
        %5368 = vdwg.mxu0
        %5369 = vmatprep.subr.mxu0 %v5149
        %5370 = vmatpush1.msra.mxu0 %v5148
        %5371 = vmatprep.subr.mxu0 %v5153
        %5372 = vmatpush1.msra.mxu0 %v5152
        %5373 = vmatprep.subr.mxu0 %v5157
        %5374 = vmatpush1.msra.mxu0 %v5156
        %5375 = vmatprep.subr.mxu0 %v5161
        %5376 = vmatpush1.msra.mxu0 %v5160
        %5377 = vmatprep.subr.mxu0 %v5165
        %5378 = vmatpush1.msra.mxu0 %v5164
        %5379 = vmatprep.subr.mxu0 %v5169
        %5380 = vmatpush1.msra.mxu0 %v5168
        %5381 = vmatprep.subr.mxu0 %v5173
        %5382 = vmatpush1.msra.mxu0 %v5172
        %5383 = vmatprep.subr.mxu0 %v5177
        %5384 = vmatpush1.msra.mxu0 %v5176
        %5385 = vmatprep.subr.mxu0 %v5181
        %5386 = vmatpush1.msra.mxu0 %v5180
        %5387 = vmatprep.subr.mxu0 %v5185
        %5388 = vmatpush1.msra.mxu0 %v5184
        %5389 = vmatprep.subr.mxu0 %v5189
        %5390 = vmatpush1.msra.mxu0 %v5188
        %5391 = vmatprep.subr.mxu0 %v5193
        %5392 = vmatpush1.msra.mxu0 %v5192
        %5393 = vmatprep.subr.mxu0 %v5197
        %5394 = vmatpush1.msra.mxu0 %v5196
        %5395 = vmatprep.subr.mxu0 %v5201
        %5396 = vmatpush1.msra.mxu0 %v5200
        %5397 = vmatprep.subr.mxu0 %v5205
        %5398 = vmatpush1.msra.mxu0 %v5204
        %5399 = vmatprep.subr.mxu0 %v5209
        %5400 = vmatpush1.msra.mxu0 %v5208
        %5401 = vmatprep.subr.mxu0 %v5213
        %5402 = vmatpush1.msra.mxu0 %v5212
        %5403 = vmatprep.subr.mxu0 %v5217
        %5404 = vmatpush1.msra.mxu0 %v5216
        %5405 = vmatprep.subr.mxu0 %v5221
        %5406 = vmatpush1.msra.mxu0 %v5220
        %5407 = vmatprep.subr.mxu0 %v5225
        %5408 = vmatpush1.msra.mxu0 %v5224
        %5409 = vmatprep.subr.mxu0 %v5229
        %5410 = vmatpush1.msra.mxu0 %v5228
        %5411 = vmatprep.subr.mxu0 %v5233
        %5412 = vmatpush1.msra.mxu0 %v5232
        %5413 = vmatprep.subr.mxu0 %v5237
        %5414 = vmatpush1.msra.mxu0 %v5236
        %5415 = vmatprep.subr.mxu0 %v5241
        %5416 = vmatpush1.msra.mxu0 %v5240
        %5417 = vmatprep.subr.mxu0 %v5245
        %5418 = vmatpush1.msra.mxu0 %v5244
        %5419 = vmatprep.subr.mxu0 %v5249
        %5420 = vmatpush1.msra.mxu0 %v5248
        %5421 = vmatprep.subr.mxu0 %v5253
        %5422 = vmatpush1.msra.mxu0 %v5252
        %5423 = vmatprep.subr.mxu0 %v5257
        %5424 = vmatpush1.msra.mxu0 %v5256
        %5425 = vmatprep.subr.mxu0 %v5261
        %5426 = vmatpush1.msra.mxu0 %v5260
        %5427 = vmatprep.subr.mxu0 %v5265
        %5428 = vmatpush1.msra.mxu0 %v5264
        %5429 = vmatprep.subr.mxu0 %v5269
        %5430 = vmatpush1.msra.mxu0 %v5268
        %5431 = vmatprep.subr.mxu0 %v5273
        %5432 = vmatpush1.msra.mxu0 %v5272
        %5433 = vmatprep.mubr.f32.mxu0 %v5019
        %5434 = vmatmul.mubr.f32.gmra.mrb[0].mxu0 %v5017
        %v5435 = vpop.f32.mrb[0].mxu0
        %v5436 = vadd.f32 %v5365, %v5435
        %v5437 = vpop.f32.mrb[0].mxu0
        %v5438 = vadd.f32 %v5367, %v5437
        %5439 = vdwg.mxu0
        %5440 = vmatprep.subr.mxu0 %v5023
        %5441 = vmatpush1.msra.mxu0 %v5022
        %5442 = vmatprep.subr.mxu0 %v5027
        %5443 = vmatpush1.msra.mxu0 %v5026
        %5444 = vmatprep.subr.mxu0 %v5031
        %5445 = vmatpush1.msra.mxu0 %v5030
        %5446 = vmatprep.subr.mxu0 %v5035
        %5447 = vmatpush1.msra.mxu0 %v5034
        %5448 = vmatprep.subr.mxu0 %v5039
        %5449 = vmatpush1.msra.mxu0 %v5038
        %5450 = vmatprep.subr.mxu0 %v5043
        %5451 = vmatpush1.msra.mxu0 %v5042
        %5452 = vmatprep.subr.mxu0 %v5047
        %5453 = vmatpush1.msra.mxu0 %v5046
        %5454 = vmatprep.subr.mxu0 %v5051
        %5455 = vmatpush1.msra.mxu0 %v5050
        %5456 = vmatprep.subr.mxu0 %v5055
        %5457 = vmatpush1.msra.mxu0 %v5054
        %5458 = vmatprep.subr.mxu0 %v5059
        %5459 = vmatpush1.msra.mxu0 %v5058
        %5460 = vmatprep.subr.mxu0 %v5063
        %5461 = vmatpush1.msra.mxu0 %v5062
        %5462 = vmatprep.subr.mxu0 %v5067
        %5463 = vmatpush1.msra.mxu0 %v5066
        %5464 = vmatprep.subr.mxu0 %v5071
        %5465 = vmatpush1.msra.mxu0 %v5070
        %5466 = vmatprep.subr.mxu0 %v5075
        %5467 = vmatpush1.msra.mxu0 %v5074
        %5468 = vmatprep.subr.mxu0 %v5079
        %5469 = vmatpush1.msra.mxu0 %v5078
        %5470 = vmatprep.subr.mxu0 %v5083
        %5471 = vmatpush1.msra.mxu0 %v5082
        %5472 = vmatprep.subr.mxu0 %v5087
        %5473 = vmatpush1.msra.mxu0 %v5086
        %5474 = vmatprep.subr.mxu0 %v5091
        %5475 = vmatpush1.msra.mxu0 %v5090
        %5476 = vmatprep.subr.mxu0 %v5095
        %5477 = vmatpush1.msra.mxu0 %v5094
        %5478 = vmatprep.subr.mxu0 %v5099
        %5479 = vmatpush1.msra.mxu0 %v5098
        %5480 = vmatprep.subr.mxu0 %v5103
        %5481 = vmatpush1.msra.mxu0 %v5102
        %5482 = vmatprep.subr.mxu0 %v5107
        %5483 = vmatpush1.msra.mxu0 %v5106
        %5484 = vmatprep.subr.mxu0 %v5111
        %5485 = vmatpush1.msra.mxu0 %v5110
        %5486 = vmatprep.subr.mxu0 %v5115
        %5487 = vmatpush1.msra.mxu0 %v5114
        %5488 = vmatprep.subr.mxu0 %v5119
        %5489 = vmatpush1.msra.mxu0 %v5118
        %5490 = vmatprep.subr.mxu0 %v5123
        %5491 = vmatpush1.msra.mxu0 %v5122
        %5492 = vmatprep.subr.mxu0 %v5127
        %5493 = vmatpush1.msra.mxu0 %v5126
        %5494 = vmatprep.subr.mxu0 %v5131
        %5495 = vmatpush1.msra.mxu0 %v5130
        %5496 = vmatprep.subr.mxu0 %v5135
        %5497 = vmatpush1.msra.mxu0 %v5134
        %5498 = vmatprep.subr.mxu0 %v5139
        %5499 = vmatpush1.msra.mxu0 %v5138
        %5500 = vmatprep.subr.mxu0 %v5143
        %5501 = vmatpush1.msra.mxu0 %v5142
        %5502 = vmatprep.subr.mxu0 %v5147
        %5503 = vmatpush1.msra.mxu0 %v5146
        %5504 = vmatprep.mubr.f32.mxu0 %v5016
        %5505 = vmatmul.mubr.f32.gmra.mrb[0].mxu0 %v5014
        %v5506 = vpop.f32.mrb[0].mxu0
        %v5507 = vadd.f32 %v5289, %v5506
        %v5508 = vpop.f32.mrb[0].mxu0
        %v5509 = vadd.f32 %v5293, %v5508
        %5510 = vdwg.mxu0
        %5511 = vmatprep.subr.mxu0 %v5151
        %5512 = vmatpush1.msra.mxu0 %v5150
        %5513 = vmatprep.subr.mxu0 %v5155
        %5514 = vmatpush1.msra.mxu0 %v5154
        %5515 = vmatprep.subr.mxu0 %v5159
        %5516 = vmatpush1.msra.mxu0 %v5158
        %5517 = vmatprep.subr.mxu0 %v5163
        %5518 = vmatpush1.msra.mxu0 %v5162
        %5519 = vmatprep.subr.mxu0 %v5167
        %5520 = vmatpush1.msra.mxu0 %v5166
        %5521 = vmatprep.subr.mxu0 %v5171
        %5522 = vmatpush1.msra.mxu0 %v5170
        %5523 = vmatprep.subr.mxu0 %v5175
        %5524 = vmatpush1.msra.mxu0 %v5174
        %5525 = vmatprep.subr.mxu0 %v5179
        %5526 = vmatpush1.msra.mxu0 %v5178
        %5527 = vmatprep.subr.mxu0 %v5183
        %5528 = vmatpush1.msra.mxu0 %v5182
        %5529 = vmatprep.subr.mxu0 %v5187
        %5530 = vmatpush1.msra.mxu0 %v5186
        %5531 = vmatprep.subr.mxu0 %v5191
        %5532 = vmatpush1.msra.mxu0 %v5190
        %5533 = vmatprep.subr.mxu0 %v5195
        %5534 = vmatpush1.msra.mxu0 %v5194
        %5535 = vmatprep.subr.mxu0 %v5199
        %5536 = vmatpush1.msra.mxu0 %v5198
        %5537 = vmatprep.subr.mxu0 %v5203
        %5538 = vmatpush1.msra.mxu0 %v5202
        %5539 = vmatprep.subr.mxu0 %v5207
        %5540 = vmatpush1.msra.mxu0 %v5206
        %5541 = vmatprep.subr.mxu0 %v5211
        %5542 = vmatpush1.msra.mxu0 %v5210
        %5543 = vmatprep.subr.mxu0 %v5215
        %5544 = vmatpush1.msra.mxu0 %v5214
        %5545 = vmatprep.subr.mxu0 %v5219
        %5546 = vmatpush1.msra.mxu0 %v5218
        %5547 = vmatprep.subr.mxu0 %v5223
        %5548 = vmatpush1.msra.mxu0 %v5222
        %5549 = vmatprep.subr.mxu0 %v5227
        %5550 = vmatpush1.msra.mxu0 %v5226
        %5551 = vmatprep.subr.mxu0 %v5231
        %5552 = vmatpush1.msra.mxu0 %v5230
        %5553 = vmatprep.subr.mxu0 %v5235
        %5554 = vmatpush1.msra.mxu0 %v5234
        %5555 = vmatprep.subr.mxu0 %v5239
        %5556 = vmatpush1.msra.mxu0 %v5238
        %5557 = vmatprep.subr.mxu0 %v5243
        %5558 = vmatpush1.msra.mxu0 %v5242
        %5559 = vmatprep.subr.mxu0 %v5247
        %5560 = vmatpush1.msra.mxu0 %v5246
        %5561 = vmatprep.subr.mxu0 %v5251
        %5562 = vmatpush1.msra.mxu0 %v5250
        %5563 = vmatprep.subr.mxu0 %v5255
        %5564 = vmatpush1.msra.mxu0 %v5254
        %5565 = vmatprep.subr.mxu0 %v5259
        %5566 = vmatpush1.msra.mxu0 %v5258
        %5567 = vmatprep.subr.mxu0 %v5263
        %5568 = vmatpush1.msra.mxu0 %v5262
        %5569 = vmatprep.subr.mxu0 %v5267
        %5570 = vmatpush1.msra.mxu0 %v5266
        %5571 = vmatprep.subr.mxu0 %v5271
        %5572 = vmatpush1.msra.mxu0 %v5270
        %5573 = vmatprep.subr.mxu0 %v5275
        %5574 = vmatpush1.msra.mxu0 %v5274
        %5575 = vmatprep.mubr.f32.mxu0 %v5019
        %5576 = vmatmul.mubr.f32.gmra.mrb[0].mxu0 %v5017
        %v5577 = vpop.f32.mrb[0].mxu0
        %v5578 = vadd.f32 %v5507, %v5577
        %v5579 = vpop.f32.mrb[0].mxu0
        %v5580 = vadd.f32 %v5509, %v5579
        %5581 = vdwg.mxu0
        %v5582 = vmax.f32 %v5436, 0.0
        %v5583 = vmax.f32 %v5438, 0.0
        %v5584 = vmax.f32 %v5578, 0.0
        %v5585 = vmax.f32 %v5580, 0.0
        %v5586 = vld [vmem:[#allocation10] sm:$0xff]
        %v5587 = vld [vmem:[#allocation10 + $0x8] sm:$0xff]
        %v5588 = vld [vmem:[#allocation10 + $0x10] sm:$0xff]
        %v5589 = vld [vmem:[#allocation10 + $0x18] sm:$0xff]
        %v5590 = vld [vmem:[#allocation10 + $0x20] sm:$0xff]
        %v5591 = vld [vmem:[#allocation10 + $0x28] sm:$0xff]
        %v5592 = vld [vmem:[#allocation10 + $0x30] sm:$0xff]
        %v5593 = vld [vmem:[#allocation10 + $0x38] sm:$0xff]
        %v5594 = vld [vmem:[#allocation10 + $0x40] sm:$0xff]
        %v5595 = vld [vmem:[#allocation10 + $0x48] sm:$0xff]
        %v5596 = vld [vmem:[#allocation10 + $0x50] sm:$0xff]
        %v5597 = vld [vmem:[#allocation10 + $0x58] sm:$0xff]
        %v5598 = vld [vmem:[#allocation10 + $0x60] sm:$0xff]
        %v5599 = vld [vmem:[#allocation10 + $0x68] sm:$0xff]
        %v5600 = vld [vmem:[#allocation10 + $0x70] sm:$0xff]
        %v5601 = vld [vmem:[#allocation10 + $0x78] sm:$0xff]
        %v5602 = vld [vmem:[#allocation10 + $0x80] sm:$0xff]
        %v5603 = vld [vmem:[#allocation10 + $0x88] sm:$0xff]
        %v5604 = vld [vmem:[#allocation10 + $0x90] sm:$0xff]
        %v5605 = vld [vmem:[#allocation10 + $0x98] sm:$0xff]
        %v5606 = vld [vmem:[#allocation10 + $0xa0] sm:$0xff]
        %v5607 = vld [vmem:[#allocation10 + $0xa8] sm:$0xff]
        %v5608 = vld [vmem:[#allocation10 + $0xb0] sm:$0xff]
        %v5609 = vld [vmem:[#allocation10 + $0xb8] sm:$0xff]
        %v5610 = vld [vmem:[#allocation10 + $0xc0] sm:$0xff]
        %v5611 = vld [vmem:[#allocation10 + $0xc8] sm:$0xff]
        %v5612 = vld [vmem:[#allocation10 + $0xd0] sm:$0xff]
        %v5613 = vld [vmem:[#allocation10 + $0xd8] sm:$0xff]
        %v5614 = vld [vmem:[#allocation10 + $0xe0] sm:$0xff]
        %v5615 = vld [vmem:[#allocation10 + $0xe8] sm:$0xff]
        %v5616 = vld [vmem:[#allocation10 + $0xf0] sm:$0xff]
        %v5617 = vld [vmem:[#allocation10 + $0xf8] sm:$0xff]
        %v5618 = vld [vmem:[#allocation10 + $0x100] sm:$0xff]
        %v5619 = vld [vmem:[#allocation10 + $0x108] sm:$0xff]
        %v5620 = vld [vmem:[#allocation10 + $0x110] sm:$0xff]
        %v5621 = vld [vmem:[#allocation10 + $0x118] sm:$0xff]
        %v5622 = vld [vmem:[#allocation10 + $0x120] sm:$0xff]
        %v5623 = vld [vmem:[#allocation10 + $0x128] sm:$0xff]
        %v5624 = vld [vmem:[#allocation10 + $0x130] sm:$0xff]
        %v5625 = vld [vmem:[#allocation10 + $0x138] sm:$0xff]
        %v5626 = vld [vmem:[#allocation10 + $0x140] sm:$0xff]
        %v5627 = vld [vmem:[#allocation10 + $0x148] sm:$0xff]
        %v5628 = vld [vmem:[#allocation10 + $0x150] sm:$0xff]
        %v5629 = vld [vmem:[#allocation10 + $0x158] sm:$0xff]
        %v5630 = vld [vmem:[#allocation10 + $0x160] sm:$0xff]
        %v5631 = vld [vmem:[#allocation10 + $0x168] sm:$0xff]
        %v5632 = vld [vmem:[#allocation10 + $0x170] sm:$0xff]
        %v5633 = vld [vmem:[#allocation10 + $0x178] sm:$0xff]
        %v5634 = vld [vmem:[#allocation10 + $0x180] sm:$0xff]
        %v5635 = vld [vmem:[#allocation10 + $0x188] sm:$0xff]
        %v5636 = vld [vmem:[#allocation10 + $0x190] sm:$0xff]
        %v5637 = vld [vmem:[#allocation10 + $0x198] sm:$0xff]
        %v5638 = vld [vmem:[#allocation10 + $0x1a0] sm:$0xff]
        %v5639 = vld [vmem:[#allocation10 + $0x1a8] sm:$0xff]
        %v5640 = vld [vmem:[#allocation10 + $0x1b0] sm:$0xff]
        %v5641 = vld [vmem:[#allocation10 + $0x1b8] sm:$0xff]
        %v5642 = vld [vmem:[#allocation10 + $0x1c0] sm:$0xff]
        %v5643 = vld [vmem:[#allocation10 + $0x1c8] sm:$0xff]
        %v5644 = vld [vmem:[#allocation10 + $0x1d0] sm:$0xff]
        %v5645 = vld [vmem:[#allocation10 + $0x1d8] sm:$0xff]
        %v5646 = vld [vmem:[#allocation10 + $0x1e0] sm:$0xff]
        %v5647 = vld [vmem:[#allocation10 + $0x1e8] sm:$0xff]
        %v5648 = vld [vmem:[#allocation10 + $0x1f0] sm:$0xff]
        %v5649 = vld [vmem:[#allocation10 + $0x1f8] sm:$0xff]
        %v5650 = vld [vmem:[%s10] sm:$0x1]
        %5651 = vmatprep.subr.mxu0 0.0
        %5652 = vmatpush1.msra.mxu0 %v5586
        %5653 = vmatprep.subr.mxu0 0.0
        %5654 = vmatpush1.msra.mxu0 %v5587
        %5655 = vmatprep.subr.mxu0 0.0
        %5656 = vmatpush1.msra.mxu0 %v5588
        %5657 = vmatprep.subr.mxu0 0.0
        %5658 = vmatpush1.msra.mxu0 %v5589
        %5659 = vmatprep.subr.mxu0 0.0
        %5660 = vmatpush1.msra.mxu0 %v5590
        %5661 = vmatprep.subr.mxu0 0.0
        %5662 = vmatpush1.msra.mxu0 %v5591
        %5663 = vmatprep.subr.mxu0 0.0
        %5664 = vmatpush1.msra.mxu0 %v5592
        %5665 = vmatprep.subr.mxu0 0.0
        %5666 = vmatpush1.msra.mxu0 %v5593
        %5667 = vmatprep.subr.mxu0 0.0
        %5668 = vmatpush1.msra.mxu0 %v5594
        %5669 = vmatprep.subr.mxu0 0.0
        %5670 = vmatpush1.msra.mxu0 %v5595
        %5671 = vmatprep.subr.mxu0 0.0
        %5672 = vmatpush1.msra.mxu0 %v5596
        %5673 = vmatprep.subr.mxu0 0.0
        %5674 = vmatpush1.msra.mxu0 %v5597
        %5675 = vmatprep.subr.mxu0 0.0
        %5676 = vmatpush1.msra.mxu0 %v5598
        %5677 = vmatprep.subr.mxu0 0.0
        %5678 = vmatpush1.msra.mxu0 %v5599
        %5679 = vmatprep.subr.mxu0 0.0
        %5680 = vmatpush1.msra.mxu0 %v5600
        %5681 = vmatprep.subr.mxu0 0.0
        %5682 = vmatpush1.msra.mxu0 %v5601
        %5683 = vmatprep.subr.mxu0 0.0
        %5684 = vmatpush1.msra.mxu0 %v5602
        %5685 = vmatprep.subr.mxu0 0.0
        %5686 = vmatpush1.msra.mxu0 %v5603
        %5687 = vmatprep.subr.mxu0 0.0
        %5688 = vmatpush1.msra.mxu0 %v5604
        %5689 = vmatprep.subr.mxu0 0.0
        %5690 = vmatpush1.msra.mxu0 %v5605
        %5691 = vmatprep.subr.mxu0 0.0
        %5692 = vmatpush1.msra.mxu0 %v5606
        %5693 = vmatprep.subr.mxu0 0.0
        %5694 = vmatpush1.msra.mxu0 %v5607
        %5695 = vmatprep.subr.mxu0 0.0
        %5696 = vmatpush1.msra.mxu0 %v5608
        %5697 = vmatprep.subr.mxu0 0.0
        %5698 = vmatpush1.msra.mxu0 %v5609
        %5699 = vmatprep.subr.mxu0 0.0
        %5700 = vmatpush1.msra.mxu0 %v5610
        %5701 = vmatprep.subr.mxu0 0.0
        %5702 = vmatpush1.msra.mxu0 %v5611
        %5703 = vmatprep.subr.mxu0 0.0
        %5704 = vmatpush1.msra.mxu0 %v5612
        %5705 = vmatprep.subr.mxu0 0.0
        %5706 = vmatpush1.msra.mxu0 %v5613
        %5707 = vmatprep.subr.mxu0 0.0
        %5708 = vmatpush1.msra.mxu0 %v5614
        %5709 = vmatprep.subr.mxu0 0.0
        %5710 = vmatpush1.msra.mxu0 %v5615
        %5711 = vmatprep.subr.mxu0 0.0
        %5712 = vmatpush1.msra.mxu0 %v5616
        %5713 = vmatprep.subr.mxu0 0.0
        %5714 = vmatpush1.msra.mxu0 %v5617
        %5715 = vmatprep.mubr.f32.mxu0 %v5583
        %5716 = vmatmul.mubr.f32.gmra.mrb[0].mxu0 %v5582
        %v5717 = vpop.f32.mrb[0].mxu0
        %v5718 = vadd.f32 %v5650, %v5717
        %v5719 = vpop.f32.mrb[0].mxu0
        %5720 = vdwg.mxu0
        %5721 = vmatprep.subr.mxu0 0.0
        %5722 = vmatpush1.msra.mxu0 %v5618
        %5723 = vmatprep.subr.mxu0 0.0
        %5724 = vmatpush1.msra.mxu0 %v5619
        %5725 = vmatprep.subr.mxu0 0.0
        %5726 = vmatpush1.msra.mxu0 %v5620
        %5727 = vmatprep.subr.mxu0 0.0
        %5728 = vmatpush1.msra.mxu0 %v5621
        %5729 = vmatprep.subr.mxu0 0.0
        %5730 = vmatpush1.msra.mxu0 %v5622
        %5731 = vmatprep.subr.mxu0 0.0
        %5732 = vmatpush1.msra.mxu0 %v5623
        %5733 = vmatprep.subr.mxu0 0.0
        %5734 = vmatpush1.msra.mxu0 %v5624
        %5735 = vmatprep.subr.mxu0 0.0
        %5736 = vmatpush1.msra.mxu0 %v5625
        %5737 = vmatprep.subr.mxu0 0.0
        %5738 = vmatpush1.msra.mxu0 %v5626
        %5739 = vmatprep.subr.mxu0 0.0
        %5740 = vmatpush1.msra.mxu0 %v5627
        %5741 = vmatprep.subr.mxu0 0.0
        %5742 = vmatpush1.msra.mxu0 %v5628
        %5743 = vmatprep.subr.mxu0 0.0
        %5744 = vmatpush1.msra.mxu0 %v5629
        %5745 = vmatprep.subr.mxu0 0.0
        %5746 = vmatpush1.msra.mxu0 %v5630
        %5747 = vmatprep.subr.mxu0 0.0
        %5748 = vmatpush1.msra.mxu0 %v5631
        %5749 = vmatprep.subr.mxu0 0.0
        %5750 = vmatpush1.msra.mxu0 %v5632
        %5751 = vmatprep.subr.mxu0 0.0
        %5752 = vmatpush1.msra.mxu0 %v5633
        %5753 = vmatprep.subr.mxu0 0.0
        %5754 = vmatpush1.msra.mxu0 %v5634
        %5755 = vmatprep.subr.mxu0 0.0
        %5756 = vmatpush1.msra.mxu0 %v5635
        %5757 = vmatprep.subr.mxu0 0.0
        %5758 = vmatpush1.msra.mxu0 %v5636
        %5759 = vmatprep.subr.mxu0 0.0
        %5760 = vmatpush1.msra.mxu0 %v5637
        %5761 = vmatprep.subr.mxu0 0.0
        %5762 = vmatpush1.msra.mxu0 %v5638
        %5763 = vmatprep.subr.mxu0 0.0
        %5764 = vmatpush1.msra.mxu0 %v5639
        %5765 = vmatprep.subr.mxu0 0.0
        %5766 = vmatpush1.msra.mxu0 %v5640
        %5767 = vmatprep.subr.mxu0 0.0
        %5768 = vmatpush1.msra.mxu0 %v5641
        %5769 = vmatprep.subr.mxu0 0.0
        %5770 = vmatpush1.msra.mxu0 %v5642
        %5771 = vmatprep.subr.mxu0 0.0
        %5772 = vmatpush1.msra.mxu0 %v5643
        %5773 = vmatprep.subr.mxu0 0.0
        %5774 = vmatpush1.msra.mxu0 %v5644
        %5775 = vmatprep.subr.mxu0 0.0
        %5776 = vmatpush1.msra.mxu0 %v5645
        %5777 = vmatprep.subr.mxu0 0.0
        %5778 = vmatpush1.msra.mxu0 %v5646
        %5779 = vmatprep.subr.mxu0 0.0
        %5780 = vmatpush1.msra.mxu0 %v5647
        %5781 = vmatprep.subr.mxu0 0.0
        %5782 = vmatpush1.msra.mxu0 %v5648
        %5783 = vmatprep.subr.mxu0 0.0
        %5784 = vmatpush1.msra.mxu0 %v5649
        %5785 = vmatprep.mubr.f32.mxu0 %v5585
        %5786 = vmatmul.mubr.f32.gmra.mrb[0].mxu0 %v5584
        %v5787 = vpop.f32.mrb[0].mxu0
        %v5788 = vadd.f32 %v5718, %v5787
        %v5789 = vpop.f32.mrb[0].mxu0
        %5790 = vdwg.mxu0
        %5791 = vst [vmem:[%s441] sm:$0x1] %v5788
        %p5792 = scmp.lt.s32.totalorder %s25, 1
        %s5793 = scalar_select %p5792, %s25, 1
        %s5794 = scalar_lea.vmem %s11, %s5793
        // Predicated region
        $region81: #{dqn_forward.1} parent=63 // pred_check
          %p5795 = pneg %p279
        $region82: #{dqn_forward.1} parent=63 // pred_check_branch
          %5797 = sbr.rel (%p5795) target = $region84
        $region83: #{dqn_forward.1} parent=63 // pred_region
          _
        $region84: #{dqn_forward.1} parent=63 // pred_fallthru
          _
      $region64: #{dqn_forward.1} parent=5 // pred_fallthru
        _
      %p5798 = scmp.le.s32.totalorder 2, %s20
      // Predicated region
      $region85: #{dqn_forward.1} parent=5 // pred_check
        %p5799 = pneg %p5798
      $region86: #{dqn_forward.1} parent=5 // pred_check_branch
        %5801 = sbr.rel (%p5799) target = $region88
      $region87: #{dqn_forward.1} parent=5 // pred_region
        %s5802 = ssub.s32 %s20, 2
        // Predicated region
        $region89: #{dqn_forward.1} parent=87 // pred_check
          %p5803 = pneg %p285
        $region90: #{dqn_forward.1} parent=87 // pred_check_branch
          %5805 = sbr.rel (%p5803) target = $region92
        $region91: #{dqn_forward.1} parent=87 // pred_region
          %p5806 = scmp.lt.s32.totalorder %s26, 1
          %s5807 = scalar_select %p5806, %s26, 1
          %s5808 = scalar_lea.vmem %s11, %s5807
        $region92: #{dqn_forward.1} parent=87 // pred_fallthru
          _
      $region88: #{dqn_forward.1} parent=5 // pred_fallthru
        _
    $region6: #{dqn_forward.1} parent=1 // loop_footer
      %s24 = sadd.s32 1, %s20
    $region7: #{dqn_forward.1} parent=1 // loop_footer_branch
      %19 = sbr.rel target = $region3
    $region8: #{dqn_forward.1} parent=1 // loop_exit
      _
    %5809 = vsyncpa [#allocation6], 1
    %s5810 = scalar_lea.sflag [#allocation6], 1
    %5811 = vsyncpa %s5810, 1
    %5812 = vsyncpa [#allocation8], 1
    %5813 = vsyncpa [#allocation11], 1

</llo_original>
